<compile_context>
chip_gen: v6e
topology: v6e:2x2x1
jax: 0.10.0
libtpu: 0.0.40
codegen_flags: <defaults>
</compile_context>

<pallas_src>
import numpy as np
import jax
import jax.numpy as jnp
from jax import lax
from jax.experimental import pallas as pl
from jax.experimental.pallas import tpu as pltpu

B, S, H = 2, 8, 32          # batch, seq len, hidden (mini version of the 768-d BERT)
NH, DH = 4, 8               # heads, head dim
FF = 4 * H                  # feed-forward width
L = 2                       # encoder layers
VOCAB = 50
P = 3                       # start-word positions per example (all < S here)
BS = B * S
BP = B * P
NEG = -1e9
LN_EPS = 1e-12

# ----- weight-slab layout (all weights of all layers + predict layer in ONE 2D f32 slab) -----
W_SLAB = max(3 * NH * DH, FF, H)      # 128 -> lane-dense slab width
OFF_WQKV = 0                          # (H, 3*NH*DH)   fused QKV projection (Q pre-scaled)
OFF_WO   = OFF_WQKV + H               # (NH*DH, H)     head-major output projection rows
OFF_W1   = OFF_WO + NH * DH           # (H, FF)
OFF_W2   = OFF_W1 + H                 # (FF, H)
OFF_BQKV = OFF_W2 + FF                # (1, 3*NH*DH)
OFF_BO   = OFF_BQKV + 1               # (1, H)
OFF_LN1G = OFF_BO + 1
OFF_LN1B = OFF_LN1G + 1
OFF_B1   = OFF_LN1B + 1               # (1, FF)
OFF_B2   = OFF_B1 + 1                 # (1, H)
OFF_LN2G = OFF_B2 + 1
OFF_LN2B = OFF_LN2G + 1
ROWS_PER_LAYER = OFF_LN2B + 1         # 232 (big matrices stay 8-row aligned across layers)
OFF_WPRED = L * ROWS_PER_LAYER        # (H, 2)
OFF_BPRED = OFF_WPRED + H             # (1, 2)
W_ROWS = OFF_BPRED + 1                # 497

# ----- activation-slab layout -----
W_ACT = max(H, BS)                    # 32
ROW_X = 0                             # rows [0, BS)      : x2d (BS, H)
ROW_SEL = BS                          # rows [BS, BS+BP)  : one-hot selector (BP, BS)
ROW_KMASK = BS + BP                   # row  BS+BP        : key-valid mask (1, BS)
A_ROWS = ROW_KMASK + 1                # 23


def _layernorm(x, g, b):
    mu = jnp.mean(x, axis=-1, keepdims=True)
    var = jnp.mean((x - mu) ** 2, axis=-1, keepdims=True)
    return (x - mu) * lax.rsqrt(var + LN_EPS) * g + b


def _gelu(x):
    return 0.5 * x * (1.0 + jnp.tanh(0.7978845608028654 * (x + 0.044715 * x * x * x)))


# ---------------------------------------------------------------------------
# Single fused Pallas kernel (no grid; everything resident in VMEM, ~260 KiB):
#   L encoder layers (fused QKV matmul, per-head attention with per-head wo
#   accumulation, FFN, layernorms) + one-hot start-word gather + predict Linear.
# Only two inputs: the packed activation slab and the packed weight slab.
# ---------------------------------------------------------------------------
def bertsum_kernel(a_ref, w_ref, o_ref):
    x = a_ref[ROW_X:ROW_X + BS, 0:H]                 # (BS, H)
    sel = a_ref[ROW_SEL:ROW_SEL + BP, 0:BS]          # (BP, BS) one-hot selector
    key_valid = a_ref[ROW_KMASK:ROW_KMASK + 1, 0:BS]  # (1, BS) 1.0 = valid key

    # Block-diagonal additive key bias built in-kernel (iota + compare/select).
    # Float batch ids avoid integer vector division; S=8 so the products are exact.
    row_id = lax.broadcasted_iota(jnp.int32, (BS, BS), 0).astype(jnp.float32)
    col_id = lax.broadcasted_iota(jnp.int32, (BS, BS), 1).astype(jnp.float32)
    row_b = jnp.floor(row_id * (1.0 / S) + 1e-6)
    col_b = jnp.floor(col_id * (1.0 / S) + 1e-6)
    bias = jnp.where((row_b == col_b) & (key_valid > 0.5), 0.0, NEG).astype(jnp.float32)

    for l in range(L):                                # static unroll: L is small
        base = l * ROWS_PER_LAYER
        wqkv = w_ref[base + OFF_WQKV: base + OFF_WQKV + H, 0:3 * NH * DH]
        bqkv = w_ref[base + OFF_BQKV: base + OFF_BQKV + 1, 0:3 * NH * DH]
        # fused QKV projection: one lane-dense (BS,H)@(H,3*NH*DH) matmul
        # (1/sqrt(DH) already folded into the Q columns AND Q bias at pack time)
        qkv = jnp.dot(x, wqkv, preferred_element_type=jnp.float32) + bqkv

        attn = jnp.zeros((BS, H), jnp.float32)        # per-head accumulator (no concat)
        # TODO(synk): at real head counts/dims, replace these static lane slices with one
        # relayout to (NH, BS, DH) and head-batched lax.dot_general for scores / PV.
        for h in range(NH):                           # static unroll; per-head (BS,BS) step
            qh = qkv[:, h * DH:(h + 1) * DH]                              # (BS, DH)
            kh = qkv[:, NH * DH + h * DH: NH * DH + (h + 1) * DH]         # (BS, DH)
            vh = qkv[:, 2 * NH * DH + h * DH: 2 * NH * DH + (h + 1) * DH]
            # scores over the full (BS,BS) matrix; the block-diagonal bias kills
            # cross-batch attention; no explicit K transpose (contract last dims).
            s = lax.dot_general(qh, kh, (((1,), (1,)), ((), ())),
                                preferred_element_type=jnp.float32) + bias
            s = s - jnp.max(s, axis=-1, keepdims=True)
            pe = jnp.exp(s)
            pr = pe / jnp.sum(pe, axis=-1, keepdims=True)    # exact divide (free here)
            ctx = jnp.dot(pr, vh, preferred_element_type=jnp.float32)     # (BS, DH)
            wo_h = w_ref[base + OFF_WO + h * DH: base + OFF_WO + (h + 1) * DH, 0:H]
            attn = attn + jnp.dot(ctx, wo_h, preferred_element_type=jnp.float32)
        attn = attn + w_ref[base + OFF_BO: base + OFF_BO + 1, 0:H]

        h1 = _layernorm(x + attn,
                        w_ref[base + OFF_LN1G: base + OFF_LN1G + 1, 0:H],
                        w_ref[base + OFF_LN1B: base + OFF_LN1B + 1, 0:H])
        w1 = w_ref[base + OFF_W1: base + OFF_W1 + H, 0:FF]
        b1 = w_ref[base + OFF_B1: base + OFF_B1 + 1, 0:FF]
        ff = _gelu(jnp.dot(h1, w1, preferred_element_type=jnp.float32) + b1)
        w2 = w_ref[base + OFF_W2: base + OFF_W2 + FF, 0:H]
        b2 = w_ref[base + OFF_B2: base + OFF_B2 + 1, 0:H]
        ff = jnp.dot(ff, w2, preferred_element_type=jnp.float32) + b2
        x = _layernorm(h1 + ff,
                       w_ref[base + OFF_LN2G: base + OFF_LN2G + 1, 0:H],
                       w_ref[base + OFF_LN2B: base + OFF_LN2B + 1, 0:H])

    # one-hot gather of the start-word rows (MXU, branch-free, no dynamic VMEM indexing)
    # TODO(synk): at real sizes, replace with a PrefetchScalarGridSpec scalar-indexed gather.
    g = jnp.dot(sel, x, preferred_element_type=jnp.float32)               # (BP, H)
    wp = w_ref[OFF_WPRED: OFF_WPRED + H, 0:2]
    bp = w_ref[OFF_BPRED: OFF_BPRED + 1, 0:2]
    o_ref[...] = jnp.dot(g, wp, preferred_element_type=jnp.float32) + bp  # last store


# ---------------------------------------------------------------------------
# Pack ALL weights (L layers + predict layer) into one (W_ROWS, W_SLAB) f32 slab.
# ---------------------------------------------------------------------------
def pack_all_weights(params):
    scale = 1.0 / float(np.sqrt(DH))

    def heads_to_cols(w):   # (NH, H, DH) -> (H, NH*DH), head-major column blocks
        return jnp.transpose(w, (1, 0, 2)).reshape(H, NH * DH)

    def heads_bias(b):      # (NH, 1, DH) -> (1, NH*DH)
        return jnp.transpose(b, (1, 0, 2)).reshape(1, NH * DH)

    def padw(a):
        return jnp.pad(a, ((0, 0), (0, W_SLAB - a.shape[1])))

    rows = []
    for lp in params['layers']:
        # NOTE: the 1/sqrt(DH) attention scale MUST be folded into BOTH wq and bq;
        # scaling only wq would silently diverge from the reference math.
        wqkv = jnp.concatenate([heads_to_cols(lp['wq']) * scale,
                                heads_to_cols(lp['wk']),
                                heads_to_cols(lp['wv'])], axis=1)          # (H, 3*NH*DH)
        bqkv = jnp.concatenate([heads_bias(lp['bq']) * scale,
                                heads_bias(lp['bk']),
                                heads_bias(lp['bv'])], axis=1)             # (1, 3*NH*DH)
        wo = lp['wo'].reshape(NH * DH, H)                                  # head-major rows
        rows += [padw(wqkv), padw(wo), padw(lp['w1']), padw(lp['w2']),
                 padw(bqkv), padw(lp['bo']), padw(lp['ln1g']), padw(lp['ln1b']),
                 padw(lp['b1']), padw(lp['b2']), padw(lp['ln2g']), padw(lp['ln2b'])]
    rows += [padw(params['w_pred']), padw(params['b_pred'])]
    slab = jnp.concatenate(rows, axis=0)
    assert slab.shape == (W_ROWS, W_SLAB)
    return slab


# ---------------------------------------------------------------------------
# Deterministic synthetic parameters
# ---------------------------------------------------------------------------
def init_params(key):
    keys = iter(jax.random.split(key, 64))

    def nrm(shape, scale=0.05):
        return (scale * jax.random.normal(next(keys), shape)).astype(jnp.float32)

    p = {
        'tok_emb': nrm((VOCAB, H)),
        'pos_emb': nrm((S, H)),
        'emb_g': jnp.ones((H,), jnp.float32),
        'emb_b': jnp.zeros((H,), jnp.float32),
        'w_pred': nrm((H, 2)),
        'b_pred': nrm((1, 2)),
        'layers': [],
    }
    for _ in range(L):
        p['layers'].append({
            'wq': nrm((NH, H, DH)), 'bq': nrm((NH, 1, DH)),
            'wk': nrm((NH, H, DH)), 'bk': nrm((NH, 1, DH)),
            'wv': nrm((NH, H, DH)), 'bv': nrm((NH, 1, DH)),
            'wo': nrm((NH, DH, H)), 'bo': nrm((1, H)),
            'ln1g': jnp.ones((1, H), jnp.float32), 'ln1b': jnp.zeros((1, H), jnp.float32),
            'w1': nrm((H, FF)), 'b1': nrm((1, FF)),
            'w2': nrm((FF, H)), 'b2': nrm((1, H)),
            'ln2g': jnp.ones((1, H), jnp.float32), 'ln2b': jnp.zeros((1, H), jnp.float32),
        })
    return p


# ---------------------------------------------------------------------------
# BertSum.forward (label=None path -> returns predictions). Fully traceable/jittable.
# ---------------------------------------------------------------------------
def bertsum_forward(text_id, text_position, params):
    text_id = jnp.asarray(text_id)
    pad_id = jnp.where(text_id[0, 0] == 0, 1, 0)              # mirrors the torch pad-id pick
    input_mask = (text_id != pad_id).astype(jnp.float32)      # (B, S)

    # embeddings (plain-JAX glue: gathers + layernorm)
    tok = jnp.take(params['tok_emb'], text_id, axis=0)        # (B, S, H)
    x = tok + params['pos_emb'][None, :, :]
    x = _layernorm(x, params['emb_g'], params['emb_b']).astype(jnp.float32)
    x2d = x.reshape(BS, H)                                    # batch folded into sublanes

    # one-hot start-word selector (B*P, B*S)
    # TODO(synk): torch drops positions >= seq_len at runtime (dynamic output length);
    # here all positions are < S — an out-of-range position would yield a b_pred row
    # instead of being dropped (fixed-shape output).
    pos = jnp.asarray(text_position, dtype=jnp.int32)         # (B, P)
    flat_idx = (jnp.arange(B)[:, None] * S + pos).reshape(BP)
    valid = (pos < S).reshape(BP, 1).astype(jnp.float32)
    sel = jax.nn.one_hot(flat_idx, BS, dtype=jnp.float32) * valid

    # pack the two kernel operands (2 DMAs total instead of ~17)
    def padw_act(a):
        return jnp.pad(a, ((0, 0), (0, W_ACT - a.shape[1])))
    act_slab = jnp.concatenate(
        [padw_act(x2d), padw_act(sel), padw_act(input_mask.reshape(1, BS))], axis=0)
    w_slab = pack_all_weights(params)

    # advisory cost estimate for the XLA scheduler
    layer_flops = (2 * BS * H * 3 * NH * DH
                   + NH * (4 * BS * BS * DH + 2 * BS * DH * H)
                   + 4 * BS * H * FF)
    flops = L * layer_flops + 2 * BP * BS * H + 2 * BP * H * 2
    transcendentals = L * (NH * BS * BS + BS * FF)
    bytes_accessed = 4 * (A_ROWS * W_ACT + W_ROWS * W_SLAB + BP * 2)

    # TODO(synk): at real BERT sizes this gridless all-resident design must become a
    # per-layer ("arbitrary") + row-tiled ("parallel", for v7x's 2nd TC) bf16 pipeline
    # with weight BlockSpecs indexed by layer and an explicit larger vmem_limit_bytes
    # (v7x has only 64 MiB VMEM).
    pred = pl.pallas_call(
        bertsum_kernel,
        out_shape=jax.ShapeDtypeStruct((BP, 2), jnp.float32),
        cost_estimate=pl.CostEstimate(flops=flops, transcendentals=transcendentals,
                                      bytes_accessed=bytes_accessed),
        compiler_params=pltpu.CompilerParams(vmem_limit_bytes=32 * 1024 * 1024),
    )(act_slab, w_slab)
    return pred                                               # (B*P, 2), torch.cat ordering


# ---------------------------------------------------------------------------
# Pure-JAX reference (original per-head / per-batch math) for a correctness check
# ---------------------------------------------------------------------------
def reference_forward(text_id, text_position, params):
    text_id_np = np.asarray(text_id)
    pad_id = 1 if int(text_id_np[0, 0]) == 0 else 0
    mask = (text_id_np != pad_id).astype(np.float32)
    key_bias = (1.0 - mask)[:, None, :] * NEG

    tok = jnp.take(params['tok_emb'], jnp.asarray(text_id_np), axis=0)
    x = tok + params['pos_emb'][None]
    x = _layernorm(x, params['emb_g'], params['emb_b'])

    scale = 1.0 / float(np.sqrt(DH))
    for lp in params['layers']:
        outs = []
        for b in range(B):
            xb = x[b]
            attn = jnp.zeros((S, H), jnp.float32)
            for h in range(NH):
                qh = xb @ lp['wq'][h] + lp['bq'][h]
                kh = xb @ lp['wk'][h] + lp['bk'][h]
                vh = xb @ lp['wv'][h] + lp['bv'][h]
                s = qh @ kh.T * scale + key_bias[b]
                s = s - s.max(-1, keepdims=True)
                pe = jnp.exp(s)
                pr = pe / pe.sum(-1, keepdims=True)
                attn = attn + (pr @ vh) @ lp['wo'][h]
            attn = attn + lp['bo']
            h1 = _layernorm(xb + attn, lp['ln1g'], lp['ln1b'])
            ff = _gelu(h1 @ lp['w1'] + lp['b1'])
            ff = ff @ lp['w2'] + lp['b2']
            outs.append(_layernorm(h1 + ff, lp['ln2g'], lp['ln2b']))
        x = jnp.stack(outs, axis=0)

    rows = []
    for b in range(B):
        for j in range(P):
            pj = int(text_position[b][j])
            if pj < S:
                rows.append(x[b, pj][None, :])
    g = jnp.concatenate(rows, axis=0)
    return g @ params['w_pred'] + params['b_pred']


if __name__ == "__main__":
    root = jax.random.PRNGKey(0)
    k_params, k_ids = jax.random.split(root)
    params = init_params(k_params)

    text_id = np.array(jax.random.randint(k_ids, (B, S), 2, VOCAB))
    text_id[0, 6:] = 0          # pad tail of example 0
    text_id[1, 5:] = 0          # pad tail of example 1 (text_id[0,0] != 0 -> pad_id = 0)
    text_position = np.array([[0, 1, 2], [0, 2, 3]], dtype=np.int32)

    fwd = jax.jit(bertsum_forward)
    pred = jax.block_until_ready(fwd(text_id, text_position, params))

    ref = np.asarray(reference_forward(text_id, text_position, params))
    # tolerance accounts for MXU/default-precision matmul differences vs the XLA reference
    # (the approximate softmax reciprocal has been replaced by an exact divide).
    np.testing.assert_allclose(np.asarray(pred), ref, rtol=2e-3, atol=2e-3)
    print("KERNEL_OK")
</pallas_src>

<mosaic_0001>
module attributes {stable_mosaic.version = 11 : i64} {
  func.func @bertsum_kernel(%arg0: memref<23x32xf32, #tpu.memory_space<vmem>>, %arg1: memref<497x128xf32, #tpu.memory_space<vmem>>, %arg2: memref<6x2xf32, #tpu.memory_space<vmem>>) attributes {dimension_semantics = [], scalar_prefetch = 0 : i64, scratch_operands = 0 : i64, tpu.core_type = #tpu.core_type<tc>} {
    %c0 = arith.constant 0 : index
    %c0_0 = arith.constant 0 : index
    %0 = vector.load %arg0[%c0, %c0_0] : memref<23x32xf32, #tpu.memory_space<vmem>>, vector<16x32xf32>
    %c16 = arith.constant 16 : index
    %c0_1 = arith.constant 0 : index
    %1 = vector.load %arg0[%c16, %c0_1] : memref<23x32xf32, #tpu.memory_space<vmem>>, vector<6x16xf32>
    %c22 = arith.constant 22 : index
    %c0_2 = arith.constant 0 : index
    %2 = vector.load %arg0[%c22, %c0_2] : memref<23x32xf32, #tpu.memory_space<vmem>>, vector<1x16xf32>
    %3 = tpu.iota {dimensions = array<i32: 0>} : vector<16x16xi32>
    %4 = arith.sitofp %3 : vector<16x16xi32> to vector<16x16xf32>
    %5 = tpu.iota {dimensions = array<i32: 1>} : vector<16x16xi32>
    %6 = arith.sitofp %5 : vector<16x16xi32> to vector<16x16xf32>
    %cst = arith.constant 1.250000e-01 : f32
    %7 = vector.broadcast %cst : f32 to vector<16x16xf32>
    %8 = arith.mulf %4, %7 : vector<16x16xf32>
    %cst_3 = arith.constant 9.99999997E-7 : f32
    %9 = vector.broadcast %cst_3 : f32 to vector<16x16xf32>
    %10 = arith.addf %8, %9 : vector<16x16xf32>
    %11 = math.floor %10 : vector<16x16xf32>
    %cst_4 = arith.constant 1.250000e-01 : f32
    %12 = vector.broadcast %cst_4 : f32 to vector<16x16xf32>
    %13 = arith.mulf %6, %12 : vector<16x16xf32>
    %cst_5 = arith.constant 9.99999997E-7 : f32
    %14 = vector.broadcast %cst_5 : f32 to vector<16x16xf32>
    %15 = arith.addf %13, %14 : vector<16x16xf32>
    %16 = math.floor %15 : vector<16x16xf32>
    %17 = arith.cmpf oeq, %11, %16 : vector<16x16xf32>
    %cst_6 = arith.constant 5.000000e-01 : f32
    %18 = vector.broadcast %cst_6 : f32 to vector<1x16xf32>
    %19 = arith.cmpf ogt, %2, %18 : vector<1x16xf32>
    %20 = vector.broadcast %19 : vector<1x16xi1> to vector<16x16xi1>
    %21 = arith.andi %17, %20 : vector<16x16xi1>
    %cst_7 = arith.constant 0.000000e+00 : f32
    %cst_8 = arith.constant -1.000000e+09 : f32
    %22 = vector.broadcast %cst_7 : f32 to vector<16x16xf32>
    %23 = vector.broadcast %cst_8 : f32 to vector<16x16xf32>
    %24 = arith.select %21, %22, %23 : vector<16x16xi1>, vector<16x16xf32>
    %c0_9 = arith.constant 0 : index
    %c0_10 = arith.constant 0 : index
    %25 = vector.load %arg1[%c0_9, %c0_10] : memref<497x128xf32, #tpu.memory_space<vmem>>, vector<32x96xf32>
    %c224 = arith.constant 224 : index
    %c0_11 = arith.constant 0 : index
    %26 = vector.load %arg1[%c224, %c0_11] : memref<497x128xf32, #tpu.memory_space<vmem>>, vector<1x96xf32>
    %cst_12 = arith.constant dense<0.000000e+00> : vector<16x96xf32>
    %27 = tpu.matmul %0, %25, %cst_12 {dimension_numbers = #tpu.dot_dimension_numbers<[1], [0], [0], [1], [0, 0, 1, 1], [], []>} : vector<16x32xf32>, vector<32x96xf32>, vector<16x96xf32> -> vector<16x96xf32>
    %28 = vector.broadcast %26 : vector<1x96xf32> to vector<16x96xf32>
    %29 = arith.addf %27, %28 : vector<16x96xf32>
    %cst_13 = arith.constant 0.000000e+00 : f32
    %30 = vector.broadcast %cst_13 : f32 to vector<16x32xf32>
    %31 = vector.extract_strided_slice %29 {offsets = [0, 0], sizes = [16, 8], strides = [1, 1]} : vector<16x96xf32> to vector<16x8xf32>
    %32 = vector.extract_strided_slice %29 {offsets = [0, 32], sizes = [16, 8], strides = [1, 1]} : vector<16x96xf32> to vector<16x8xf32>
    %33 = vector.extract_strided_slice %29 {offsets = [0, 64], sizes = [16, 8], strides = [1, 1]} : vector<16x96xf32> to vector<16x8xf32>
    %cst_14 = arith.constant dense<0.000000e+00> : vector<16x16xf32>
    %34 = tpu.matmul %31, %32, %cst_14 {dimension_numbers = #tpu.dot_dimension_numbers<[1], [1], [0], [0], [0, 0, 1, 0], [], []>} : vector<16x8xf32>, vector<16x8xf32>, vector<16x16xf32> -> vector<16x16xf32>
    %35 = arith.addf %34, %24 : vector<16x16xf32>
    %cst_15 = arith.constant dense<0xFF800000> : vector<16xf32>
    %36 = vector.multi_reduction <maximumf>, %35, %cst_15 [1] : vector<16x16xf32> to vector<16xf32>
    %37 = vector.shape_cast %36 : vector<16xf32> to vector<16x1xf32>
    %38 = vector.broadcast %37 : vector<16x1xf32> to vector<16x16xf32>
    %39 = arith.subf %35, %38 : vector<16x16xf32>
    %40 = math.exp %39 : vector<16x16xf32>
    %cst_16 = arith.constant dense<0.000000e+00> : vector<16xf32>
    %41 = vector.multi_reduction <add>, %40, %cst_16 [1] : vector<16x16xf32> to vector<16xf32>
    %42 = vector.shape_cast %41 : vector<16xf32> to vector<16x1xf32>
    %43 = vector.broadcast %42 : vector<16x1xf32> to vector<16x16xf32>
    %44 = arith.divf %40, %43 : vector<16x16xf32>
    %cst_17 = arith.constant dense<0.000000e+00> : vector<16x8xf32>
    %45 = tpu.matmul %44, %33, %cst_17 {dimension_numbers = #tpu.dot_dimension_numbers<[1], [0], [0], [1], [0, 0, 1, 1], [], []>} : vector<16x16xf32>, vector<16x8xf32>, vector<16x8xf32> -> vector<16x8xf32>
    %c32 = arith.constant 32 : index
    %c0_18 = arith.constant 0 : index
    %46 = vector.load %arg1[%c32, %c0_18] : memref<497x128xf32, #tpu.memory_space<vmem>>, vector<8x32xf32>
    %cst_19 = arith.constant dense<0.000000e+00> : vector<16x32xf32>
    %47 = tpu.matmul %45, %46, %cst_19 {dimension_numbers = #tpu.dot_dimension_numbers<[1], [0], [0], [1], [0, 0, 1, 1], [], []>} : vector<16x8xf32>, vector<8x32xf32>, vector<16x32xf32> -> vector<16x32xf32>
    %48 = arith.addf %30, %47 : vector<16x32xf32>
    %49 = vector.extract_strided_slice %29 {offsets = [0, 8], sizes = [16, 8], strides = [1, 1]} : vector<16x96xf32> to vector<16x8xf32>
    %50 = vector.extract_strided_slice %29 {offsets = [0, 40], sizes = [16, 8], strides = [1, 1]} : vector<16x96xf32> to vector<16x8xf32>
    %51 = vector.extract_strided_slice %29 {offsets = [0, 72], sizes = [16, 8], strides = [1, 1]} : vector<16x96xf32> to vector<16x8xf32>
    %cst_20 = arith.constant dense<0.000000e+00> : vector<16x16xf32>
    %52 = tpu.matmul %49, %50, %cst_20 {dimension_numbers = #tpu.dot_dimension_numbers<[1], [1], [0], [0], [0, 0, 1, 0], [], []>} : vector<16x8xf32>, vector<16x8xf32>, vector<16x16xf32> -> vector<16x16xf32>
    %53 = arith.addf %52, %24 : vector<16x16xf32>
    %cst_21 = arith.constant dense<0xFF800000> : vector<16xf32>
    %54 = vector.multi_reduction <maximumf>, %53, %cst_21 [1] : vector<16x16xf32> to vector<16xf32>
    %55 = vector.shape_cast %54 : vector<16xf32> to vector<16x1xf32>
    %56 = vector.broadcast %55 : vector<16x1xf32> to vector<16x16xf32>
    %57 = arith.subf %53, %56 : vector<16x16xf32>
    %58 = math.exp %57 : vector<16x16xf32>
    %cst_22 = arith.constant dense<0.000000e+00> : vector<16xf32>
    %59 = vector.multi_reduction <add>, %58, %cst_22 [1] : vector<16x16xf32> to vector<16xf32>
    %60 = vector.shape_cast %59 : vector<16xf32> to vector<16x1xf32>
    %61 = vector.broadcast %60 : vector<16x1xf32> to vector<16x16xf32>
    %62 = arith.divf %58, %61 : vector<16x16xf32>
    %cst_23 = arith.constant dense<0.000000e+00> : vector<16x8xf32>
    %63 = tpu.matmul %62, %51, %cst_23 {dimension_numbers = #tpu.dot_dimension_numbers<[1], [0], [0], [1], [0, 0, 1, 1], [], []>} : vector<16x16xf32>, vector<16x8xf32>, vector<16x8xf32> -> vector<16x8xf32>
    %c40 = arith.constant 40 : index
    %c0_24 = arith.constant 0 : index
    %64 = vector.load %arg1[%c40, %c0_24] : memref<497x128xf32, #tpu.memory_space<vmem>>, vector<8x32xf32>
    %cst_25 = arith.constant dense<0.000000e+00> : vector<16x32xf32>
    %65 = tpu.matmul %63, %64, %cst_25 {dimension_numbers = #tpu.dot_dimension_numbers<[1], [0], [0], [1], [0, 0, 1, 1], [], []>} : vector<16x8xf32>, vector<8x32xf32>, vector<16x32xf32> -> vector<16x32xf32>
    %66 = arith.addf %48, %65 : vector<16x32xf32>
    %67 = vector.extract_strided_slice %29 {offsets = [0, 16], sizes = [16, 8], strides = [1, 1]} : vector<16x96xf32> to vector<16x8xf32>
    %68 = vector.extract_strided_slice %29 {offsets = [0, 48], sizes = [16, 8], strides = [1, 1]} : vector<16x96xf32> to vector<16x8xf32>
    %69 = vector.extract_strided_slice %29 {offsets = [0, 80], sizes = [16, 8], strides = [1, 1]} : vector<16x96xf32> to vector<16x8xf32>
    %cst_26 = arith.constant dense<0.000000e+00> : vector<16x16xf32>
    %70 = tpu.matmul %67, %68, %cst_26 {dimension_numbers = #tpu.dot_dimension_numbers<[1], [1], [0], [0], [0, 0, 1, 0], [], []>} : vector<16x8xf32>, vector<16x8xf32>, vector<16x16xf32> -> vector<16x16xf32>
    %71 = arith.addf %70, %24 : vector<16x16xf32>
    %cst_27 = arith.constant dense<0xFF800000> : vector<16xf32>
    %72 = vector.multi_reduction <maximumf>, %71, %cst_27 [1] : vector<16x16xf32> to vector<16xf32>
    %73 = vector.shape_cast %72 : vector<16xf32> to vector<16x1xf32>
    %74 = vector.broadcast %73 : vector<16x1xf32> to vector<16x16xf32>
    %75 = arith.subf %71, %74 : vector<16x16xf32>
    %76 = math.exp %75 : vector<16x16xf32>
    %cst_28 = arith.constant dense<0.000000e+00> : vector<16xf32>
    %77 = vector.multi_reduction <add>, %76, %cst_28 [1] : vector<16x16xf32> to vector<16xf32>
    %78 = vector.shape_cast %77 : vector<16xf32> to vector<16x1xf32>
    %79 = vector.broadcast %78 : vector<16x1xf32> to vector<16x16xf32>
    %80 = arith.divf %76, %79 : vector<16x16xf32>
    %cst_29 = arith.constant dense<0.000000e+00> : vector<16x8xf32>
    %81 = tpu.matmul %80, %69, %cst_29 {dimension_numbers = #tpu.dot_dimension_numbers<[1], [0], [0], [1], [0, 0, 1, 1], [], []>} : vector<16x16xf32>, vector<16x8xf32>, vector<16x8xf32> -> vector<16x8xf32>
    %c48 = arith.constant 48 : index
    %c0_30 = arith.constant 0 : index
    %82 = vector.load %arg1[%c48, %c0_30] : memref<497x128xf32, #tpu.memory_space<vmem>>, vector<8x32xf32>
    %cst_31 = arith.constant dense<0.000000e+00> : vector<16x32xf32>
    %83 = tpu.matmul %81, %82, %cst_31 {dimension_numbers = #tpu.dot_dimension_numbers<[1], [0], [0], [1], [0, 0, 1, 1], [], []>} : vector<16x8xf32>, vector<8x32xf32>, vector<16x32xf32> -> vector<16x32xf32>
    %84 = arith.addf %66, %83 : vector<16x32xf32>
    %85 = vector.extract_strided_slice %29 {offsets = [0, 24], sizes = [16, 8], strides = [1, 1]} : vector<16x96xf32> to vector<16x8xf32>
    %86 = vector.extract_strided_slice %29 {offsets = [0, 56], sizes = [16, 8], strides = [1, 1]} : vector<16x96xf32> to vector<16x8xf32>
    %87 = vector.extract_strided_slice %29 {offsets = [0, 88], sizes = [16, 8], strides = [1, 1]} : vector<16x96xf32> to vector<16x8xf32>
    %cst_32 = arith.constant dense<0.000000e+00> : vector<16x16xf32>
    %88 = tpu.matmul %85, %86, %cst_32 {dimension_numbers = #tpu.dot_dimension_numbers<[1], [1], [0], [0], [0, 0, 1, 0], [], []>} : vector<16x8xf32>, vector<16x8xf32>, vector<16x16xf32> -> vector<16x16xf32>
    %89 = arith.addf %88, %24 : vector<16x16xf32>
    %cst_33 = arith.constant dense<0xFF800000> : vector<16xf32>
    %90 = vector.multi_reduction <maximumf>, %89, %cst_33 [1] : vector<16x16xf32> to vector<16xf32>
    %91 = vector.shape_cast %90 : vector<16xf32> to vector<16x1xf32>
    %92 = vector.broadcast %91 : vector<16x1xf32> to vector<16x16xf32>
    %93 = arith.subf %89, %92 : vector<16x16xf32>
    %94 = math.exp %93 : vector<16x16xf32>
    %cst_34 = arith.constant dense<0.000000e+00> : vector<16xf32>
    %95 = vector.multi_reduction <add>, %94, %cst_34 [1] : vector<16x16xf32> to vector<16xf32>
    %96 = vector.shape_cast %95 : vector<16xf32> to vector<16x1xf32>
    %97 = vector.broadcast %96 : vector<16x1xf32> to vector<16x16xf32>
    %98 = arith.divf %94, %97 : vector<16x16xf32>
    %cst_35 = arith.constant dense<0.000000e+00> : vector<16x8xf32>
    %99 = tpu.matmul %98, %87, %cst_35 {dimension_numbers = #tpu.dot_dimension_numbers<[1], [0], [0], [1], [0, 0, 1, 1], [], []>} : vector<16x16xf32>, vector<16x8xf32>, vector<16x8xf32> -> vector<16x8xf32>
    %c56 = arith.constant 56 : index
    %c0_36 = arith.constant 0 : index
    %100 = vector.load %arg1[%c56, %c0_36] : memref<497x128xf32, #tpu.memory_space<vmem>>, vector<8x32xf32>
    %cst_37 = arith.constant dense<0.000000e+00> : vector<16x32xf32>
    %101 = tpu.matmul %99, %100, %cst_37 {dimension_numbers = #tpu.dot_dimension_numbers<[1], [0], [0], [1], [0, 0, 1, 1], [], []>} : vector<16x8xf32>, vector<8x32xf32>, vector<16x32xf32> -> vector<16x32xf32>
    %102 = arith.addf %84, %101 : vector<16x32xf32>
    %c225 = arith.constant 225 : index
    %c0_38 = arith.constant 0 : index
    %103 = vector.load %arg1[%c225, %c0_38] : memref<497x128xf32, #tpu.memory_space<vmem>>, vector<1x32xf32>
    %104 = vector.broadcast %103 : vector<1x32xf32> to vector<16x32xf32>
    %105 = arith.addf %102, %104 : vector<16x32xf32>
    %106 = arith.addf %0, %105 : vector<16x32xf32>
    %c226 = arith.constant 226 : index
    %c0_39 = arith.constant 0 : index
    %107 = vector.load %arg1[%c226, %c0_39] : memref<497x128xf32, #tpu.memory_space<vmem>>, vector<1x32xf32>
    %c227 = arith.constant 227 : index
    %c0_40 = arith.constant 0 : index
    %108 = vector.load %arg1[%c227, %c0_40] : memref<497x128xf32, #tpu.memory_space<vmem>>, vector<1x32xf32>
    %cst_41 = arith.constant dense<0.000000e+00> : vector<16xf32>
    %109 = vector.multi_reduction <add>, %106, %cst_41 [1] : vector<16x32xf32> to vector<16xf32>
    %110 = vector.shape_cast %109 : vector<16xf32> to vector<16x1xf32>
    %cst_42 = arith.constant 3.200000e+01 : f32
    %111 = vector.broadcast %cst_42 : f32 to vector<16x1xf32>
    %112 = arith.divf %110, %111 : vector<16x1xf32>
    %113 = vector.broadcast %112 : vector<16x1xf32> to vector<16x32xf32>
    %114 = arith.subf %106, %113 : vector<16x32xf32>
    %115 = arith.mulf %114, %114 : vector<16x32xf32>
    %cst_43 = arith.constant dense<0.000000e+00> : vector<16xf32>
    %116 = vector.multi_reduction <add>, %115, %cst_43 [1] : vector<16x32xf32> to vector<16xf32>
    %117 = vector.shape_cast %116 : vector<16xf32> to vector<16x1xf32>
    %cst_44 = arith.constant 3.200000e+01 : f32
    %118 = vector.broadcast %cst_44 : f32 to vector<16x1xf32>
    %119 = arith.divf %117, %118 : vector<16x1xf32>
    %120 = vector.broadcast %112 : vector<16x1xf32> to vector<16x32xf32>
    %121 = arith.subf %106, %120 : vector<16x32xf32>
    %cst_45 = arith.constant 9.99999996E-13 : f32
    %122 = vector.broadcast %cst_45 : f32 to vector<16x1xf32>
    %123 = arith.addf %119, %122 : vector<16x1xf32>
    %124 = math.rsqrt %123 : vector<16x1xf32>
    %125 = vector.broadcast %124 : vector<16x1xf32> to vector<16x32xf32>
    %126 = arith.mulf %121, %125 : vector<16x32xf32>
    %127 = vector.broadcast %107 : vector<1x32xf32> to vector<16x32xf32>
    %128 = arith.mulf %126, %127 : vector<16x32xf32>
    %129 = vector.broadcast %108 : vector<1x32xf32> to vector<16x32xf32>
    %130 = arith.addf %128, %129 : vector<16x32xf32>
    %c64 = arith.constant 64 : index
    %c0_46 = arith.constant 0 : index
    %131 = vector.load %arg1[%c64, %c0_46] : memref<497x128xf32, #tpu.memory_space<vmem>>, vector<32x128xf32>
    %c228 = arith.constant 228 : index
    %c0_47 = arith.constant 0 : index
    %132 = vector.load %arg1[%c228, %c0_47] : memref<497x128xf32, #tpu.memory_space<vmem>>, vector<1x128xf32>
    %cst_48 = arith.constant dense<0.000000e+00> : vector<16x128xf32>
    %133 = tpu.matmul %130, %131, %cst_48 {dimension_numbers = #tpu.dot_dimension_numbers<[1], [0], [0], [1], [0, 0, 1, 1], [], []>} : vector<16x32xf32>, vector<32x128xf32>, vector<16x128xf32> -> vector<16x128xf32>
    %134 = vector.broadcast %132 : vector<1x128xf32> to vector<16x128xf32>
    %135 = arith.addf %133, %134 : vector<16x128xf32>
    %cst_49 = arith.constant 5.000000e-01 : f32
    %136 = vector.broadcast %cst_49 : f32 to vector<16x128xf32>
    %137 = arith.mulf %136, %135 : vector<16x128xf32>
    %cst_50 = arith.constant 4.471500e-02 : f32
    %138 = vector.broadcast %cst_50 : f32 to vector<16x128xf32>
    %139 = arith.mulf %138, %135 : vector<16x128xf32>
    %140 = arith.mulf %139, %135 : vector<16x128xf32>
    %141 = arith.mulf %140, %135 : vector<16x128xf32>
    %142 = arith.addf %135, %141 : vector<16x128xf32>
    %cst_51 = arith.constant 0.797884583 : f32
    %143 = vector.broadcast %cst_51 : f32 to vector<16x128xf32>
    %144 = arith.mulf %143, %142 : vector<16x128xf32>
    %145 = math.tanh %144 : vector<16x128xf32>
    %cst_52 = arith.constant 1.000000e+00 : f32
    %146 = vector.broadcast %cst_52 : f32 to vector<16x128xf32>
    %147 = arith.addf %146, %145 : vector<16x128xf32>
    %148 = arith.mulf %137, %147 : vector<16x128xf32>
    %c96 = arith.constant 96 : index
    %c0_53 = arith.constant 0 : index
    %149 = vector.load %arg1[%c96, %c0_53] : memref<497x128xf32, #tpu.memory_space<vmem>>, vector<128x32xf32>
    %c229 = arith.constant 229 : index
    %c0_54 = arith.constant 0 : index
    %150 = vector.load %arg1[%c229, %c0_54] : memref<497x128xf32, #tpu.memory_space<vmem>>, vector<1x32xf32>
    %cst_55 = arith.constant dense<0.000000e+00> : vector<16x32xf32>
    %151 = tpu.matmul %148, %149, %cst_55 {dimension_numbers = #tpu.dot_dimension_numbers<[1], [0], [0], [1], [0, 0, 1, 1], [], []>} : vector<16x128xf32>, vector<128x32xf32>, vector<16x32xf32> -> vector<16x32xf32>
    %152 = vector.broadcast %150 : vector<1x32xf32> to vector<16x32xf32>
    %153 = arith.addf %151, %152 : vector<16x32xf32>
    %154 = arith.addf %130, %153 : vector<16x32xf32>
    %c230 = arith.constant 230 : index
    %c0_56 = arith.constant 0 : index
    %155 = vector.load %arg1[%c230, %c0_56] : memref<497x128xf32, #tpu.memory_space<vmem>>, vector<1x32xf32>
    %c231 = arith.constant 231 : index
    %c0_57 = arith.constant 0 : index
    %156 = vector.load %arg1[%c231, %c0_57] : memref<497x128xf32, #tpu.memory_space<vmem>>, vector<1x32xf32>
    %cst_58 = arith.constant dense<0.000000e+00> : vector<16xf32>
    %157 = vector.multi_reduction <add>, %154, %cst_58 [1] : vector<16x32xf32> to vector<16xf32>
    %158 = vector.shape_cast %157 : vector<16xf32> to vector<16x1xf32>
    %cst_59 = arith.constant 3.200000e+01 : f32
    %159 = vector.broadcast %cst_59 : f32 to vector<16x1xf32>
    %160 = arith.divf %158, %159 : vector<16x1xf32>
    %161 = vector.broadcast %160 : vector<16x1xf32> to vector<16x32xf32>
    %162 = arith.subf %154, %161 : vector<16x32xf32>
    %163 = arith.mulf %162, %162 : vector<16x32xf32>
    %cst_60 = arith.constant dense<0.000000e+00> : vector<16xf32>
    %164 = vector.multi_reduction <add>, %163, %cst_60 [1] : vector<16x32xf32> to vector<16xf32>
    %165 = vector.shape_cast %164 : vector<16xf32> to vector<16x1xf32>
    %cst_61 = arith.constant 3.200000e+01 : f32
    %166 = vector.broadcast %cst_61 : f32 to vector<16x1xf32>
    %167 = arith.divf %165, %166 : vector<16x1xf32>
    %168 = vector.broadcast %160 : vector<16x1xf32> to vector<16x32xf32>
    %169 = arith.subf %154, %168 : vector<16x32xf32>
    %cst_62 = arith.constant 9.99999996E-13 : f32
    %170 = vector.broadcast %cst_62 : f32 to vector<16x1xf32>
    %171 = arith.addf %167, %170 : vector<16x1xf32>
    %172 = math.rsqrt %171 : vector<16x1xf32>
    %173 = vector.broadcast %172 : vector<16x1xf32> to vector<16x32xf32>
    %174 = arith.mulf %169, %173 : vector<16x32xf32>
    %175 = vector.broadcast %155 : vector<1x32xf32> to vector<16x32xf32>
    %176 = arith.mulf %174, %175 : vector<16x32xf32>
    %177 = vector.broadcast %156 : vector<1x32xf32> to vector<16x32xf32>
    %178 = arith.addf %176, %177 : vector<16x32xf32>
    %c232 = arith.constant 232 : index
    %c0_63 = arith.constant 0 : index
    %179 = vector.load %arg1[%c232, %c0_63] : memref<497x128xf32, #tpu.memory_space<vmem>>, vector<32x96xf32>
    %c456 = arith.constant 456 : index
    %c0_64 = arith.constant 0 : index
    %180 = vector.load %arg1[%c456, %c0_64] : memref<497x128xf32, #tpu.memory_space<vmem>>, vector<1x96xf32>
    %cst_65 = arith.constant dense<0.000000e+00> : vector<16x96xf32>
    %181 = tpu.matmul %178, %179, %cst_65 {dimension_numbers = #tpu.dot_dimension_numbers<[1], [0], [0], [1], [0, 0, 1, 1], [], []>} : vector<16x32xf32>, vector<32x96xf32>, vector<16x96xf32> -> vector<16x96xf32>
    %182 = vector.broadcast %180 : vector<1x96xf32> to vector<16x96xf32>
    %183 = arith.addf %181, %182 : vector<16x96xf32>
    %cst_66 = arith.constant 0.000000e+00 : f32
    %184 = vector.broadcast %cst_66 : f32 to vector<16x32xf32>
    %185 = vector.extract_strided_slice %183 {offsets = [0, 0], sizes = [16, 8], strides = [1, 1]} : vector<16x96xf32> to vector<16x8xf32>
    %186 = vector.extract_strided_slice %183 {offsets = [0, 32], sizes = [16, 8], strides = [1, 1]} : vector<16x96xf32> to vector<16x8xf32>
    %187 = vector.extract_strided_slice %183 {offsets = [0, 64], sizes = [16, 8], strides = [1, 1]} : vector<16x96xf32> to vector<16x8xf32>
    %cst_67 = arith.constant dense<0.000000e+00> : vector<16x16xf32>
    %188 = tpu.matmul %185, %186, %cst_67 {dimension_numbers = #tpu.dot_dimension_numbers<[1], [1], [0], [0], [0, 0, 1, 0], [], []>} : vector<16x8xf32>, vector<16x8xf32>, vector<16x16xf32> -> vector<16x16xf32>
    %189 = arith.addf %188, %24 : vector<16x16xf32>
    %cst_68 = arith.constant dense<0xFF800000> : vector<16xf32>
    %190 = vector.multi_reduction <maximumf>, %189, %cst_68 [1] : vector<16x16xf32> to vector<16xf32>
    %191 = vector.shape_cast %190 : vector<16xf32> to vector<16x1xf32>
    %192 = vector.broadcast %191 : vector<16x1xf32> to vector<16x16xf32>
    %193 = arith.subf %189, %192 : vector<16x16xf32>
    %194 = math.exp %193 : vector<16x16xf32>
    %cst_69 = arith.constant dense<0.000000e+00> : vector<16xf32>
    %195 = vector.multi_reduction <add>, %194, %cst_69 [1] : vector<16x16xf32> to vector<16xf32>
    %196 = vector.shape_cast %195 : vector<16xf32> to vector<16x1xf32>
    %197 = vector.broadcast %196 : vector<16x1xf32> to vector<16x16xf32>
    %198 = arith.divf %194, %197 : vector<16x16xf32>
    %cst_70 = arith.constant dense<0.000000e+00> : vector<16x8xf32>
    %199 = tpu.matmul %198, %187, %cst_70 {dimension_numbers = #tpu.dot_dimension_numbers<[1], [0], [0], [1], [0, 0, 1, 1], [], []>} : vector<16x16xf32>, vector<16x8xf32>, vector<16x8xf32> -> vector<16x8xf32>
    %c264 = arith.constant 264 : index
    %c0_71 = arith.constant 0 : index
    %200 = vector.load %arg1[%c264, %c0_71] : memref<497x128xf32, #tpu.memory_space<vmem>>, vector<8x32xf32>
    %cst_72 = arith.constant dense<0.000000e+00> : vector<16x32xf32>
    %201 = tpu.matmul %199, %200, %cst_72 {dimension_numbers = #tpu.dot_dimension_numbers<[1], [0], [0], [1], [0, 0, 1, 1], [], []>} : vector<16x8xf32>, vector<8x32xf32>, vector<16x32xf32> -> vector<16x32xf32>
    %202 = arith.addf %184, %201 : vector<16x32xf32>
    %203 = vector.extract_strided_slice %183 {offsets = [0, 8], sizes = [16, 8], strides = [1, 1]} : vector<16x96xf32> to vector<16x8xf32>
    %204 = vector.extract_strided_slice %183 {offsets = [0, 40], sizes = [16, 8], strides = [1, 1]} : vector<16x96xf32> to vector<16x8xf32>
    %205 = vector.extract_strided_slice %183 {offsets = [0, 72], sizes = [16, 8], strides = [1, 1]} : vector<16x96xf32> to vector<16x8xf32>
    %cst_73 = arith.constant dense<0.000000e+00> : vector<16x16xf32>
    %206 = tpu.matmul %203, %204, %cst_73 {dimension_numbers = #tpu.dot_dimension_numbers<[1], [1], [0], [0], [0, 0, 1, 0], [], []>} : vector<16x8xf32>, vector<16x8xf32>, vector<16x16xf32> -> vector<16x16xf32>
    %207 = arith.addf %206, %24 : vector<16x16xf32>
    %cst_74 = arith.constant dense<0xFF800000> : vector<16xf32>
    %208 = vector.multi_reduction <maximumf>, %207, %cst_74 [1] : vector<16x16xf32> to vector<16xf32>
    %209 = vector.shape_cast %208 : vector<16xf32> to vector<16x1xf32>
    %210 = vector.broadcast %209 : vector<16x1xf32> to vector<16x16xf32>
    %211 = arith.subf %207, %210 : vector<16x16xf32>
    %212 = math.exp %211 : vector<16x16xf32>
    %cst_75 = arith.constant dense<0.000000e+00> : vector<16xf32>
    %213 = vector.multi_reduction <add>, %212, %cst_75 [1] : vector<16x16xf32> to vector<16xf32>
    %214 = vector.shape_cast %213 : vector<16xf32> to vector<16x1xf32>
    %215 = vector.broadcast %214 : vector<16x1xf32> to vector<16x16xf32>
    %216 = arith.divf %212, %215 : vector<16x16xf32>
    %cst_76 = arith.constant dense<0.000000e+00> : vector<16x8xf32>
    %217 = tpu.matmul %216, %205, %cst_76 {dimension_numbers = #tpu.dot_dimension_numbers<[1], [0], [0], [1], [0, 0, 1, 1], [], []>} : vector<16x16xf32>, vector<16x8xf32>, vector<16x8xf32> -> vector<16x8xf32>
    %c272 = arith.constant 272 : index
    %c0_77 = arith.constant 0 : index
    %218 = vector.load %arg1[%c272, %c0_77] : memref<497x128xf32, #tpu.memory_space<vmem>>, vector<8x32xf32>
    %cst_78 = arith.constant dense<0.000000e+00> : vector<16x32xf32>
    %219 = tpu.matmul %217, %218, %cst_78 {dimension_numbers = #tpu.dot_dimension_numbers<[1], [0], [0], [1], [0, 0, 1, 1], [], []>} : vector<16x8xf32>, vector<8x32xf32>, vector<16x32xf32> -> vector<16x32xf32>
    %220 = arith.addf %202, %219 : vector<16x32xf32>
    %221 = vector.extract_strided_slice %183 {offsets = [0, 16], sizes = [16, 8], strides = [1, 1]} : vector<16x96xf32> to vector<16x8xf32>
    %222 = vector.extract_strided_slice %183 {offsets = [0, 48], sizes = [16, 8], strides = [1, 1]} : vector<16x96xf32> to vector<16x8xf32>
    %223 = vector.extract_strided_slice %183 {offsets = [0, 80], sizes = [16, 8], strides = [1, 1]} : vector<16x96xf32> to vector<16x8xf32>
    %cst_79 = arith.constant dense<0.000000e+00> : vector<16x16xf32>
    %224 = tpu.matmul %221, %222, %cst_79 {dimension_numbers = #tpu.dot_dimension_numbers<[1], [1], [0], [0], [0, 0, 1, 0], [], []>} : vector<16x8xf32>, vector<16x8xf32>, vector<16x16xf32> -> vector<16x16xf32>
    %225 = arith.addf %224, %24 : vector<16x16xf32>
    %cst_80 = arith.constant dense<0xFF800000> : vector<16xf32>
    %226 = vector.multi_reduction <maximumf>, %225, %cst_80 [1] : vector<16x16xf32> to vector<16xf32>
    %227 = vector.shape_cast %226 : vector<16xf32> to vector<16x1xf32>
    %228 = vector.broadcast %227 : vector<16x1xf32> to vector<16x16xf32>
    %229 = arith.subf %225, %228 : vector<16x16xf32>
    %230 = math.exp %229 : vector<16x16xf32>
    %cst_81 = arith.constant dense<0.000000e+00> : vector<16xf32>
    %231 = vector.multi_reduction <add>, %230, %cst_81 [1] : vector<16x16xf32> to vector<16xf32>
    %232 = vector.shape_cast %231 : vector<16xf32> to vector<16x1xf32>
    %233 = vector.broadcast %232 : vector<16x1xf32> to vector<16x16xf32>
    %234 = arith.divf %230, %233 : vector<16x16xf32>
    %cst_82 = arith.constant dense<0.000000e+00> : vector<16x8xf32>
    %235 = tpu.matmul %234, %223, %cst_82 {dimension_numbers = #tpu.dot_dimension_numbers<[1], [0], [0], [1], [0, 0, 1, 1], [], []>} : vector<16x16xf32>, vector<16x8xf32>, vector<16x8xf32> -> vector<16x8xf32>
    %c280 = arith.constant 280 : index
    %c0_83 = arith.constant 0 : index
    %236 = vector.load %arg1[%c280, %c0_83] : memref<497x128xf32, #tpu.memory_space<vmem>>, vector<8x32xf32>
    %cst_84 = arith.constant dense<0.000000e+00> : vector<16x32xf32>
    %237 = tpu.matmul %235, %236, %cst_84 {dimension_numbers = #tpu.dot_dimension_numbers<[1], [0], [0], [1], [0, 0, 1, 1], [], []>} : vector<16x8xf32>, vector<8x32xf32>, vector<16x32xf32> -> vector<16x32xf32>
    %238 = arith.addf %220, %237 : vector<16x32xf32>
    %239 = vector.extract_strided_slice %183 {offsets = [0, 24], sizes = [16, 8], strides = [1, 1]} : vector<16x96xf32> to vector<16x8xf32>
    %240 = vector.extract_strided_slice %183 {offsets = [0, 56], sizes = [16, 8], strides = [1, 1]} : vector<16x96xf32> to vector<16x8xf32>
    %241 = vector.extract_strided_slice %183 {offsets = [0, 88], sizes = [16, 8], strides = [1, 1]} : vector<16x96xf32> to vector<16x8xf32>
    %cst_85 = arith.constant dense<0.000000e+00> : vector<16x16xf32>
    %242 = tpu.matmul %239, %240, %cst_85 {dimension_numbers = #tpu.dot_dimension_numbers<[1], [1], [0], [0], [0, 0, 1, 0], [], []>} : vector<16x8xf32>, vector<16x8xf32>, vector<16x16xf32> -> vector<16x16xf32>
    %243 = arith.addf %242, %24 : vector<16x16xf32>
    %cst_86 = arith.constant dense<0xFF800000> : vector<16xf32>
    %244 = vector.multi_reduction <maximumf>, %243, %cst_86 [1] : vector<16x16xf32> to vector<16xf32>
    %245 = vector.shape_cast %244 : vector<16xf32> to vector<16x1xf32>
    %246 = vector.broadcast %245 : vector<16x1xf32> to vector<16x16xf32>
    %247 = arith.subf %243, %246 : vector<16x16xf32>
    %248 = math.exp %247 : vector<16x16xf32>
    %cst_87 = arith.constant dense<0.000000e+00> : vector<16xf32>
    %249 = vector.multi_reduction <add>, %248, %cst_87 [1] : vector<16x16xf32> to vector<16xf32>
    %250 = vector.shape_cast %249 : vector<16xf32> to vector<16x1xf32>
    %251 = vector.broadcast %250 : vector<16x1xf32> to vector<16x16xf32>
    %252 = arith.divf %248, %251 : vector<16x16xf32>
    %cst_88 = arith.constant dense<0.000000e+00> : vector<16x8xf32>
    %253 = tpu.matmul %252, %241, %cst_88 {dimension_numbers = #tpu.dot_dimension_numbers<[1], [0], [0], [1], [0, 0, 1, 1], [], []>} : vector<16x16xf32>, vector<16x8xf32>, vector<16x8xf32> -> vector<16x8xf32>
    %c288 = arith.constant 288 : index
    %c0_89 = arith.constant 0 : index
    %254 = vector.load %arg1[%c288, %c0_89] : memref<497x128xf32, #tpu.memory_space<vmem>>, vector<8x32xf32>
    %cst_90 = arith.constant dense<0.000000e+00> : vector<16x32xf32>
    %255 = tpu.matmul %253, %254, %cst_90 {dimension_numbers = #tpu.dot_dimension_numbers<[1], [0], [0], [1], [0, 0, 1, 1], [], []>} : vector<16x8xf32>, vector<8x32xf32>, vector<16x32xf32> -> vector<16x32xf32>
    %256 = arith.addf %238, %255 : vector<16x32xf32>
    %c457 = arith.constant 457 : index
    %c0_91 = arith.constant 0 : index
    %257 = vector.load %arg1[%c457, %c0_91] : memref<497x128xf32, #tpu.memory_space<vmem>>, vector<1x32xf32>
    %258 = vector.broadcast %257 : vector<1x32xf32> to vector<16x32xf32>
    %259 = arith.addf %256, %258 : vector<16x32xf32>
    %260 = arith.addf %178, %259 : vector<16x32xf32>
    %c458 = arith.constant 458 : index
    %c0_92 = arith.constant 0 : index
    %261 = vector.load %arg1[%c458, %c0_92] : memref<497x128xf32, #tpu.memory_space<vmem>>, vector<1x32xf32>
    %c459 = arith.constant 459 : index
    %c0_93 = arith.constant 0 : index
    %262 = vector.load %arg1[%c459, %c0_93] : memref<497x128xf32, #tpu.memory_space<vmem>>, vector<1x32xf32>
    %cst_94 = arith.constant dense<0.000000e+00> : vector<16xf32>
    %263 = vector.multi_reduction <add>, %260, %cst_94 [1] : vector<16x32xf32> to vector<16xf32>
    %264 = vector.shape_cast %263 : vector<16xf32> to vector<16x1xf32>
    %cst_95 = arith.constant 3.200000e+01 : f32
    %265 = vector.broadcast %cst_95 : f32 to vector<16x1xf32>
    %266 = arith.divf %264, %265 : vector<16x1xf32>
    %267 = vector.broadcast %266 : vector<16x1xf32> to vector<16x32xf32>
    %268 = arith.subf %260, %267 : vector<16x32xf32>
    %269 = arith.mulf %268, %268 : vector<16x32xf32>
    %cst_96 = arith.constant dense<0.000000e+00> : vector<16xf32>
    %270 = vector.multi_reduction <add>, %269, %cst_96 [1] : vector<16x32xf32> to vector<16xf32>
    %271 = vector.shape_cast %270 : vector<16xf32> to vector<16x1xf32>
    %cst_97 = arith.constant 3.200000e+01 : f32
    %272 = vector.broadcast %cst_97 : f32 to vector<16x1xf32>
    %273 = arith.divf %271, %272 : vector<16x1xf32>
    %274 = vector.broadcast %266 : vector<16x1xf32> to vector<16x32xf32>
    %275 = arith.subf %260, %274 : vector<16x32xf32>
    %cst_98 = arith.constant 9.99999996E-13 : f32
    %276 = vector.broadcast %cst_98 : f32 to vector<16x1xf32>
    %277 = arith.addf %273, %276 : vector<16x1xf32>
    %278 = math.rsqrt %277 : vector<16x1xf32>
    %279 = vector.broadcast %278 : vector<16x1xf32> to vector<16x32xf32>
    %280 = arith.mulf %275, %279 : vector<16x32xf32>
    %281 = vector.broadcast %261 : vector<1x32xf32> to vector<16x32xf32>
    %282 = arith.mulf %280, %281 : vector<16x32xf32>
    %283 = vector.broadcast %262 : vector<1x32xf32> to vector<16x32xf32>
    %284 = arith.addf %282, %283 : vector<16x32xf32>
    %c296 = arith.constant 296 : index
    %c0_99 = arith.constant 0 : index
    %285 = vector.load %arg1[%c296, %c0_99] : memref<497x128xf32, #tpu.memory_space<vmem>>, vector<32x128xf32>
    %c460 = arith.constant 460 : index
    %c0_100 = arith.constant 0 : index
    %286 = vector.load %arg1[%c460, %c0_100] : memref<497x128xf32, #tpu.memory_space<vmem>>, vector<1x128xf32>
    %cst_101 = arith.constant dense<0.000000e+00> : vector<16x128xf32>
    %287 = tpu.matmul %284, %285, %cst_101 {dimension_numbers = #tpu.dot_dimension_numbers<[1], [0], [0], [1], [0, 0, 1, 1], [], []>} : vector<16x32xf32>, vector<32x128xf32>, vector<16x128xf32> -> vector<16x128xf32>
    %288 = vector.broadcast %286 : vector<1x128xf32> to vector<16x128xf32>
    %289 = arith.addf %287, %288 : vector<16x128xf32>
    %cst_102 = arith.constant 5.000000e-01 : f32
    %290 = vector.broadcast %cst_102 : f32 to vector<16x128xf32>
    %291 = arith.mulf %290, %289 : vector<16x128xf32>
    %cst_103 = arith.constant 4.471500e-02 : f32
    %292 = vector.broadcast %cst_103 : f32 to vector<16x128xf32>
    %293 = arith.mulf %292, %289 : vector<16x128xf32>
    %294 = arith.mulf %293, %289 : vector<16x128xf32>
    %295 = arith.mulf %294, %289 : vector<16x128xf32>
    %296 = arith.addf %289, %295 : vector<16x128xf32>
    %cst_104 = arith.constant 0.797884583 : f32
    %297 = vector.broadcast %cst_104 : f32 to vector<16x128xf32>
    %298 = arith.mulf %297, %296 : vector<16x128xf32>
    %299 = math.tanh %298 : vector<16x128xf32>
    %cst_105 = arith.constant 1.000000e+00 : f32
    %300 = vector.broadcast %cst_105 : f32 to vector<16x128xf32>
    %301 = arith.addf %300, %299 : vector<16x128xf32>
    %302 = arith.mulf %291, %301 : vector<16x128xf32>
    %c328 = arith.constant 328 : index
    %c0_106 = arith.constant 0 : index
    %303 = vector.load %arg1[%c328, %c0_106] : memref<497x128xf32, #tpu.memory_space<vmem>>, vector<128x32xf32>
    %c461 = arith.constant 461 : index
    %c0_107 = arith.constant 0 : index
    %304 = vector.load %arg1[%c461, %c0_107] : memref<497x128xf32, #tpu.memory_space<vmem>>, vector<1x32xf32>
    %cst_108 = arith.constant dense<0.000000e+00> : vector<16x32xf32>
    %305 = tpu.matmul %302, %303, %cst_108 {dimension_numbers = #tpu.dot_dimension_numbers<[1], [0], [0], [1], [0, 0, 1, 1], [], []>} : vector<16x128xf32>, vector<128x32xf32>, vector<16x32xf32> -> vector<16x32xf32>
    %306 = vector.broadcast %304 : vector<1x32xf32> to vector<16x32xf32>
    %307 = arith.addf %305, %306 : vector<16x32xf32>
    %308 = arith.addf %284, %307 : vector<16x32xf32>
    %c462 = arith.constant 462 : index
    %c0_109 = arith.constant 0 : index
    %309 = vector.load %arg1[%c462, %c0_109] : memref<497x128xf32, #tpu.memory_space<vmem>>, vector<1x32xf32>
    %c463 = arith.constant 463 : index
    %c0_110 = arith.constant 0 : index
    %310 = vector.load %arg1[%c463, %c0_110] : memref<497x128xf32, #tpu.memory_space<vmem>>, vector<1x32xf32>
    %cst_111 = arith.constant dense<0.000000e+00> : vector<16xf32>
    %311 = vector.multi_reduction <add>, %308, %cst_111 [1] : vector<16x32xf32> to vector<16xf32>
    %312 = vector.shape_cast %311 : vector<16xf32> to vector<16x1xf32>
    %cst_112 = arith.constant 3.200000e+01 : f32
    %313 = vector.broadcast %cst_112 : f32 to vector<16x1xf32>
    %314 = arith.divf %312, %313 : vector<16x1xf32>
    %315 = vector.broadcast %314 : vector<16x1xf32> to vector<16x32xf32>
    %316 = arith.subf %308, %315 : vector<16x32xf32>
    %317 = arith.mulf %316, %316 : vector<16x32xf32>
    %cst_113 = arith.constant dense<0.000000e+00> : vector<16xf32>
    %318 = vector.multi_reduction <add>, %317, %cst_113 [1] : vector<16x32xf32> to vector<16xf32>
    %319 = vector.shape_cast %318 : vector<16xf32> to vector<16x1xf32>
    %cst_114 = arith.constant 3.200000e+01 : f32
    %320 = vector.broadcast %cst_114 : f32 to vector<16x1xf32>
    %321 = arith.divf %319, %320 : vector<16x1xf32>
    %322 = vector.broadcast %314 : vector<16x1xf32> to vector<16x32xf32>
    %323 = arith.subf %308, %322 : vector<16x32xf32>
    %cst_115 = arith.constant 9.99999996E-13 : f32
    %324 = vector.broadcast %cst_115 : f32 to vector<16x1xf32>
    %325 = arith.addf %321, %324 : vector<16x1xf32>
    %326 = math.rsqrt %325 : vector<16x1xf32>
    %327 = vector.broadcast %326 : vector<16x1xf32> to vector<16x32xf32>
    %328 = arith.mulf %323, %327 : vector<16x32xf32>
    %329 = vector.broadcast %309 : vector<1x32xf32> to vector<16x32xf32>
    %330 = arith.mulf %328, %329 : vector<16x32xf32>
    %331 = vector.broadcast %310 : vector<1x32xf32> to vector<16x32xf32>
    %332 = arith.addf %330, %331 : vector<16x32xf32>
    %cst_116 = arith.constant dense<0.000000e+00> : vector<6x32xf32>
    %333 = tpu.matmul %1, %332, %cst_116 {dimension_numbers = #tpu.dot_dimension_numbers<[1], [0], [0], [1], [0, 0, 1, 1], [], []>} : vector<6x16xf32>, vector<16x32xf32>, vector<6x32xf32> -> vector<6x32xf32>
    %c464 = arith.constant 464 : index
    %c0_117 = arith.constant 0 : index
    %334 = vector.load %arg1[%c464, %c0_117] : memref<497x128xf32, #tpu.memory_space<vmem>>, vector<32x2xf32>
    %c496 = arith.constant 496 : index
    %c0_118 = arith.constant 0 : index
    %335 = vector.load %arg1[%c496, %c0_118] : memref<497x128xf32, #tpu.memory_space<vmem>>, vector<1x2xf32>
    %cst_119 = arith.constant dense<0.000000e+00> : vector<6x2xf32>
    %336 = tpu.matmul %333, %334, %cst_119 {dimension_numbers = #tpu.dot_dimension_numbers<[1], [0], [0], [1], [0, 0, 1, 1], [], []>} : vector<6x32xf32>, vector<32x2xf32>, vector<6x2xf32> -> vector<6x2xf32>
    %337 = vector.broadcast %335 : vector<1x2xf32> to vector<6x2xf32>
    %338 = arith.addf %336, %337 : vector<6x2xf32>
    %c0_120 = arith.constant 0 : index
    %c0_121 = arith.constant 0 : index
    %339 = vector.load %arg2[%c0_120, %c0_121] : memref<6x2xf32, #tpu.memory_space<vmem>>, vector<6x2xf32>
    tpu.vector_store %arg2[%c0_120, %c0_121], %338 {strides = array<i32>} : memref<6x2xf32, #tpu.memory_space<vmem>>, vector<6x2xf32>,
    return
  }
}

</mosaic_0001>

<llo_original>
// kernel: eq.1
$region0: #{eq.1}
  %s0 = inlined_call_operand.vmem [shape: s32[2,3], index: 0, kind: input, shape index: {}]
  %s1 = inlined_call_operand.vmem [shape: s32[6], index: 1, kind: output, shape index: {}]
  $region1: #{eq.1} parent=0
    #allocation0 [shape = 'u8[4096]{0}', space=vmem, size = 0x1000, scoped, tag = 'scoped mem for output reshape']
    #allocation1 [shape = 'u8[4096]{0}', space=vmem, size = 0x1000, scoped, tag = 'scoped mem for input reshape']
    %s3 = sshll.u32 1, 2
    %s4 = ssub.s32 %s3, 1
    %v5 = vld [vmem:[%s0] sm:%s4]
    %6 = vst [vmem:[#allocation1] sm:%s4] %v5
    %v7 = vld [vmem:[#allocation1] sm:$0x1]
    %vm8 = vcmask 23552
    %9 = vst.msk [vmem:[#allocation0] sm:$0x1] %vm8, %v7
    %s10 = scalar_lea.vmem [#allocation1], 1
    %v11 = vld [vmem:[%s10] sm:$0x1]
    %12 = vrot.lane.b32.xlu0 %v11, 3
    %v13 = vpop.permute.xlu0 %12
    %vm14 = vcmask 48152
    %15 = vst.msk [vmem:[#allocation0] sm:$0x1] %vm14, %v13
    %s17 = sshll.u32 1, 1
    %s18 = ssub.s32 %s17, 1
    %v20 = vld [vmem:[#allocation0] sm:%s18]
    %s21 = sshll.u32 1, 1
    %s22 = ssub.s32 %s21, 1
    %23 = vst [vmem:[%s1] sm:%s22] %v20

// kernel: bertsum_forward.1
$region0: #{bertsum_forward.1}
  #allocation0 [shape = 'u32[]', space=smem, size = 0x4, offset = 0x4, fixed_abs, tag = 'smem constant byte address 0x4 - core index']
  #allocation1 [shape = 'u32[144,128]{1,0:T(1,128)}', space=vmem, size = 0x12000, scoped, tag = 'internal scratch']
  %s0 = inlined_call_operand.vmem [shape: f32[23,32], index: 0, kind: input, shape index: {}]
  %s1 = inlined_call_operand.vmem [shape: f32[497,128], index: 1, kind: input, shape index: {}]
  %s2 = inlined_call_operand.vmem [shape: f32[6,2], index: 2, kind: output, shape index: {}]
  %s3 = sld [smem:[#allocation0]]
  $region18: #{bertsum_forward.1} parent=0
    _
  %s5 = ssub.s32 1, %s3
  %s6 = scalar_select 0, %s5, %s3
  // Predicated region
  $region2: #{bertsum_forward.1} parent=0 // pred_check
    _
  $region3: #{bertsum_forward.1} parent=0 // pred_check_branch
    %8 = sbr.rel (0) target = $region5
  $region4: #{bertsum_forward.1} parent=0 // pred_region
    _
  $region5: #{bertsum_forward.1} parent=0 // pred_fallthru
    _
  // Predicated region
  $region6: #{bertsum_forward.1} parent=0 // pred_check
    _
  $region7: #{bertsum_forward.1} parent=0 // pred_check_branch
    %10 = sbr.rel (0) target = $region9
  $region8: #{bertsum_forward.1} parent=0 // pred_region
    _
  $region9: #{bertsum_forward.1} parent=0 // pred_fallthru
    _
  %v11 = vld [vmem:[%s0] sm:$0xff]
  %v12 = vld [vmem:[%s0 + $0x8] sm:$0xff]
  %v13 = vld [vmem:[%s0 + $0x10] sm:$0x3f]
  %v14 = vld [vmem:[%s0 + $0x16] sm:$0x1]
  %v15 = vlaneseq
  %v16 = vshrl.u32 %v15, 7
  %v17 = vadd.s32 %v16, 8
  %v18 = vcvt.s32.f32 %v16
  %v19 = vcvt.s32.f32 %v17
  %v20 = vlaneseq
  %v21 = vand.u32 %v20, 127
  %v22 = vcvt.s32.f32 %v21
  %v23 = vmul.f32 %v18, 0.125
  %v24 = vmul.f32 %v19, 0.125
  %v25 = vadd.f32 %v23, 1e-06
  %v26 = vadd.f32 %v24, 1e-06
  %v27 = vfloor.f32 %v25
  %v28 = vfloor.f32 %v26
  %v29 = vmul.f32 %v22, 0.125
  %v30 = vadd.f32 %v29, 1e-06
  %v31 = vfloor.f32 %v30
  %vm32 = vcmp.eq.f32.partialorder %v27, %v31
  %vm33 = vcmp.eq.f32.partialorder %v28, %v31
  %vm34 = vcmp.gt.f32.partialorder %v14, 0.5
  %v35 = vsel %vm34, 1, 0
  %v36 = vlaneseq
  %v37 = vshrl.u32 %v36, 7
  %v38 = vsub.s32 0, %v37
  %v39 = vrot.slane %v35, %v38
  %vm40 = vcmp.eq.s32.totalorder %v39, 1
  %vm41 = vmand %vm32, %vm40
  %vm42 = vmand %vm33, %vm40
  %v43 = vsel %vm41, 0.0, -1e+09
  %v44 = vsel %vm42, 0.0, -1e+09
  %v45 = vld [vmem:[%s1] sm:$0xff]
  %v46 = vld [vmem:[%s1 + $0x8] sm:$0xff]
  %v47 = vld [vmem:[%s1 + $0x10] sm:$0xff]
  %v48 = vld [vmem:[%s1 + $0x18] sm:$0xff]
  %v49 = vld [vmem:[%s1 + $0xe0] sm:$0x1]
  %v50 = vlaneseq
  %v51 = vshrl.u32 %v50, 7
  %v52 = vsub.s32 0, %v51
  %v53 = vrot.slane %v49, %v52
  %vm54 = vcmask 261120
  %v56 = vsel %vm54, %v11, 0
  %v59 = vsel %vm54, %v12, 0
  %61 = vmatprep.subr.mxu0 0.0
  %62 = vmatpush1.msra.mxu0 0.0
  %63 = vmatprep.subr.mxu0 0.0
  %64 = vmatpush1.msra.mxu0 0.0
  %65 = vmatprep.subr.mxu0 0.0
  %66 = vmatpush1.msra.mxu0 0.0
  %67 = vmatprep.subr.mxu0 0.0
  %68 = vmatpush1.msra.mxu0 0.0
  %69 = vmatprep.subr.mxu0 0.0
  %70 = vmatpush1.msra.mxu0 0.0
  %71 = vmatprep.subr.mxu0 0.0
  %72 = vmatpush1.msra.mxu0 0.0
  %73 = vmatprep.subr.mxu0 0.0
  %74 = vmatpush1.msra.mxu0 0.0
  %75 = vmatprep.subr.mxu0 0.0
  %76 = vmatpush1.msra.mxu0 0.0
  %77 = vmatprep.subr.mxu0 0.0
  %78 = vmatpush1.msra.mxu0 0.0
  %79 = vmatprep.subr.mxu0 0.0
  %80 = vmatpush1.msra.mxu0 0.0
  %81 = vmatprep.subr.mxu0 0.0
  %82 = vmatpush1.msra.mxu0 0.0
  %83 = vmatprep.subr.mxu0 0.0
  %84 = vmatpush1.msra.mxu0 0.0
  %85 = vmatprep.subr.mxu0 0.0
  %86 = vmatpush1.msra.mxu0 %v48
  %87 = vmatprep.subr.mxu0 0.0
  %88 = vmatpush1.msra.mxu0 %v47
  %89 = vmatprep.subr.mxu0 0.0
  %90 = vmatpush1.msra.mxu0 %v46
  %91 = vmatprep.subr.mxu0 0.0
  %92 = vmatpush1.msra.mxu0 %v45
  %93 = vmatprep.subr.mxu0 0.0
  %94 = vmatpush2.msra.mxu0 0.0
  %95 = vmatprep.subr.mxu0 0.0
  %96 = vmatpush2.msra.mxu0 0.0
  %97 = vmatprep.subr.mxu0 0.0
  %98 = vmatpush2.msra.mxu0 0.0
  %99 = vmatprep.subr.mxu0 0.0
  %100 = vmatpush2.msra.mxu0 0.0
  %101 = vmatprep.subr.mxu0 0.0
  %102 = vmatpush2.msra.mxu0 0.0
  %103 = vmatprep.subr.mxu0 0.0
  %104 = vmatpush2.msra.mxu0 0.0
  %105 = vmatprep.subr.mxu0 0.0
  %106 = vmatpush2.msra.mxu0 0.0
  %107 = vmatprep.subr.mxu0 0.0
  %108 = vmatpush2.msra.mxu0 0.0
  %109 = vmatprep.subr.mxu0 0.0
  %110 = vmatpush2.msra.mxu0 0.0
  %111 = vmatprep.subr.mxu0 0.0
  %112 = vmatpush2.msra.mxu0 0.0
  %113 = vmatprep.subr.mxu0 0.0
  %114 = vmatpush2.msra.mxu0 0.0
  %115 = vmatprep.subr.mxu0 0.0
  %116 = vmatpush2.msra.mxu0 0.0
  %117 = vmatprep.subr.mxu0 0.0
  %118 = vmatpush2.msra.mxu0 0.0
  %119 = vmatprep.subr.mxu0 0.0
  %120 = vmatpush2.msra.mxu0 0.0
  %121 = vmatprep.subr.mxu0 0.0
  %122 = vmatpush2.msra.mxu0 0.0
  %123 = vmatprep.subr.mxu0 0.0
  %124 = vmatpush2.msra.mxu0 0.0
  %125 = vmatprep.mubr.f32.mxu0 0.0
  %126 = vmatmul.mubr.f32.gmra.mxu0 %v56
  %v127 = vpop.f32.mrf.mxu0
  %v128 = vadd.f32 %v53, %v127
  %v129 = vpop.f32.mrf.mxu0
  %130 = vmatprep.mubr.f32.mxu0 0.0
  %131 = vmatmul.mubr.f32.gmra.mxu0 %v59
  %v132 = vpop.f32.mrf.mxu0
  %v133 = vadd.f32 %v53, %v132
  %v134 = vpop.f32.mrf.mxu0
  %135 = vdwg.mxu0
  %138 = vrot.lane.b32.xlu0 %v128, 96
  %v139 = vpop.permute.xlu0 %138
  %140 = vrot.lane.b32.xlu0 %v133, 96
  %v141 = vpop.permute.xlu0 %140
  %vm142 = vcmask 64512
  %v143 = vsel %vm142, %v128, 0
  %v145 = vsel %vm142, %v133, 0
  %v147 = vsel %vm142, %v139, 0
  %v149 = vsel %vm142, %v141, 0
  %151 = vmatprep.subr.mxu0 0.0
  %152 = vmatpush1.xpose.msra.mxu0 0.0
  %153 = vmatprep.subr.mxu0 0.0
  %154 = vmatpush1.xpose.msra.mxu0 0.0
  %155 = vmatprep.subr.mxu0 0.0
  %156 = vmatpush1.xpose.msra.mxu0 0.0
  %157 = vmatprep.subr.mxu0 0.0
  %158 = vmatpush1.xpose.msra.mxu0 0.0
  %159 = vmatprep.subr.mxu0 0.0
  %160 = vmatpush1.xpose.msra.mxu0 0.0
  %161 = vmatprep.subr.mxu0 0.0
  %162 = vmatpush1.xpose.msra.mxu0 0.0
  %163 = vmatprep.subr.mxu0 0.0
  %164 = vmatpush1.xpose.msra.mxu0 0.0
  %165 = vmatprep.subr.mxu0 0.0
  %166 = vmatpush1.xpose.msra.mxu0 0.0
  %167 = vmatprep.subr.mxu0 0.0
  %168 = vmatpush1.xpose.msra.mxu0 0.0
  %169 = vmatprep.subr.mxu0 0.0
  %170 = vmatpush1.xpose.msra.mxu0 0.0
  %171 = vmatprep.subr.mxu0 0.0
  %172 = vmatpush1.xpose.msra.mxu0 0.0
  %173 = vmatprep.subr.mxu0 0.0
  %174 = vmatpush1.xpose.msra.mxu0 0.0
  %175 = vmatprep.subr.mxu0 0.0
  %176 = vmatpush1.xpose.msra.mxu0 0.0
  %177 = vmatprep.subr.mxu0 0.0
  %178 = vmatpush1.xpose.msra.mxu0 0.0
  %179 = vmatprep.subr.mxu0 0.0
  %180 = vmatpush1.xpose.msra.mxu0 %v149
  %181 = vmatprep.subr.mxu0 0.0
  %182 = vmatpush1.xpose.msra.mxu0 %v147
  %183 = vmatprep.subr.mxu0 0.0
  %184 = vmatpush2.xpose.msra.mxu0 0.0
  %185 = vmatprep.subr.mxu0 0.0
  %186 = vmatpush2.xpose.msra.mxu0 0.0
  %187 = vmatprep.subr.mxu0 0.0
  %188 = vmatpush2.xpose.msra.mxu0 0.0
  %189 = vmatprep.subr.mxu0 0.0
  %190 = vmatpush2.xpose.msra.mxu0 0.0
  %191 = vmatprep.subr.mxu0 0.0
  %192 = vmatpush2.xpose.msra.mxu0 0.0
  %193 = vmatprep.subr.mxu0 0.0
  %194 = vmatpush2.xpose.msra.mxu0 0.0
  %195 = vmatprep.subr.mxu0 0.0
  %196 = vmatpush2.xpose.msra.mxu0 0.0
  %197 = vmatprep.subr.mxu0 0.0
  %198 = vmatpush2.xpose.msra.mxu0 0.0
  %199 = vmatprep.subr.mxu0 0.0
  %200 = vmatpush2.xpose.msra.mxu0 0.0
  %201 = vmatprep.subr.mxu0 0.0
  %202 = vmatpush2.xpose.msra.mxu0 0.0
  %203 = vmatprep.subr.mxu0 0.0
  %204 = vmatpush2.xpose.msra.mxu0 0.0
  %205 = vmatprep.subr.mxu0 0.0
  %206 = vmatpush2.xpose.msra.mxu0 0.0
  %207 = vmatprep.subr.mxu0 0.0
  %208 = vmatpush2.xpose.msra.mxu0 0.0
  %209 = vmatprep.subr.mxu0 0.0
  %210 = vmatpush2.xpose.msra.mxu0 0.0
  %211 = vmatprep.subr.mxu0 0.0
  %212 = vmatpush2.xpose.msra.mxu0 0.0
  %213 = vmatprep.subr.mxu0 0.0
  %214 = vmatpush2.xpose.msra.mxu0 0.0
  %215 = vmatprep.mubr.f32.mxu0 0.0
  %216 = vmatmul.mubr.f32.gmra.mxu0 %v143
  %v217 = vpop.f32.mrf.mxu0
  %v218 = vadd.f32 %v43, %v217
  %v219 = vpop.f32.mrf.mxu0
  %220 = vmatprep.mubr.f32.mxu0 0.0
  %221 = vmatmul.mubr.f32.gmra.mxu0 %v145
  %v222 = vpop.f32.mrf.mxu0
  %v223 = vadd.f32 %v44, %v222
  %v224 = vpop.f32.mrf.mxu0
  %225 = vdwg.mxu0
  %vm226 = vcmask 130048
  %v227 = vsel %vm226, %v218, -inf
  %228 = vmax.xlane.f32.xlu0 %v227
  %v229 = vpop.xlane.xlu0 %228
  %v230 = vsel %vm226, %v223, -inf
  %231 = vmax.xlane.f32.xlu0 %v230
  %v232 = vpop.xlane.xlu0 %231
  %v233 = vsub.f32 %v218, %v229
  %v234 = vsub.f32 %v223, %v232
  %v235 = vmul.f32 %v233, 1.442695
  %v236 = vpow.pop %v235
  %v237 = vmul.f32 %v234, 1.442695
  %v238 = vpow.pop %v237
  %v239 = vsel %vm226, %v236, 0.0
  %240 = vadd.xlane.f32.xlu0 %v239
  %v241 = vpop.xlane.xlu0 %240
  %v242 = vsel %vm226, %v238, 0.0
  %243 = vadd.xlane.f32.xlu0 %v242
  %v244 = vpop.xlane.xlu0 %243
  %v245 = vrcp.pop %v241
  %v246 = vmul.f32 %v236, %v245
  %v247 = vrcp.pop %v244
  %v248 = vmul.f32 %v238, %v247
  %249 = vrot.lane.b32.xlu0 %v128, 64
  %v250 = vpop.permute.xlu0 %249
  %251 = vrot.lane.b32.xlu0 %v133, 64
  %v252 = vpop.permute.xlu0 %251
  %v256 = vsel %vm226, %v246, 0
  %v259 = vsel %vm226, %v248, 0
  %261 = vmatprep.subr.mxu0 0.0
  %262 = vmatpush1.msra.mxu0 0.0
  %263 = vmatprep.subr.mxu0 0.0
  %264 = vmatpush1.msra.mxu0 0.0
  %265 = vmatprep.subr.mxu0 0.0
  %266 = vmatpush1.msra.mxu0 0.0
  %267 = vmatprep.subr.mxu0 0.0
  %268 = vmatpush1.msra.mxu0 0.0
  %269 = vmatprep.subr.mxu0 0.0
  %270 = vmatpush1.msra.mxu0 0.0
  %271 = vmatprep.subr.mxu0 0.0
  %272 = vmatpush1.msra.mxu0 0.0
  %273 = vmatprep.subr.mxu0 0.0
  %274 = vmatpush1.msra.mxu0 0.0
  %275 = vmatprep.subr.mxu0 0.0
  %276 = vmatpush1.msra.mxu0 0.0
  %277 = vmatprep.subr.mxu0 0.0
  %278 = vmatpush1.msra.mxu0 0.0
  %279 = vmatprep.subr.mxu0 0.0
  %280 = vmatpush1.msra.mxu0 0.0
  %281 = vmatprep.subr.mxu0 0.0
  %282 = vmatpush1.msra.mxu0 0.0
  %283 = vmatprep.subr.mxu0 0.0
  %284 = vmatpush1.msra.mxu0 0.0
  %285 = vmatprep.subr.mxu0 0.0
  %286 = vmatpush1.msra.mxu0 0.0
  %287 = vmatprep.subr.mxu0 0.0
  %288 = vmatpush1.msra.mxu0 0.0
  %289 = vmatprep.subr.mxu0 0.0
  %290 = vmatpush1.msra.mxu0 %v252
  %291 = vmatprep.subr.mxu0 0.0
  %292 = vmatpush1.msra.mxu0 %v250
  %293 = vmatprep.subr.mxu0 0.0
  %294 = vmatpush2.msra.mxu0 0.0
  %295 = vmatprep.subr.mxu0 0.0
  %296 = vmatpush2.msra.mxu0 0.0
  %297 = vmatprep.subr.mxu0 0.0
  %298 = vmatpush2.msra.mxu0 0.0
  %299 = vmatprep.subr.mxu0 0.0
  %300 = vmatpush2.msra.mxu0 0.0
  %301 = vmatprep.subr.mxu0 0.0
  %302 = vmatpush2.msra.mxu0 0.0
  %303 = vmatprep.subr.mxu0 0.0
  %304 = vmatpush2.msra.mxu0 0.0
  %305 = vmatprep.subr.mxu0 0.0
  %306 = vmatpush2.msra.mxu0 0.0
  %307 = vmatprep.subr.mxu0 0.0
  %308 = vmatpush2.msra.mxu0 0.0
  %309 = vmatprep.subr.mxu0 0.0
  %310 = vmatpush2.msra.mxu0 0.0
  %311 = vmatprep.subr.mxu0 0.0
  %312 = vmatpush2.msra.mxu0 0.0
  %313 = vmatprep.subr.mxu0 0.0
  %314 = vmatpush2.msra.mxu0 0.0
  %315 = vmatprep.subr.mxu0 0.0
  %316 = vmatpush2.msra.mxu0 0.0
  %317 = vmatprep.subr.mxu0 0.0
  %318 = vmatpush2.msra.mxu0 0.0
  %319 = vmatprep.subr.mxu0 0.0
  %320 = vmatpush2.msra.mxu0 0.0
  %321 = vmatprep.subr.mxu0 0.0
  %322 = vmatpush2.msra.mxu0 0.0
  %323 = vmatprep.subr.mxu0 0.0
  %324 = vmatpush2.msra.mxu0 0.0
  %325 = vmatprep.mubr.f32.mxu0 0.0
  %326 = vmatmul.mubr.f32.gmra.mxu0 %v256
  %v327 = vpop.f32.mrf.mxu0
  %v328 = vadd.f32 0.0, %v327
  %v329 = vpop.f32.mrf.mxu0
  %330 = vmatprep.mubr.f32.mxu0 0.0
  %331 = vmatmul.mubr.f32.gmra.mxu0 %v259
  %v332 = vpop.f32.mrf.mxu0
  %v333 = vadd.f32 0.0, %v332
  %v334 = vpop.f32.mrf.mxu0
  %335 = vdwg.mxu0
  %v336 = vld [vmem:[%s1 + $0x20] sm:$0xff]
  %337 = vrot.lane.b32.xlu0 %v128, 120
  %v338 = vpop.permute.xlu0 %337
  %339 = vrot.lane.b32.xlu0 %v133, 120
  %v340 = vpop.permute.xlu0 %339
  %341 = vrot.lane.b32.xlu0 %v128, 88
  %v342 = vpop.permute.xlu0 %341
  %343 = vrot.lane.b32.xlu0 %v133, 88
  %v344 = vpop.permute.xlu0 %343
  %v345 = vsel %vm142, %v338, 0
  %v347 = vsel %vm142, %v340, 0
  %v349 = vsel %vm142, %v342, 0
  %v351 = vsel %vm142, %v344, 0
  %353 = vmatprep.subr.mxu0 0.0
  %354 = vmatpush1.xpose.msra.mxu0 0.0
  %355 = vmatprep.subr.mxu0 0.0
  %356 = vmatpush1.xpose.msra.mxu0 0.0
  %357 = vmatprep.subr.mxu0 0.0
  %358 = vmatpush1.xpose.msra.mxu0 0.0
  %359 = vmatprep.subr.mxu0 0.0
  %360 = vmatpush1.xpose.msra.mxu0 0.0
  %361 = vmatprep.subr.mxu0 0.0
  %362 = vmatpush1.xpose.msra.mxu0 0.0
  %363 = vmatprep.subr.mxu0 0.0
  %364 = vmatpush1.xpose.msra.mxu0 0.0
  %365 = vmatprep.subr.mxu0 0.0
  %366 = vmatpush1.xpose.msra.mxu0 0.0
  %367 = vmatprep.subr.mxu0 0.0
  %368 = vmatpush1.xpose.msra.mxu0 0.0
  %369 = vmatprep.subr.mxu0 0.0
  %370 = vmatpush1.xpose.msra.mxu0 0.0
  %371 = vmatprep.subr.mxu0 0.0
  %372 = vmatpush1.xpose.msra.mxu0 0.0
  %373 = vmatprep.subr.mxu0 0.0
  %374 = vmatpush1.xpose.msra.mxu0 0.0
  %375 = vmatprep.subr.mxu0 0.0
  %376 = vmatpush1.xpose.msra.mxu0 0.0
  %377 = vmatprep.subr.mxu0 0.0
  %378 = vmatpush1.xpose.msra.mxu0 0.0
  %379 = vmatprep.subr.mxu0 0.0
  %380 = vmatpush1.xpose.msra.mxu0 0.0
  %381 = vmatprep.subr.mxu0 0.0
  %382 = vmatpush1.xpose.msra.mxu0 %v351
  %383 = vmatprep.subr.mxu0 0.0
  %384 = vmatpush1.xpose.msra.mxu0 %v349
  %385 = vmatprep.subr.mxu0 0.0
  %386 = vmatpush2.xpose.msra.mxu0 0.0
  %387 = vmatprep.subr.mxu0 0.0
  %388 = vmatpush2.xpose.msra.mxu0 0.0
  %389 = vmatprep.subr.mxu0 0.0
  %390 = vmatpush2.xpose.msra.mxu0 0.0
  %391 = vmatprep.subr.mxu0 0.0
  %392 = vmatpush2.xpose.msra.mxu0 0.0
  %393 = vmatprep.subr.mxu0 0.0
  %394 = vmatpush2.xpose.msra.mxu0 0.0
  %395 = vmatprep.subr.mxu0 0.0
  %396 = vmatpush2.xpose.msra.mxu0 0.0
  %397 = vmatprep.subr.mxu0 0.0
  %398 = vmatpush2.xpose.msra.mxu0 0.0
  %399 = vmatprep.subr.mxu0 0.0
  %400 = vmatpush2.xpose.msra.mxu0 0.0
  %401 = vmatprep.subr.mxu0 0.0
  %402 = vmatpush2.xpose.msra.mxu0 0.0
  %403 = vmatprep.subr.mxu0 0.0
  %404 = vmatpush2.xpose.msra.mxu0 0.0
  %405 = vmatprep.subr.mxu0 0.0
  %406 = vmatpush2.xpose.msra.mxu0 0.0
  %407 = vmatprep.subr.mxu0 0.0
  %408 = vmatpush2.xpose.msra.mxu0 0.0
  %409 = vmatprep.subr.mxu0 0.0
  %410 = vmatpush2.xpose.msra.mxu0 0.0
  %411 = vmatprep.subr.mxu0 0.0
  %412 = vmatpush2.xpose.msra.mxu0 0.0
  %413 = vmatprep.subr.mxu0 0.0
  %414 = vmatpush2.xpose.msra.mxu0 0.0
  %415 = vmatprep.subr.mxu0 0.0
  %416 = vmatpush2.xpose.msra.mxu0 0.0
  %417 = vmatprep.mubr.f32.mxu0 0.0
  %418 = vmatmul.mubr.f32.gmra.mxu0 %v345
  %v419 = vpop.f32.mrf.mxu0
  %v420 = vadd.f32 %v43, %v419
  %v421 = vpop.f32.mrf.mxu0
  %422 = vmatprep.mubr.f32.mxu0 0.0
  %423 = vmatmul.mubr.f32.gmra.mxu0 %v347
  %v424 = vpop.f32.mrf.mxu0
  %v425 = vadd.f32 %v44, %v424
  %v426 = vpop.f32.mrf.mxu0
  %427 = vdwg.mxu0
  %v428 = vsel %vm226, %v420, -inf
  %429 = vmax.xlane.f32.xlu0 %v428
  %v430 = vpop.xlane.xlu0 %429
  %v431 = vsel %vm226, %v425, -inf
  %432 = vmax.xlane.f32.xlu0 %v431
  %v433 = vpop.xlane.xlu0 %432
  %v434 = vsub.f32 %v420, %v430
  %v435 = vsub.f32 %v425, %v433
  %v436 = vmul.f32 %v434, 1.442695
  %v437 = vpow.pop %v436
  %v438 = vmul.f32 %v435, 1.442695
  %v439 = vpow.pop %v438
  %v440 = vsel %vm226, %v437, 0.0
  %441 = vadd.xlane.f32.xlu0 %v440
  %v442 = vpop.xlane.xlu0 %441
  %v443 = vsel %vm226, %v439, 0.0
  %444 = vadd.xlane.f32.xlu0 %v443
  %v445 = vpop.xlane.xlu0 %444
  %v446 = vrcp.pop %v442
  %v447 = vmul.f32 %v437, %v446
  %v448 = vrcp.pop %v445
  %v449 = vmul.f32 %v439, %v448
  %450 = vrot.lane.b32.xlu0 %v128, 56
  %v451 = vpop.permute.xlu0 %450
  %452 = vrot.lane.b32.xlu0 %v133, 56
  %v453 = vpop.permute.xlu0 %452
  %v457 = vsel %vm226, %v447, 0
  %v460 = vsel %vm226, %v449, 0
  %462 = vmatprep.subr.mxu0 0.0
  %463 = vmatpush1.msra.mxu0 0.0
  %464 = vmatprep.subr.mxu0 0.0
  %465 = vmatpush1.msra.mxu0 0.0
  %466 = vmatprep.subr.mxu0 0.0
  %467 = vmatpush1.msra.mxu0 0.0
  %468 = vmatprep.subr.mxu0 0.0
  %469 = vmatpush1.msra.mxu0 0.0
  %470 = vmatprep.subr.mxu0 0.0
  %471 = vmatpush1.msra.mxu0 0.0
  %472 = vmatprep.subr.mxu0 0.0
  %473 = vmatpush1.msra.mxu0 0.0
  %474 = vmatprep.subr.mxu0 0.0
  %475 = vmatpush1.msra.mxu0 0.0
  %476 = vmatprep.subr.mxu0 0.0
  %477 = vmatpush1.msra.mxu0 0.0
  %478 = vmatprep.subr.mxu0 0.0
  %479 = vmatpush1.msra.mxu0 0.0
  %480 = vmatprep.subr.mxu0 0.0
  %481 = vmatpush1.msra.mxu0 0.0
  %482 = vmatprep.subr.mxu0 0.0
  %483 = vmatpush1.msra.mxu0 0.0
  %484 = vmatprep.subr.mxu0 0.0
  %485 = vmatpush1.msra.mxu0 0.0
  %486 = vmatprep.subr.mxu0 0.0
  %487 = vmatpush1.msra.mxu0 0.0
  %488 = vmatprep.subr.mxu0 0.0
  %489 = vmatpush1.msra.mxu0 0.0
  %490 = vmatprep.subr.mxu0 0.0
  %491 = vmatpush1.msra.mxu0 %v453
  %492 = vmatprep.subr.mxu0 0.0
  %493 = vmatpush1.msra.mxu0 %v451
  %494 = vmatprep.subr.mxu0 0.0
  %495 = vmatpush2.msra.mxu0 0.0
  %496 = vmatprep.subr.mxu0 0.0
  %497 = vmatpush2.msra.mxu0 0.0
  %498 = vmatprep.subr.mxu0 0.0
  %499 = vmatpush2.msra.mxu0 0.0
  %500 = vmatprep.subr.mxu0 0.0
  %501 = vmatpush2.msra.mxu0 0.0
  %502 = vmatprep.subr.mxu0 0.0
  %503 = vmatpush2.msra.mxu0 0.0
  %504 = vmatprep.subr.mxu0 0.0
  %505 = vmatpush2.msra.mxu0 0.0
  %506 = vmatprep.subr.mxu0 0.0
  %507 = vmatpush2.msra.mxu0 0.0
  %508 = vmatprep.subr.mxu0 0.0
  %509 = vmatpush2.msra.mxu0 0.0
  %510 = vmatprep.subr.mxu0 0.0
  %511 = vmatpush2.msra.mxu0 0.0
  %512 = vmatprep.subr.mxu0 0.0
  %513 = vmatpush2.msra.mxu0 0.0
  %514 = vmatprep.subr.mxu0 0.0
  %515 = vmatpush2.msra.mxu0 0.0
  %516 = vmatprep.subr.mxu0 0.0
  %517 = vmatpush2.msra.mxu0 0.0
  %518 = vmatprep.subr.mxu0 0.0
  %519 = vmatpush2.msra.mxu0 0.0
  %520 = vmatprep.subr.mxu0 0.0
  %521 = vmatpush2.msra.mxu0 0.0
  %522 = vmatprep.subr.mxu0 0.0
  %523 = vmatpush2.msra.mxu0 0.0
  %524 = vmatprep.subr.mxu0 0.0
  %525 = vmatpush2.msra.mxu0 0.0
  %526 = vmatprep.mubr.f32.mxu0 0.0
  %527 = vmatmul.mubr.f32.gmra.mxu0 %v457
  %v528 = vpop.f32.mrf.mxu0
  %v529 = vadd.f32 0.0, %v528
  %v530 = vpop.f32.mrf.mxu0
  %531 = vmatprep.mubr.f32.mxu0 0.0
  %532 = vmatmul.mubr.f32.gmra.mxu0 %v460
  %v533 = vpop.f32.mrf.mxu0
  %v534 = vadd.f32 0.0, %v533
  %v535 = vpop.f32.mrf.mxu0
  %536 = vdwg.mxu0
  %v537 = vld [vmem:[%s1 + $0x28] sm:$0xff]
  %v539 = vsel %vm142, %v529, 0
  %v542 = vsel %vm142, %v534, 0
  %544 = vmatprep.subr.mxu0 0.0
  %545 = vmatpush1.msra.mxu0 0.0
  %546 = vmatprep.subr.mxu0 0.0
  %547 = vmatpush1.msra.mxu0 0.0
  %548 = vmatprep.subr.mxu0 0.0
  %549 = vmatpush1.msra.mxu0 0.0
  %550 = vmatprep.subr.mxu0 0.0
  %551 = vmatpush1.msra.mxu0 0.0
  %552 = vmatprep.subr.mxu0 0.0
  %553 = vmatpush1.msra.mxu0 0.0
  %554 = vmatprep.subr.mxu0 0.0
  %555 = vmatpush1.msra.mxu0 0.0
  %556 = vmatprep.subr.mxu0 0.0
  %557 = vmatpush1.msra.mxu0 0.0
  %558 = vmatprep.subr.mxu0 0.0
  %559 = vmatpush1.msra.mxu0 0.0
  %560 = vmatprep.subr.mxu0 0.0
  %561 = vmatpush1.msra.mxu0 0.0
  %562 = vmatprep.subr.mxu0 0.0
  %563 = vmatpush1.msra.mxu0 0.0
  %564 = vmatprep.subr.mxu0 0.0
  %565 = vmatpush1.msra.mxu0 0.0
  %566 = vmatprep.subr.mxu0 0.0
  %567 = vmatpush1.msra.mxu0 0.0
  %568 = vmatprep.subr.mxu0 0.0
  %569 = vmatpush1.msra.mxu0 0.0
  %570 = vmatprep.subr.mxu0 0.0
  %571 = vmatpush1.msra.mxu0 0.0
  %572 = vmatprep.subr.mxu0 0.0
  %573 = vmatpush1.msra.mxu0 0.0
  %574 = vmatprep.subr.mxu0 0.0
  %575 = vmatpush1.msra.mxu0 %v537
  %576 = vmatprep.subr.mxu0 0.0
  %577 = vmatpush2.msra.mxu0 0.0
  %578 = vmatprep.subr.mxu0 0.0
  %579 = vmatpush2.msra.mxu0 0.0
  %580 = vmatprep.subr.mxu0 0.0
  %581 = vmatpush2.msra.mxu0 0.0
  %582 = vmatprep.subr.mxu0 0.0
  %583 = vmatpush2.msra.mxu0 0.0
  %584 = vmatprep.subr.mxu0 0.0
  %585 = vmatpush2.msra.mxu0 0.0
  %586 = vmatprep.subr.mxu0 0.0
  %587 = vmatpush2.msra.mxu0 0.0
  %588 = vmatprep.subr.mxu0 0.0
  %589 = vmatpush2.msra.mxu0 0.0
  %590 = vmatprep.subr.mxu0 0.0
  %591 = vmatpush2.msra.mxu0 0.0
  %592 = vmatprep.subr.mxu0 0.0
  %593 = vmatpush2.msra.mxu0 0.0
  %594 = vmatprep.subr.mxu0 0.0
  %595 = vmatpush2.msra.mxu0 0.0
  %596 = vmatprep.subr.mxu0 0.0
  %597 = vmatpush2.msra.mxu0 0.0
  %598 = vmatprep.subr.mxu0 0.0
  %599 = vmatpush2.msra.mxu0 0.0
  %600 = vmatprep.subr.mxu0 0.0
  %601 = vmatpush2.msra.mxu0 0.0
  %602 = vmatprep.subr.mxu0 0.0
  %603 = vmatpush2.msra.mxu0 0.0
  %604 = vmatprep.subr.mxu0 0.0
  %605 = vmatpush2.msra.mxu0 0.0
  %606 = vmatprep.subr.mxu0 0.0
  %607 = vmatpush2.msra.mxu0 0.0
  %608 = vmatprep.mubr.f32.mxu0 0.0
  %609 = vmatmul.mubr.f32.gmra.mxu0 %v539
  %v610 = vpop.f32.mrf.mxu0
  %v611 = vadd.f32 0.0, %v610
  %v612 = vpop.f32.mrf.mxu0
  %613 = vmatprep.mubr.f32.mxu0 0.0
  %614 = vmatmul.mubr.f32.gmra.mxu0 %v542
  %v615 = vpop.f32.mrf.mxu0
  %v616 = vadd.f32 0.0, %v615
  %v617 = vpop.f32.mrf.mxu0
  %618 = vdwg.mxu0
  %v620 = vsel %vm142, %v328, 0
  %v623 = vsel %vm142, %v333, 0
  %625 = vmatprep.subr.mxu0 0.0
  %626 = vmatpush1.msra.mxu0 0.0
  %627 = vmatprep.subr.mxu0 0.0
  %628 = vmatpush1.msra.mxu0 0.0
  %629 = vmatprep.subr.mxu0 0.0
  %630 = vmatpush1.msra.mxu0 0.0
  %631 = vmatprep.subr.mxu0 0.0
  %632 = vmatpush1.msra.mxu0 0.0
  %633 = vmatprep.subr.mxu0 0.0
  %634 = vmatpush1.msra.mxu0 0.0
  %635 = vmatprep.subr.mxu0 0.0
  %636 = vmatpush1.msra.mxu0 0.0
  %637 = vmatprep.subr.mxu0 0.0
  %638 = vmatpush1.msra.mxu0 0.0
  %639 = vmatprep.subr.mxu0 0.0
  %640 = vmatpush1.msra.mxu0 0.0
  %641 = vmatprep.subr.mxu0 0.0
  %642 = vmatpush1.msra.mxu0 0.0
  %643 = vmatprep.subr.mxu0 0.0
  %644 = vmatpush1.msra.mxu0 0.0
  %645 = vmatprep.subr.mxu0 0.0
  %646 = vmatpush1.msra.mxu0 0.0
  %647 = vmatprep.subr.mxu0 0.0
  %648 = vmatpush1.msra.mxu0 0.0
  %649 = vmatprep.subr.mxu0 0.0
  %650 = vmatpush1.msra.mxu0 0.0
  %651 = vmatprep.subr.mxu0 0.0
  %652 = vmatpush1.msra.mxu0 0.0
  %653 = vmatprep.subr.mxu0 0.0
  %654 = vmatpush1.msra.mxu0 0.0
  %655 = vmatprep.subr.mxu0 0.0
  %656 = vmatpush1.msra.mxu0 %v336
  %657 = vmatprep.subr.mxu0 0.0
  %658 = vmatpush2.msra.mxu0 0.0
  %659 = vmatprep.subr.mxu0 0.0
  %660 = vmatpush2.msra.mxu0 0.0
  %661 = vmatprep.subr.mxu0 0.0
  %662 = vmatpush2.msra.mxu0 0.0
  %663 = vmatprep.subr.mxu0 0.0
  %664 = vmatpush2.msra.mxu0 0.0
  %665 = vmatprep.subr.mxu0 0.0
  %666 = vmatpush2.msra.mxu0 0.0
  %667 = vmatprep.subr.mxu0 0.0
  %668 = vmatpush2.msra.mxu0 0.0
  %669 = vmatprep.subr.mxu0 0.0
  %670 = vmatpush2.msra.mxu0 0.0
  %671 = vmatprep.subr.mxu0 0.0
  %672 = vmatpush2.msra.mxu0 0.0
  %673 = vmatprep.subr.mxu0 0.0
  %674 = vmatpush2.msra.mxu0 0.0
  %675 = vmatprep.subr.mxu0 0.0
  %676 = vmatpush2.msra.mxu0 0.0
  %677 = vmatprep.subr.mxu0 0.0
  %678 = vmatpush2.msra.mxu0 0.0
  %679 = vmatprep.subr.mxu0 0.0
  %680 = vmatpush2.msra.mxu0 0.0
  %681 = vmatprep.subr.mxu0 0.0
  %682 = vmatpush2.msra.mxu0 0.0
  %683 = vmatprep.subr.mxu0 0.0
  %684 = vmatpush2.msra.mxu0 0.0
  %685 = vmatprep.subr.mxu0 0.0
  %686 = vmatpush2.msra.mxu0 0.0
  %687 = vmatprep.subr.mxu0 0.0
  %688 = vmatpush2.msra.mxu0 0.0
  %689 = vmatprep.mubr.f32.mxu0 0.0
  %690 = vmatmul.mubr.f32.gmra.mxu0 %v620
  %v691 = vpop.f32.mrf.mxu0
  %v692 = vadd.f32 %v611, %v691
  %v693 = vpop.f32.mrf.mxu0
  %694 = vmatprep.mubr.f32.mxu0 0.0
  %695 = vmatmul.mubr.f32.gmra.mxu0 %v623
  %v696 = vpop.f32.mrf.mxu0
  %v697 = vadd.f32 %v616, %v696
  %v698 = vpop.f32.mrf.mxu0
  %699 = vdwg.mxu0
  %700 = vrot.lane.b32.xlu0 %v128, 112
  %v701 = vpop.permute.xlu0 %700
  %702 = vrot.lane.b32.xlu0 %v133, 112
  %v703 = vpop.permute.xlu0 %702
  %704 = vrot.lane.b32.xlu0 %v128, 80
  %v705 = vpop.permute.xlu0 %704
  %706 = vrot.lane.b32.xlu0 %v133, 80
  %v707 = vpop.permute.xlu0 %706
  %v708 = vsel %vm142, %v701, 0
  %v710 = vsel %vm142, %v703, 0
  %v712 = vsel %vm142, %v705, 0
  %v714 = vsel %vm142, %v707, 0
  %716 = vmatprep.subr.mxu0 0.0
  %717 = vmatpush1.xpose.msra.mxu0 0.0
  %718 = vmatprep.subr.mxu0 0.0
  %719 = vmatpush1.xpose.msra.mxu0 0.0
  %720 = vmatprep.subr.mxu0 0.0
  %721 = vmatpush1.xpose.msra.mxu0 0.0
  %722 = vmatprep.subr.mxu0 0.0
  %723 = vmatpush1.xpose.msra.mxu0 0.0
  %724 = vmatprep.subr.mxu0 0.0
  %725 = vmatpush1.xpose.msra.mxu0 0.0
  %726 = vmatprep.subr.mxu0 0.0
  %727 = vmatpush1.xpose.msra.mxu0 0.0
  %728 = vmatprep.subr.mxu0 0.0
  %729 = vmatpush1.xpose.msra.mxu0 0.0
  %730 = vmatprep.subr.mxu0 0.0
  %731 = vmatpush1.xpose.msra.mxu0 0.0
  %732 = vmatprep.subr.mxu0 0.0
  %733 = vmatpush1.xpose.msra.mxu0 0.0
  %734 = vmatprep.subr.mxu0 0.0
  %735 = vmatpush1.xpose.msra.mxu0 0.0
  %736 = vmatprep.subr.mxu0 0.0
  %737 = vmatpush1.xpose.msra.mxu0 0.0
  %738 = vmatprep.subr.mxu0 0.0
  %739 = vmatpush1.xpose.msra.mxu0 0.0
  %740 = vmatprep.subr.mxu0 0.0
  %741 = vmatpush1.xpose.msra.mxu0 0.0
  %742 = vmatprep.subr.mxu0 0.0
  %743 = vmatpush1.xpose.msra.mxu0 0.0
  %744 = vmatprep.subr.mxu0 0.0
  %745 = vmatpush1.xpose.msra.mxu0 %v714
  %746 = vmatprep.subr.mxu0 0.0
  %747 = vmatpush1.xpose.msra.mxu0 %v712
  %748 = vmatprep.subr.mxu0 0.0
  %749 = vmatpush2.xpose.msra.mxu0 0.0
  %750 = vmatprep.subr.mxu0 0.0
  %751 = vmatpush2.xpose.msra.mxu0 0.0
  %752 = vmatprep.subr.mxu0 0.0
  %753 = vmatpush2.xpose.msra.mxu0 0.0
  %754 = vmatprep.subr.mxu0 0.0
  %755 = vmatpush2.xpose.msra.mxu0 0.0
  %756 = vmatprep.subr.mxu0 0.0
  %757 = vmatpush2.xpose.msra.mxu0 0.0
  %758 = vmatprep.subr.mxu0 0.0
  %759 = vmatpush2.xpose.msra.mxu0 0.0
  %760 = vmatprep.subr.mxu0 0.0
  %761 = vmatpush2.xpose.msra.mxu0 0.0
  %762 = vmatprep.subr.mxu0 0.0
  %763 = vmatpush2.xpose.msra.mxu0 0.0
  %764 = vmatprep.subr.mxu0 0.0
  %765 = vmatpush2.xpose.msra.mxu0 0.0
  %766 = vmatprep.subr.mxu0 0.0
  %767 = vmatpush2.xpose.msra.mxu0 0.0
  %768 = vmatprep.subr.mxu0 0.0
  %769 = vmatpush2.xpose.msra.mxu0 0.0
  %770 = vmatprep.subr.mxu0 0.0
  %771 = vmatpush2.xpose.msra.mxu0 0.0
  %772 = vmatprep.subr.mxu0 0.0
  %773 = vmatpush2.xpose.msra.mxu0 0.0
  %774 = vmatprep.subr.mxu0 0.0
  %775 = vmatpush2.xpose.msra.mxu0 0.0
  %776 = vmatprep.subr.mxu0 0.0
  %777 = vmatpush2.xpose.msra.mxu0 0.0
  %778 = vmatprep.subr.mxu0 0.0
  %779 = vmatpush2.xpose.msra.mxu0 0.0
  %780 = vmatprep.mubr.f32.mxu0 0.0
  %781 = vmatmul.mubr.f32.gmra.mxu0 %v708
  %v782 = vpop.f32.mrf.mxu0
  %v783 = vadd.f32 %v43, %v782
  %v784 = vpop.f32.mrf.mxu0
  %785 = vmatprep.mubr.f32.mxu0 0.0
  %786 = vmatmul.mubr.f32.gmra.mxu0 %v710
  %v787 = vpop.f32.mrf.mxu0
  %v788 = vadd.f32 %v44, %v787
  %v789 = vpop.f32.mrf.mxu0
  %790 = vdwg.mxu0
  %v791 = vsel %vm226, %v783, -inf
  %792 = vmax.xlane.f32.xlu0 %v791
  %v793 = vpop.xlane.xlu0 %792
  %v794 = vsel %vm226, %v788, -inf
  %795 = vmax.xlane.f32.xlu0 %v794
  %v796 = vpop.xlane.xlu0 %795
  %v797 = vsub.f32 %v783, %v793
  %v798 = vsub.f32 %v788, %v796
  %v799 = vmul.f32 %v797, 1.442695
  %v800 = vpow.pop %v799
  %v801 = vmul.f32 %v798, 1.442695
  %v802 = vpow.pop %v801
  %v803 = vsel %vm226, %v800, 0.0
  %804 = vadd.xlane.f32.xlu0 %v803
  %v805 = vpop.xlane.xlu0 %804
  %v806 = vsel %vm226, %v802, 0.0
  %807 = vadd.xlane.f32.xlu0 %v806
  %v808 = vpop.xlane.xlu0 %807
  %v809 = vrcp.pop %v805
  %v810 = vmul.f32 %v800, %v809
  %v811 = vrcp.pop %v808
  %v812 = vmul.f32 %v802, %v811
  %813 = vrot.lane.b32.xlu0 %v128, 48
  %v814 = vpop.permute.xlu0 %813
  %815 = vrot.lane.b32.xlu0 %v133, 48
  %v816 = vpop.permute.xlu0 %815
  %v820 = vsel %vm226, %v810, 0
  %v823 = vsel %vm226, %v812, 0
  %825 = vmatprep.subr.mxu0 0.0
  %826 = vmatpush1.msra.mxu0 0.0
  %827 = vmatprep.subr.mxu0 0.0
  %828 = vmatpush1.msra.mxu0 0.0
  %829 = vmatprep.subr.mxu0 0.0
  %830 = vmatpush1.msra.mxu0 0.0
  %831 = vmatprep.subr.mxu0 0.0
  %832 = vmatpush1.msra.mxu0 0.0
  %833 = vmatprep.subr.mxu0 0.0
  %834 = vmatpush1.msra.mxu0 0.0
  %835 = vmatprep.subr.mxu0 0.0
  %836 = vmatpush1.msra.mxu0 0.0
  %837 = vmatprep.subr.mxu0 0.0
  %838 = vmatpush1.msra.mxu0 0.0
  %839 = vmatprep.subr.mxu0 0.0
  %840 = vmatpush1.msra.mxu0 0.0
  %841 = vmatprep.subr.mxu0 0.0
  %842 = vmatpush1.msra.mxu0 0.0
  %843 = vmatprep.subr.mxu0 0.0
  %844 = vmatpush1.msra.mxu0 0.0
  %845 = vmatprep.subr.mxu0 0.0
  %846 = vmatpush1.msra.mxu0 0.0
  %847 = vmatprep.subr.mxu0 0.0
  %848 = vmatpush1.msra.mxu0 0.0
  %849 = vmatprep.subr.mxu0 0.0
  %850 = vmatpush1.msra.mxu0 0.0
  %851 = vmatprep.subr.mxu0 0.0
  %852 = vmatpush1.msra.mxu0 0.0
  %853 = vmatprep.subr.mxu0 0.0
  %854 = vmatpush1.msra.mxu0 %v816
  %855 = vmatprep.subr.mxu0 0.0
  %856 = vmatpush1.msra.mxu0 %v814
  %857 = vmatprep.subr.mxu0 0.0
  %858 = vmatpush2.msra.mxu0 0.0
  %859 = vmatprep.subr.mxu0 0.0
  %860 = vmatpush2.msra.mxu0 0.0
  %861 = vmatprep.subr.mxu0 0.0
  %862 = vmatpush2.msra.mxu0 0.0
  %863 = vmatprep.subr.mxu0 0.0
  %864 = vmatpush2.msra.mxu0 0.0
  %865 = vmatprep.subr.mxu0 0.0
  %866 = vmatpush2.msra.mxu0 0.0
  %867 = vmatprep.subr.mxu0 0.0
  %868 = vmatpush2.msra.mxu0 0.0
  %869 = vmatprep.subr.mxu0 0.0
  %870 = vmatpush2.msra.mxu0 0.0
  %871 = vmatprep.subr.mxu0 0.0
  %872 = vmatpush2.msra.mxu0 0.0
  %873 = vmatprep.subr.mxu0 0.0
  %874 = vmatpush2.msra.mxu0 0.0
  %875 = vmatprep.subr.mxu0 0.0
  %876 = vmatpush2.msra.mxu0 0.0
  %877 = vmatprep.subr.mxu0 0.0
  %878 = vmatpush2.msra.mxu0 0.0
  %879 = vmatprep.subr.mxu0 0.0
  %880 = vmatpush2.msra.mxu0 0.0
  %881 = vmatprep.subr.mxu0 0.0
  %882 = vmatpush2.msra.mxu0 0.0
  %883 = vmatprep.subr.mxu0 0.0
  %884 = vmatpush2.msra.mxu0 0.0
  %885 = vmatprep.subr.mxu0 0.0
  %886 = vmatpush2.msra.mxu0 0.0
  %887 = vmatprep.subr.mxu0 0.0
  %888 = vmatpush2.msra.mxu0 0.0
  %889 = vmatprep.mubr.f32.mxu0 0.0
  %890 = vmatmul.mubr.f32.gmra.mxu0 %v820
  %v891 = vpop.f32.mrf.mxu0
  %v892 = vadd.f32 0.0, %v891
  %v893 = vpop.f32.mrf.mxu0
  %894 = vmatprep.mubr.f32.mxu0 0.0
  %895 = vmatmul.mubr.f32.gmra.mxu0 %v823
  %v896 = vpop.f32.mrf.mxu0
  %v897 = vadd.f32 0.0, %v896
  %v898 = vpop.f32.mrf.mxu0
  %899 = vdwg.mxu0
  %v900 = vld [vmem:[%s1 + $0x30] sm:$0xff]
  %v902 = vsel %vm142, %v892, 0
  %v905 = vsel %vm142, %v897, 0
  %907 = vmatprep.subr.mxu0 0.0
  %908 = vmatpush1.msra.mxu0 0.0
  %909 = vmatprep.subr.mxu0 0.0
  %910 = vmatpush1.msra.mxu0 0.0
  %911 = vmatprep.subr.mxu0 0.0
  %912 = vmatpush1.msra.mxu0 0.0
  %913 = vmatprep.subr.mxu0 0.0
  %914 = vmatpush1.msra.mxu0 0.0
  %915 = vmatprep.subr.mxu0 0.0
  %916 = vmatpush1.msra.mxu0 0.0
  %917 = vmatprep.subr.mxu0 0.0
  %918 = vmatpush1.msra.mxu0 0.0
  %919 = vmatprep.subr.mxu0 0.0
  %920 = vmatpush1.msra.mxu0 0.0
  %921 = vmatprep.subr.mxu0 0.0
  %922 = vmatpush1.msra.mxu0 0.0
  %923 = vmatprep.subr.mxu0 0.0
  %924 = vmatpush1.msra.mxu0 0.0
  %925 = vmatprep.subr.mxu0 0.0
  %926 = vmatpush1.msra.mxu0 0.0
  %927 = vmatprep.subr.mxu0 0.0
  %928 = vmatpush1.msra.mxu0 0.0
  %929 = vmatprep.subr.mxu0 0.0
  %930 = vmatpush1.msra.mxu0 0.0
  %931 = vmatprep.subr.mxu0 0.0
  %932 = vmatpush1.msra.mxu0 0.0
  %933 = vmatprep.subr.mxu0 0.0
  %934 = vmatpush1.msra.mxu0 0.0
  %935 = vmatprep.subr.mxu0 0.0
  %936 = vmatpush1.msra.mxu0 0.0
  %937 = vmatprep.subr.mxu0 0.0
  %938 = vmatpush1.msra.mxu0 %v900
  %939 = vmatprep.subr.mxu0 0.0
  %940 = vmatpush2.msra.mxu0 0.0
  %941 = vmatprep.subr.mxu0 0.0
  %942 = vmatpush2.msra.mxu0 0.0
  %943 = vmatprep.subr.mxu0 0.0
  %944 = vmatpush2.msra.mxu0 0.0
  %945 = vmatprep.subr.mxu0 0.0
  %946 = vmatpush2.msra.mxu0 0.0
  %947 = vmatprep.subr.mxu0 0.0
  %948 = vmatpush2.msra.mxu0 0.0
  %949 = vmatprep.subr.mxu0 0.0
  %950 = vmatpush2.msra.mxu0 0.0
  %951 = vmatprep.subr.mxu0 0.0
  %952 = vmatpush2.msra.mxu0 0.0
  %953 = vmatprep.subr.mxu0 0.0
  %954 = vmatpush2.msra.mxu0 0.0
  %955 = vmatprep.subr.mxu0 0.0
  %956 = vmatpush2.msra.mxu0 0.0
  %957 = vmatprep.subr.mxu0 0.0
  %958 = vmatpush2.msra.mxu0 0.0
  %959 = vmatprep.subr.mxu0 0.0
  %960 = vmatpush2.msra.mxu0 0.0
  %961 = vmatprep.subr.mxu0 0.0
  %962 = vmatpush2.msra.mxu0 0.0
  %963 = vmatprep.subr.mxu0 0.0
  %964 = vmatpush2.msra.mxu0 0.0
  %965 = vmatprep.subr.mxu0 0.0
  %966 = vmatpush2.msra.mxu0 0.0
  %967 = vmatprep.subr.mxu0 0.0
  %968 = vmatpush2.msra.mxu0 0.0
  %969 = vmatprep.subr.mxu0 0.0
  %970 = vmatpush2.msra.mxu0 0.0
  %971 = vmatprep.mubr.f32.mxu0 0.0
  %972 = vmatmul.mubr.f32.gmra.mxu0 %v902
  %v973 = vpop.f32.mrf.mxu0
  %v974 = vadd.f32 0.0, %v973
  %v975 = vpop.f32.mrf.mxu0
  %976 = vmatprep.mubr.f32.mxu0 0.0
  %977 = vmatmul.mubr.f32.gmra.mxu0 %v905
  %v978 = vpop.f32.mrf.mxu0
  %v979 = vadd.f32 0.0, %v978
  %v980 = vpop.f32.mrf.mxu0
  %981 = vdwg.mxu0
  %v982 = vadd.f32 %v692, %v974
  %v983 = vadd.f32 %v697, %v979
  %984 = vrot.lane.b32.xlu0 %v128, 104
  %v985 = vpop.permute.xlu0 %984
  %986 = vrot.lane.b32.xlu0 %v133, 104
  %v987 = vpop.permute.xlu0 %986
  %988 = vrot.lane.b32.xlu0 %v128, 72
  %v989 = vpop.permute.xlu0 %988
  %990 = vrot.lane.b32.xlu0 %v133, 72
  %v991 = vpop.permute.xlu0 %990
  %v992 = vsel %vm142, %v985, 0
  %v994 = vsel %vm142, %v987, 0
  %v996 = vsel %vm142, %v989, 0
  %v998 = vsel %vm142, %v991, 0
  %1000 = vmatprep.subr.mxu0 0.0
  %1001 = vmatpush1.xpose.msra.mxu0 0.0
  %1002 = vmatprep.subr.mxu0 0.0
  %1003 = vmatpush1.xpose.msra.mxu0 0.0
  %1004 = vmatprep.subr.mxu0 0.0
  %1005 = vmatpush1.xpose.msra.mxu0 0.0
  %1006 = vmatprep.subr.mxu0 0.0
  %1007 = vmatpush1.xpose.msra.mxu0 0.0
  %1008 = vmatprep.subr.mxu0 0.0
  %1009 = vmatpush1.xpose.msra.mxu0 0.0
  %1010 = vmatprep.subr.mxu0 0.0
  %1011 = vmatpush1.xpose.msra.mxu0 0.0
  %1012 = vmatprep.subr.mxu0 0.0
  %1013 = vmatpush1.xpose.msra.mxu0 0.0
  %1014 = vmatprep.subr.mxu0 0.0
  %1015 = vmatpush1.xpose.msra.mxu0 0.0
  %1016 = vmatprep.subr.mxu0 0.0
  %1017 = vmatpush1.xpose.msra.mxu0 0.0
  %1018 = vmatprep.subr.mxu0 0.0
  %1019 = vmatpush1.xpose.msra.mxu0 0.0
  %1020 = vmatprep.subr.mxu0 0.0
  %1021 = vmatpush1.xpose.msra.mxu0 0.0
  %1022 = vmatprep.subr.mxu0 0.0
  %1023 = vmatpush1.xpose.msra.mxu0 0.0
  %1024 = vmatprep.subr.mxu0 0.0
  %1025 = vmatpush1.xpose.msra.mxu0 0.0
  %1026 = vmatprep.subr.mxu0 0.0
  %1027 = vmatpush1.xpose.msra.mxu0 0.0
  %1028 = vmatprep.subr.mxu0 0.0
  %1029 = vmatpush1.xpose.msra.mxu0 %v998
  %1030 = vmatprep.subr.mxu0 0.0
  %1031 = vmatpush1.xpose.msra.mxu0 %v996
  %1032 = vmatprep.subr.mxu0 0.0
  %1033 = vmatpush2.xpose.msra.mxu0 0.0
  %1034 = vmatprep.subr.mxu0 0.0
  %1035 = vmatpush2.xpose.msra.mxu0 0.0
  %1036 = vmatprep.subr.mxu0 0.0
  %1037 = vmatpush2.xpose.msra.mxu0 0.0
  %1038 = vmatprep.subr.mxu0 0.0
  %1039 = vmatpush2.xpose.msra.mxu0 0.0
  %1040 = vmatprep.subr.mxu0 0.0
  %1041 = vmatpush2.xpose.msra.mxu0 0.0
  %1042 = vmatprep.subr.mxu0 0.0
  %1043 = vmatpush2.xpose.msra.mxu0 0.0
  %1044 = vmatprep.subr.mxu0 0.0
  %1045 = vmatpush2.xpose.msra.mxu0 0.0
  %1046 = vmatprep.subr.mxu0 0.0
  %1047 = vmatpush2.xpose.msra.mxu0 0.0
  %1048 = vmatprep.subr.mxu0 0.0
  %1049 = vmatpush2.xpose.msra.mxu0 0.0
  %1050 = vmatprep.subr.mxu0 0.0
  %1051 = vmatpush2.xpose.msra.mxu0 0.0
  %1052 = vmatprep.subr.mxu0 0.0
  %1053 = vmatpush2.xpose.msra.mxu0 0.0
  %1054 = vmatprep.subr.mxu0 0.0
  %1055 = vmatpush2.xpose.msra.mxu0 0.0
  %1056 = vmatprep.subr.mxu0 0.0
  %1057 = vmatpush2.xpose.msra.mxu0 0.0
  %1058 = vmatprep.subr.mxu0 0.0
  %1059 = vmatpush2.xpose.msra.mxu0 0.0
  %1060 = vmatprep.subr.mxu0 0.0
  %1061 = vmatpush2.xpose.msra.mxu0 0.0
  %1062 = vmatprep.subr.mxu0 0.0
  %1063 = vmatpush2.xpose.msra.mxu0 0.0
  %1064 = vmatprep.mubr.f32.mxu0 0.0
  %1065 = vmatmul.mubr.f32.gmra.mxu0 %v992
  %v1066 = vpop.f32.mrf.mxu0
  %v1067 = vadd.f32 %v43, %v1066
  %v1068 = vpop.f32.mrf.mxu0
  %1069 = vmatprep.mubr.f32.mxu0 0.0
  %1070 = vmatmul.mubr.f32.gmra.mxu0 %v994
  %v1071 = vpop.f32.mrf.mxu0
  %v1072 = vadd.f32 %v44, %v1071
  %v1073 = vpop.f32.mrf.mxu0
  %1074 = vdwg.mxu0
  %v1075 = vsel %vm226, %v1067, -inf
  %1076 = vmax.xlane.f32.xlu0 %v1075
  %v1077 = vpop.xlane.xlu0 %1076
  %v1078 = vsel %vm226, %v1072, -inf
  %1079 = vmax.xlane.f32.xlu0 %v1078
  %v1080 = vpop.xlane.xlu0 %1079
  %v1081 = vsub.f32 %v1067, %v1077
  %v1082 = vsub.f32 %v1072, %v1080
  %v1083 = vmul.f32 %v1081, 1.442695
  %v1084 = vpow.pop %v1083
  %v1085 = vmul.f32 %v1082, 1.442695
  %v1086 = vpow.pop %v1085
  %v1087 = vsel %vm226, %v1084, 0.0
  %1088 = vadd.xlane.f32.xlu0 %v1087
  %v1089 = vpop.xlane.xlu0 %1088
  %v1090 = vsel %vm226, %v1086, 0.0
  %1091 = vadd.xlane.f32.xlu0 %v1090
  %v1092 = vpop.xlane.xlu0 %1091
  %v1093 = vrcp.pop %v1089
  %v1094 = vmul.f32 %v1084, %v1093
  %v1095 = vrcp.pop %v1092
  %v1096 = vmul.f32 %v1086, %v1095
  %1097 = vrot.lane.b32.xlu0 %v128, 40
  %v1098 = vpop.permute.xlu0 %1097
  %1099 = vrot.lane.b32.xlu0 %v133, 40
  %v1100 = vpop.permute.xlu0 %1099
  %v1104 = vsel %vm226, %v1094, 0
  %v1107 = vsel %vm226, %v1096, 0
  %1109 = vmatprep.subr.mxu0 0.0
  %1110 = vmatpush1.msra.mxu0 0.0
  %1111 = vmatprep.subr.mxu0 0.0
  %1112 = vmatpush1.msra.mxu0 0.0
  %1113 = vmatprep.subr.mxu0 0.0
  %1114 = vmatpush1.msra.mxu0 0.0
  %1115 = vmatprep.subr.mxu0 0.0
  %1116 = vmatpush1.msra.mxu0 0.0
  %1117 = vmatprep.subr.mxu0 0.0
  %1118 = vmatpush1.msra.mxu0 0.0
  %1119 = vmatprep.subr.mxu0 0.0
  %1120 = vmatpush1.msra.mxu0 0.0
  %1121 = vmatprep.subr.mxu0 0.0
  %1122 = vmatpush1.msra.mxu0 0.0
  %1123 = vmatprep.subr.mxu0 0.0
  %1124 = vmatpush1.msra.mxu0 0.0
  %1125 = vmatprep.subr.mxu0 0.0
  %1126 = vmatpush1.msra.mxu0 0.0
  %1127 = vmatprep.subr.mxu0 0.0
  %1128 = vmatpush1.msra.mxu0 0.0
  %1129 = vmatprep.subr.mxu0 0.0
  %1130 = vmatpush1.msra.mxu0 0.0
  %1131 = vmatprep.subr.mxu0 0.0
  %1132 = vmatpush1.msra.mxu0 0.0
  %1133 = vmatprep.subr.mxu0 0.0
  %1134 = vmatpush1.msra.mxu0 0.0
  %1135 = vmatprep.subr.mxu0 0.0
  %1136 = vmatpush1.msra.mxu0 0.0
  %1137 = vmatprep.subr.mxu0 0.0
  %1138 = vmatpush1.msra.mxu0 %v1100
  %1139 = vmatprep.subr.mxu0 0.0
  %1140 = vmatpush1.msra.mxu0 %v1098
  %1141 = vmatprep.subr.mxu0 0.0
  %1142 = vmatpush2.msra.mxu0 0.0
  %1143 = vmatprep.subr.mxu0 0.0
  %1144 = vmatpush2.msra.mxu0 0.0
  %1145 = vmatprep.subr.mxu0 0.0
  %1146 = vmatpush2.msra.mxu0 0.0
  %1147 = vmatprep.subr.mxu0 0.0
  %1148 = vmatpush2.msra.mxu0 0.0
  %1149 = vmatprep.subr.mxu0 0.0
  %1150 = vmatpush2.msra.mxu0 0.0
  %1151 = vmatprep.subr.mxu0 0.0
  %1152 = vmatpush2.msra.mxu0 0.0
  %1153 = vmatprep.subr.mxu0 0.0
  %1154 = vmatpush2.msra.mxu0 0.0
  %1155 = vmatprep.subr.mxu0 0.0
  %1156 = vmatpush2.msra.mxu0 0.0
  %1157 = vmatprep.subr.mxu0 0.0
  %1158 = vmatpush2.msra.mxu0 0.0
  %1159 = vmatprep.subr.mxu0 0.0
  %1160 = vmatpush2.msra.mxu0 0.0
  %1161 = vmatprep.subr.mxu0 0.0
  %1162 = vmatpush2.msra.mxu0 0.0
  %1163 = vmatprep.subr.mxu0 0.0
  %1164 = vmatpush2.msra.mxu0 0.0
  %1165 = vmatprep.subr.mxu0 0.0
  %1166 = vmatpush2.msra.mxu0 0.0
  %1167 = vmatprep.subr.mxu0 0.0
  %1168 = vmatpush2.msra.mxu0 0.0
  %1169 = vmatprep.subr.mxu0 0.0
  %1170 = vmatpush2.msra.mxu0 0.0
  %1171 = vmatprep.subr.mxu0 0.0
  %1172 = vmatpush2.msra.mxu0 0.0
  %1173 = vmatprep.mubr.f32.mxu0 0.0
  %1174 = vmatmul.mubr.f32.gmra.mxu0 %v1104
  %v1175 = vpop.f32.mrf.mxu0
  %v1176 = vadd.f32 0.0, %v1175
  %v1177 = vpop.f32.mrf.mxu0
  %1178 = vmatprep.mubr.f32.mxu0 0.0
  %1179 = vmatmul.mubr.f32.gmra.mxu0 %v1107
  %v1180 = vpop.f32.mrf.mxu0
  %v1181 = vadd.f32 0.0, %v1180
  %v1182 = vpop.f32.mrf.mxu0
  %1183 = vdwg.mxu0
  %v1184 = vld [vmem:[%s1 + $0x38] sm:$0xff]
  %v1186 = vsel %vm142, %v1176, 0
  %v1189 = vsel %vm142, %v1181, 0
  %1191 = vmatprep.subr.mxu0 0.0
  %1192 = vmatpush1.msra.mxu0 0.0
  %1193 = vmatprep.subr.mxu0 0.0
  %1194 = vmatpush1.msra.mxu0 0.0
  %1195 = vmatprep.subr.mxu0 0.0
  %1196 = vmatpush1.msra.mxu0 0.0
  %1197 = vmatprep.subr.mxu0 0.0
  %1198 = vmatpush1.msra.mxu0 0.0
  %1199 = vmatprep.subr.mxu0 0.0
  %1200 = vmatpush1.msra.mxu0 0.0
  %1201 = vmatprep.subr.mxu0 0.0
  %1202 = vmatpush1.msra.mxu0 0.0
  %1203 = vmatprep.subr.mxu0 0.0
  %1204 = vmatpush1.msra.mxu0 0.0
  %1205 = vmatprep.subr.mxu0 0.0
  %1206 = vmatpush1.msra.mxu0 0.0
  %1207 = vmatprep.subr.mxu0 0.0
  %1208 = vmatpush1.msra.mxu0 0.0
  %1209 = vmatprep.subr.mxu0 0.0
  %1210 = vmatpush1.msra.mxu0 0.0
  %1211 = vmatprep.subr.mxu0 0.0
  %1212 = vmatpush1.msra.mxu0 0.0
  %1213 = vmatprep.subr.mxu0 0.0
  %1214 = vmatpush1.msra.mxu0 0.0
  %1215 = vmatprep.subr.mxu0 0.0
  %1216 = vmatpush1.msra.mxu0 0.0
  %1217 = vmatprep.subr.mxu0 0.0
  %1218 = vmatpush1.msra.mxu0 0.0
  %1219 = vmatprep.subr.mxu0 0.0
  %1220 = vmatpush1.msra.mxu0 0.0
  %1221 = vmatprep.subr.mxu0 0.0
  %1222 = vmatpush1.msra.mxu0 %v1184
  %1223 = vmatprep.subr.mxu0 0.0
  %1224 = vmatpush2.msra.mxu0 0.0
  %1225 = vmatprep.subr.mxu0 0.0
  %1226 = vmatpush2.msra.mxu0 0.0
  %1227 = vmatprep.subr.mxu0 0.0
  %1228 = vmatpush2.msra.mxu0 0.0
  %1229 = vmatprep.subr.mxu0 0.0
  %1230 = vmatpush2.msra.mxu0 0.0
  %1231 = vmatprep.subr.mxu0 0.0
  %1232 = vmatpush2.msra.mxu0 0.0
  %1233 = vmatprep.subr.mxu0 0.0
  %1234 = vmatpush2.msra.mxu0 0.0
  %1235 = vmatprep.subr.mxu0 0.0
  %1236 = vmatpush2.msra.mxu0 0.0
  %1237 = vmatprep.subr.mxu0 0.0
  %1238 = vmatpush2.msra.mxu0 0.0
  %1239 = vmatprep.subr.mxu0 0.0
  %1240 = vmatpush2.msra.mxu0 0.0
  %1241 = vmatprep.subr.mxu0 0.0
  %1242 = vmatpush2.msra.mxu0 0.0
  %1243 = vmatprep.subr.mxu0 0.0
  %1244 = vmatpush2.msra.mxu0 0.0
  %1245 = vmatprep.subr.mxu0 0.0
  %1246 = vmatpush2.msra.mxu0 0.0
  %1247 = vmatprep.subr.mxu0 0.0
  %1248 = vmatpush2.msra.mxu0 0.0
  %1249 = vmatprep.subr.mxu0 0.0
  %1250 = vmatpush2.msra.mxu0 0.0
  %1251 = vmatprep.subr.mxu0 0.0
  %1252 = vmatpush2.msra.mxu0 0.0
  %1253 = vmatprep.subr.mxu0 0.0
  %1254 = vmatpush2.msra.mxu0 0.0
  %1255 = vmatprep.mubr.f32.mxu0 0.0
  %1256 = vmatmul.mubr.f32.gmra.mxu0 %v1186
  %v1257 = vpop.f32.mrf.mxu0
  %v1258 = vadd.f32 0.0, %v1257
  %v1259 = vpop.f32.mrf.mxu0
  %1260 = vmatprep.mubr.f32.mxu0 0.0
  %1261 = vmatmul.mubr.f32.gmra.mxu0 %v1189
  %v1262 = vpop.f32.mrf.mxu0
  %v1263 = vadd.f32 0.0, %v1262
  %v1264 = vpop.f32.mrf.mxu0
  %1265 = vdwg.mxu0
  %v1266 = vadd.f32 %v982, %v1258
  %v1267 = vadd.f32 %v983, %v1263
  %v1268 = vld [vmem:[%s1 + $0xe1] sm:$0x1]
  %v1269 = vlaneseq
  %v1270 = vshrl.u32 %v1269, 7
  %v1271 = vsub.s32 0, %v1270
  %v1272 = vrot.slane %v1268, %v1271
  %v1273 = vadd.f32 %v1266, %v1272
  %v1274 = vadd.f32 %v1267, %v1272
  %v1275 = vadd.f32 %v11, %v1273
  %v1276 = vadd.f32 %v12, %v1274
  %v1277 = vld [vmem:[%s1 + $0xe2] sm:$0x1]
  %v1278 = vld [vmem:[%s1 + $0xe3] sm:$0x1]
  %v1279 = vsel %vm54, %v1275, 0.0
  %1280 = vadd.xlane.f32.xlu0 %v1279
  %v1281 = vpop.xlane.xlu0 %1280
  %v1282 = vsel %vm54, %v1276, 0.0
  %1283 = vadd.xlane.f32.xlu0 %v1282
  %v1284 = vpop.xlane.xlu0 %1283
  %v1285 = vrcp.pop 32.0
  %v1286 = vmul.f32 %v1281, %v1285
  %v1287 = vmul.f32 %v1284, %v1285
  %v1288 = vsub.f32 %v1275, %v1286
  %v1289 = vsub.f32 %v1276, %v1287
  %v1290 = vmul.f32 %v1288, %v1288
  %v1291 = vmul.f32 %v1289, %v1289
  %v1292 = vsel %vm54, %v1290, 0.0
  %1293 = vadd.xlane.f32.xlu0 %v1292
  %v1294 = vpop.xlane.xlu0 %1293
  %v1295 = vsel %vm54, %v1291, 0.0
  %1296 = vadd.xlane.f32.xlu0 %v1295
  %v1297 = vpop.xlane.xlu0 %1296
  %v1298 = vmul.f32 %v1294, %v1285
  %v1299 = vmul.f32 %v1297, %v1285
  %v1300 = vadd.f32 %v1298, 1e-12
  %v1301 = vadd.f32 %v1299, 1e-12
  %v1302 = vrsqrt.pop %v1300
  %v1303 = vrsqrt.pop %v1301
  %v1304 = vmul.f32 %v1288, %v1302
  %v1305 = vmul.f32 %v1289, %v1303
  %v1306 = vlaneseq
  %v1307 = vshrl.u32 %v1306, 7
  %v1308 = vsub.s32 0, %v1307
  %v1309 = vrot.slane %v1277, %v1308
  %v1310 = vmul.f32 %v1304, %v1309
  %v1311 = vmul.f32 %v1305, %v1309
  %v1312 = vlaneseq
  %v1313 = vshrl.u32 %v1312, 7
  %v1314 = vsub.s32 0, %v1313
  %v1315 = vrot.slane %v1278, %v1314
  %v1316 = vadd.f32 %v1310, %v1315
  %v1317 = vadd.f32 %v1311, %v1315
  %v1318 = vld [vmem:[%s1 + $0x40] sm:$0xff]
  %v1319 = vld [vmem:[%s1 + $0x48] sm:$0xff]
  %v1320 = vld [vmem:[%s1 + $0x50] sm:$0xff]
  %v1321 = vld [vmem:[%s1 + $0x58] sm:$0xff]
  %v1322 = vld [vmem:[%s1 + $0xe4] sm:$0x1]
  %v1323 = vlaneseq
  %v1324 = vshrl.u32 %v1323, 7
  %v1325 = vsub.s32 0, %v1324
  %v1326 = vrot.slane %v1322, %v1325
  %v1328 = vsel %vm54, %v1316, 0
  %v1331 = vsel %vm54, %v1317, 0
  %1333 = vmatprep.subr.mxu0 0.0
  %1334 = vmatpush1.msra.mxu0 0.0
  %1335 = vmatprep.subr.mxu0 0.0
  %1336 = vmatpush1.msra.mxu0 0.0
  %1337 = vmatprep.subr.mxu0 0.0
  %1338 = vmatpush1.msra.mxu0 0.0
  %1339 = vmatprep.subr.mxu0 0.0
  %1340 = vmatpush1.msra.mxu0 0.0
  %1341 = vmatprep.subr.mxu0 0.0
  %1342 = vmatpush1.msra.mxu0 0.0
  %1343 = vmatprep.subr.mxu0 0.0
  %1344 = vmatpush1.msra.mxu0 0.0
  %1345 = vmatprep.subr.mxu0 0.0
  %1346 = vmatpush1.msra.mxu0 0.0
  %1347 = vmatprep.subr.mxu0 0.0
  %1348 = vmatpush1.msra.mxu0 0.0
  %1349 = vmatprep.subr.mxu0 0.0
  %1350 = vmatpush1.msra.mxu0 0.0
  %1351 = vmatprep.subr.mxu0 0.0
  %1352 = vmatpush1.msra.mxu0 0.0
  %1353 = vmatprep.subr.mxu0 0.0
  %1354 = vmatpush1.msra.mxu0 0.0
  %1355 = vmatprep.subr.mxu0 0.0
  %1356 = vmatpush1.msra.mxu0 0.0
  %1357 = vmatprep.subr.mxu0 0.0
  %1358 = vmatpush1.msra.mxu0 %v1321
  %1359 = vmatprep.subr.mxu0 0.0
  %1360 = vmatpush1.msra.mxu0 %v1320
  %1361 = vmatprep.subr.mxu0 0.0
  %1362 = vmatpush1.msra.mxu0 %v1319
  %1363 = vmatprep.subr.mxu0 0.0
  %1364 = vmatpush1.msra.mxu0 %v1318
  %1365 = vmatprep.subr.mxu0 0.0
  %1366 = vmatpush2.msra.mxu0 0.0
  %1367 = vmatprep.subr.mxu0 0.0
  %1368 = vmatpush2.msra.mxu0 0.0
  %1369 = vmatprep.subr.mxu0 0.0
  %1370 = vmatpush2.msra.mxu0 0.0
  %1371 = vmatprep.subr.mxu0 0.0
  %1372 = vmatpush2.msra.mxu0 0.0
  %1373 = vmatprep.subr.mxu0 0.0
  %1374 = vmatpush2.msra.mxu0 0.0
  %1375 = vmatprep.subr.mxu0 0.0
  %1376 = vmatpush2.msra.mxu0 0.0
  %1377 = vmatprep.subr.mxu0 0.0
  %1378 = vmatpush2.msra.mxu0 0.0
  %1379 = vmatprep.subr.mxu0 0.0
  %1380 = vmatpush2.msra.mxu0 0.0
  %1381 = vmatprep.subr.mxu0 0.0
  %1382 = vmatpush2.msra.mxu0 0.0
  %1383 = vmatprep.subr.mxu0 0.0
  %1384 = vmatpush2.msra.mxu0 0.0
  %1385 = vmatprep.subr.mxu0 0.0
  %1386 = vmatpush2.msra.mxu0 0.0
  %1387 = vmatprep.subr.mxu0 0.0
  %1388 = vmatpush2.msra.mxu0 0.0
  %1389 = vmatprep.subr.mxu0 0.0
  %1390 = vmatpush2.msra.mxu0 0.0
  %1391 = vmatprep.subr.mxu0 0.0
  %1392 = vmatpush2.msra.mxu0 0.0
  %1393 = vmatprep.subr.mxu0 0.0
  %1394 = vmatpush2.msra.mxu0 0.0
  %1395 = vmatprep.subr.mxu0 0.0
  %1396 = vmatpush2.msra.mxu0 0.0
  %1397 = vmatprep.mubr.f32.mxu0 0.0
  %1398 = vmatmul.mubr.f32.gmra.mxu0 %v1328
  %v1399 = vpop.f32.mrf.mxu0
  %v1400 = vadd.f32 %v1326, %v1399
  %v1401 = vpop.f32.mrf.mxu0
  %1402 = vmatprep.mubr.f32.mxu0 0.0
  %1403 = vmatmul.mubr.f32.gmra.mxu0 %v1331
  %v1404 = vpop.f32.mrf.mxu0
  %v1405 = vadd.f32 %v1326, %v1404
  %v1406 = vpop.f32.mrf.mxu0
  %1407 = vdwg.mxu0
  %v1408 = vmul.f32 %v1400, 0.5
  %v1409 = vmul.f32 %v1405, 0.5
  %v1410 = vmul.f32 %v1400, 0.044715
  %v1411 = vmul.f32 %v1405, 0.044715
  %v1412 = vmul.f32 %v1410, %v1400
  %v1413 = vmul.f32 %v1411, %v1405
  %v1414 = vmul.f32 %v1412, %v1400
  %v1415 = vmul.f32 %v1413, %v1405
  %v1416 = vadd.f32 %v1400, %v1414
  %v1417 = vadd.f32 %v1405, %v1415
  %v1418 = vmul.f32 %v1416, 0.7978846
  %v1419 = vmul.f32 %v1417, 0.7978846
  %v1420 = vtanh.pop %v1418
  %v1421 = vtanh.pop %v1419
  %v1422 = vadd.f32 %v1420, 1.0
  %v1423 = vadd.f32 %v1421, 1.0
  %v1424 = vmul.f32 %v1408, %v1422
  %v1425 = vmul.f32 %v1409, %v1423
  %v1426 = vld [vmem:[%s1 + $0x60] sm:$0xff]
  %v1427 = vld [vmem:[%s1 + $0x68] sm:$0xff]
  %v1428 = vld [vmem:[%s1 + $0x70] sm:$0xff]
  %v1429 = vld [vmem:[%s1 + $0x78] sm:$0xff]
  %v1430 = vld [vmem:[%s1 + $0x80] sm:$0xff]
  %v1431 = vld [vmem:[%s1 + $0x88] sm:$0xff]
  %v1432 = vld [vmem:[%s1 + $0x90] sm:$0xff]
  %v1433 = vld [vmem:[%s1 + $0x98] sm:$0xff]
  %v1434 = vld [vmem:[%s1 + $0xa0] sm:$0xff]
  %v1435 = vld [vmem:[%s1 + $0xa8] sm:$0xff]
  %v1436 = vld [vmem:[%s1 + $0xb0] sm:$0xff]
  %v1437 = vld [vmem:[%s1 + $0xb8] sm:$0xff]
  %v1438 = vld [vmem:[%s1 + $0xc0] sm:$0xff]
  %v1439 = vld [vmem:[%s1 + $0xc8] sm:$0xff]
  %v1440 = vld [vmem:[%s1 + $0xd0] sm:$0xff]
  %v1441 = vld [vmem:[%s1 + $0xd8] sm:$0xff]
  %v1442 = vld [vmem:[%s1 + $0xe5] sm:$0x1]
  %v1443 = vlaneseq
  %v1444 = vshrl.u32 %v1443, 7
  %v1445 = vsub.s32 0, %v1444
  %v1446 = vrot.slane %v1442, %v1445
  %1447 = vmatprep.subr.mxu0 0.0
  %1448 = vmatpush1.msra.mxu0 %v1441
  %1449 = vmatprep.subr.mxu0 0.0
  %1450 = vmatpush1.msra.mxu0 %v1440
  %1451 = vmatprep.subr.mxu0 0.0
  %1452 = vmatpush1.msra.mxu0 %v1439
  %1453 = vmatprep.subr.mxu0 0.0
  %1454 = vmatpush1.msra.mxu0 %v1438
  %1455 = vmatprep.subr.mxu0 0.0
  %1456 = vmatpush1.msra.mxu0 %v1437
  %1457 = vmatprep.subr.mxu0 0.0
  %1458 = vmatpush1.msra.mxu0 %v1436
  %1459 = vmatprep.subr.mxu0 0.0
  %1460 = vmatpush1.msra.mxu0 %v1435
  %1461 = vmatprep.subr.mxu0 0.0
  %1462 = vmatpush1.msra.mxu0 %v1434
  %1463 = vmatprep.subr.mxu0 0.0
  %1464 = vmatpush1.msra.mxu0 %v1433
  %1465 = vmatprep.subr.mxu0 0.0
  %1466 = vmatpush1.msra.mxu0 %v1432
  %1467 = vmatprep.subr.mxu0 0.0
  %1468 = vmatpush1.msra.mxu0 %v1431
  %1469 = vmatprep.subr.mxu0 0.0
  %1470 = vmatpush1.msra.mxu0 %v1430
  %1471 = vmatprep.subr.mxu0 0.0
  %1472 = vmatpush1.msra.mxu0 %v1429
  %1473 = vmatprep.subr.mxu0 0.0
  %1474 = vmatpush1.msra.mxu0 %v1428
  %1475 = vmatprep.subr.mxu0 0.0
  %1476 = vmatpush1.msra.mxu0 %v1427
  %1477 = vmatprep.subr.mxu0 0.0
  %1478 = vmatpush1.msra.mxu0 %v1426
  %1479 = vmatprep.subr.mxu0 0.0
  %1480 = vmatpush2.msra.mxu0 0.0
  %1481 = vmatprep.subr.mxu0 0.0
  %1482 = vmatpush2.msra.mxu0 0.0
  %1483 = vmatprep.subr.mxu0 0.0
  %1484 = vmatpush2.msra.mxu0 0.0
  %1485 = vmatprep.subr.mxu0 0.0
  %1486 = vmatpush2.msra.mxu0 0.0
  %1487 = vmatprep.subr.mxu0 0.0
  %1488 = vmatpush2.msra.mxu0 0.0
  %1489 = vmatprep.subr.mxu0 0.0
  %1490 = vmatpush2.msra.mxu0 0.0
  %1491 = vmatprep.subr.mxu0 0.0
  %1492 = vmatpush2.msra.mxu0 0.0
  %1493 = vmatprep.subr.mxu0 0.0
  %1494 = vmatpush2.msra.mxu0 0.0
  %1495 = vmatprep.subr.mxu0 0.0
  %1496 = vmatpush2.msra.mxu0 0.0
  %1497 = vmatprep.subr.mxu0 0.0
  %1498 = vmatpush2.msra.mxu0 0.0
  %1499 = vmatprep.subr.mxu0 0.0
  %1500 = vmatpush2.msra.mxu0 0.0
  %1501 = vmatprep.subr.mxu0 0.0
  %1502 = vmatpush2.msra.mxu0 0.0
  %1503 = vmatprep.subr.mxu0 0.0
  %1504 = vmatpush2.msra.mxu0 0.0
  %1505 = vmatprep.subr.mxu0 0.0
  %1506 = vmatpush2.msra.mxu0 0.0
  %1507 = vmatprep.subr.mxu0 0.0
  %1508 = vmatpush2.msra.mxu0 0.0
  %1509 = vmatprep.subr.mxu0 0.0
  %1510 = vmatpush2.msra.mxu0 0.0
  %1511 = vmatprep.mubr.f32.mxu0 0.0
  %1512 = vmatmul.mubr.f32.gmra.mxu0 %v1424
  %v1513 = vpop.f32.mrf.mxu0
  %v1514 = vadd.f32 %v1446, %v1513
  %v1515 = vpop.f32.mrf.mxu0
  %1516 = vmatprep.mubr.f32.mxu0 0.0
  %1517 = vmatmul.mubr.f32.gmra.mxu0 %v1425
  %v1518 = vpop.f32.mrf.mxu0
  %v1519 = vadd.f32 %v1446, %v1518
  %v1520 = vpop.f32.mrf.mxu0
  %1521 = vdwg.mxu0
  %v1522 = vadd.f32 %v1316, %v1514
  %v1523 = vadd.f32 %v1317, %v1519
  %v1524 = vld [vmem:[%s1 + $0xe6] sm:$0x1]
  %v1525 = vld [vmem:[%s1 + $0xe7] sm:$0x1]
  %v1526 = vsel %vm54, %v1522, 0.0
  %1527 = vadd.xlane.f32.xlu0 %v1526
  %v1528 = vpop.xlane.xlu0 %1527
  %v1529 = vsel %vm54, %v1523, 0.0
  %1530 = vadd.xlane.f32.xlu0 %v1529
  %v1531 = vpop.xlane.xlu0 %1530
  %v1532 = vmul.f32 %v1528, %v1285
  %v1533 = vmul.f32 %v1531, %v1285
  %v1534 = vsub.f32 %v1522, %v1532
  %v1535 = vsub.f32 %v1523, %v1533
  %v1536 = vmul.f32 %v1534, %v1534
  %v1537 = vmul.f32 %v1535, %v1535
  %v1538 = vsel %vm54, %v1536, 0.0
  %1539 = vadd.xlane.f32.xlu0 %v1538
  %v1540 = vpop.xlane.xlu0 %1539
  %v1541 = vsel %vm54, %v1537, 0.0
  %1542 = vadd.xlane.f32.xlu0 %v1541
  %v1543 = vpop.xlane.xlu0 %1542
  %v1544 = vmul.f32 %v1540, %v1285
  %v1545 = vmul.f32 %v1543, %v1285
  %v1546 = vadd.f32 %v1544, 1e-12
  %v1547 = vadd.f32 %v1545, 1e-12
  %v1548 = vrsqrt.pop %v1546
  %v1549 = vrsqrt.pop %v1547
  %v1550 = vmul.f32 %v1534, %v1548
  %v1551 = vmul.f32 %v1535, %v1549
  %v1552 = vlaneseq
  %v1553 = vshrl.u32 %v1552, 7
  %v1554 = vsub.s32 0, %v1553
  %v1555 = vrot.slane %v1524, %v1554
  %v1556 = vmul.f32 %v1550, %v1555
  %v1557 = vmul.f32 %v1551, %v1555
  %v1558 = vlaneseq
  %v1559 = vshrl.u32 %v1558, 7
  %v1560 = vsub.s32 0, %v1559
  %v1561 = vrot.slane %v1525, %v1560
  %v1562 = vadd.f32 %v1556, %v1561
  %v1563 = vadd.f32 %v1557, %v1561
  %v1564 = vld [vmem:[%s1 + $0xe8] sm:$0xff]
  %v1565 = vld [vmem:[%s1 + $0xf0] sm:$0xff]
  %v1566 = vld [vmem:[%s1 + $0xf8] sm:$0xff]
  %v1567 = vld [vmem:[%s1 + $0x100] sm:$0xff]
  %v1568 = vld [vmem:[%s1 + $0x1c8] sm:$0x1]
  %v1569 = vlaneseq
  %v1570 = vshrl.u32 %v1569, 7
  %v1571 = vsub.s32 0, %v1570
  %v1572 = vrot.slane %v1568, %v1571
  %v1574 = vsel %vm54, %v1562, 0
  %v1577 = vsel %vm54, %v1563, 0
  %1579 = vmatprep.subr.mxu0 0.0
  %1580 = vmatpush1.msra.mxu0 0.0
  %1581 = vmatprep.subr.mxu0 0.0
  %1582 = vmatpush1.msra.mxu0 0.0
  %1583 = vmatprep.subr.mxu0 0.0
  %1584 = vmatpush1.msra.mxu0 0.0
  %1585 = vmatprep.subr.mxu0 0.0
  %1586 = vmatpush1.msra.mxu0 0.0
  %1587 = vmatprep.subr.mxu0 0.0
  %1588 = vmatpush1.msra.mxu0 0.0
  %1589 = vmatprep.subr.mxu0 0.0
  %1590 = vmatpush1.msra.mxu0 0.0
  %1591 = vmatprep.subr.mxu0 0.0
  %1592 = vmatpush1.msra.mxu0 0.0
  %1593 = vmatprep.subr.mxu0 0.0
  %1594 = vmatpush1.msra.mxu0 0.0
  %1595 = vmatprep.subr.mxu0 0.0
  %1596 = vmatpush1.msra.mxu0 0.0
  %1597 = vmatprep.subr.mxu0 0.0
  %1598 = vmatpush1.msra.mxu0 0.0
  %1599 = vmatprep.subr.mxu0 0.0
  %1600 = vmatpush1.msra.mxu0 0.0
  %1601 = vmatprep.subr.mxu0 0.0
  %1602 = vmatpush1.msra.mxu0 0.0
  %1603 = vmatprep.subr.mxu0 0.0
  %1604 = vmatpush1.msra.mxu0 %v1567
  %1605 = vmatprep.subr.mxu0 0.0
  %1606 = vmatpush1.msra.mxu0 %v1566
  %1607 = vmatprep.subr.mxu0 0.0
  %1608 = vmatpush1.msra.mxu0 %v1565
  %1609 = vmatprep.subr.mxu0 0.0
  %1610 = vmatpush1.msra.mxu0 %v1564
  %1611 = vmatprep.subr.mxu0 0.0
  %1612 = vmatpush2.msra.mxu0 0.0
  %1613 = vmatprep.subr.mxu0 0.0
  %1614 = vmatpush2.msra.mxu0 0.0
  %1615 = vmatprep.subr.mxu0 0.0
  %1616 = vmatpush2.msra.mxu0 0.0
  %1617 = vmatprep.subr.mxu0 0.0
  %1618 = vmatpush2.msra.mxu0 0.0
  %1619 = vmatprep.subr.mxu0 0.0
  %1620 = vmatpush2.msra.mxu0 0.0
  %1621 = vmatprep.subr.mxu0 0.0
  %1622 = vmatpush2.msra.mxu0 0.0
  %1623 = vmatprep.subr.mxu0 0.0
  %1624 = vmatpush2.msra.mxu0 0.0
  %1625 = vmatprep.subr.mxu0 0.0
  %1626 = vmatpush2.msra.mxu0 0.0
  %1627 = vmatprep.subr.mxu0 0.0
  %1628 = vmatpush2.msra.mxu0 0.0
  %1629 = vmatprep.subr.mxu0 0.0
  %1630 = vmatpush2.msra.mxu0 0.0
  %1631 = vmatprep.subr.mxu0 0.0
  %1632 = vmatpush2.msra.mxu0 0.0
  %1633 = vmatprep.subr.mxu0 0.0
  %1634 = vmatpush2.msra.mxu0 0.0
  %1635 = vmatprep.subr.mxu0 0.0
  %1636 = vmatpush2.msra.mxu0 0.0
  %1637 = vmatprep.subr.mxu0 0.0
  %1638 = vmatpush2.msra.mxu0 0.0
  %1639 = vmatprep.subr.mxu0 0.0
  %1640 = vmatpush2.msra.mxu0 0.0
  %1641 = vmatprep.subr.mxu0 0.0
  %1642 = vmatpush2.msra.mxu0 0.0
  %1643 = vmatprep.mubr.f32.mxu0 0.0
  %1644 = vmatmul.mubr.f32.gmra.mxu0 %v1574
  %v1645 = vpop.f32.mrf.mxu0
  %v1646 = vadd.f32 %v1572, %v1645
  %v1647 = vpop.f32.mrf.mxu0
  %1648 = vmatprep.mubr.f32.mxu0 0.0
  %1649 = vmatmul.mubr.f32.gmra.mxu0 %v1577
  %v1650 = vpop.f32.mrf.mxu0
  %v1651 = vadd.f32 %v1572, %v1650
  %v1652 = vpop.f32.mrf.mxu0
  %1653 = vdwg.mxu0
  %1656 = vrot.lane.b32.xlu0 %v1646, 96
  %v1657 = vpop.permute.xlu0 %1656
  %1658 = vrot.lane.b32.xlu0 %v1651, 96
  %v1659 = vpop.permute.xlu0 %1658
  %v1660 = vsel %vm142, %v1646, 0
  %v1662 = vsel %vm142, %v1651, 0
  %v1664 = vsel %vm142, %v1657, 0
  %v1666 = vsel %vm142, %v1659, 0
  %1668 = vmatprep.subr.mxu0 0.0
  %1669 = vmatpush1.xpose.msra.mxu0 0.0
  %1670 = vmatprep.subr.mxu0 0.0
  %1671 = vmatpush1.xpose.msra.mxu0 0.0
  %1672 = vmatprep.subr.mxu0 0.0
  %1673 = vmatpush1.xpose.msra.mxu0 0.0
  %1674 = vmatprep.subr.mxu0 0.0
  %1675 = vmatpush1.xpose.msra.mxu0 0.0
  %1676 = vmatprep.subr.mxu0 0.0
  %1677 = vmatpush1.xpose.msra.mxu0 0.0
  %1678 = vmatprep.subr.mxu0 0.0
  %1679 = vmatpush1.xpose.msra.mxu0 0.0
  %1680 = vmatprep.subr.mxu0 0.0
  %1681 = vmatpush1.xpose.msra.mxu0 0.0
  %1682 = vmatprep.subr.mxu0 0.0
  %1683 = vmatpush1.xpose.msra.mxu0 0.0
  %1684 = vmatprep.subr.mxu0 0.0
  %1685 = vmatpush1.xpose.msra.mxu0 0.0
  %1686 = vmatprep.subr.mxu0 0.0
  %1687 = vmatpush1.xpose.msra.mxu0 0.0
  %1688 = vmatprep.subr.mxu0 0.0
  %1689 = vmatpush1.xpose.msra.mxu0 0.0
  %1690 = vmatprep.subr.mxu0 0.0
  %1691 = vmatpush1.xpose.msra.mxu0 0.0
  %1692 = vmatprep.subr.mxu0 0.0
  %1693 = vmatpush1.xpose.msra.mxu0 0.0
  %1694 = vmatprep.subr.mxu0 0.0
  %1695 = vmatpush1.xpose.msra.mxu0 0.0
  %1696 = vmatprep.subr.mxu0 0.0
  %1697 = vmatpush1.xpose.msra.mxu0 %v1666
  %1698 = vmatprep.subr.mxu0 0.0
  %1699 = vmatpush1.xpose.msra.mxu0 %v1664
  %1700 = vmatprep.subr.mxu0 0.0
  %1701 = vmatpush2.xpose.msra.mxu0 0.0
  %1702 = vmatprep.subr.mxu0 0.0
  %1703 = vmatpush2.xpose.msra.mxu0 0.0
  %1704 = vmatprep.subr.mxu0 0.0
  %1705 = vmatpush2.xpose.msra.mxu0 0.0
  %1706 = vmatprep.subr.mxu0 0.0
  %1707 = vmatpush2.xpose.msra.mxu0 0.0
  %1708 = vmatprep.subr.mxu0 0.0
  %1709 = vmatpush2.xpose.msra.mxu0 0.0
  %1710 = vmatprep.subr.mxu0 0.0
  %1711 = vmatpush2.xpose.msra.mxu0 0.0
  %1712 = vmatprep.subr.mxu0 0.0
  %1713 = vmatpush2.xpose.msra.mxu0 0.0
  %1714 = vmatprep.subr.mxu0 0.0
  %1715 = vmatpush2.xpose.msra.mxu0 0.0
  %1716 = vmatprep.subr.mxu0 0.0
  %1717 = vmatpush2.xpose.msra.mxu0 0.0
  %1718 = vmatprep.subr.mxu0 0.0
  %1719 = vmatpush2.xpose.msra.mxu0 0.0
  %1720 = vmatprep.subr.mxu0 0.0
  %1721 = vmatpush2.xpose.msra.mxu0 0.0
  %1722 = vmatprep.subr.mxu0 0.0
  %1723 = vmatpush2.xpose.msra.mxu0 0.0
  %1724 = vmatprep.subr.mxu0 0.0
  %1725 = vmatpush2.xpose.msra.mxu0 0.0
  %1726 = vmatprep.subr.mxu0 0.0
  %1727 = vmatpush2.xpose.msra.mxu0 0.0
  %1728 = vmatprep.subr.mxu0 0.0
  %1729 = vmatpush2.xpose.msra.mxu0 0.0
  %1730 = vmatprep.subr.mxu0 0.0
  %1731 = vmatpush2.xpose.msra.mxu0 0.0
  %1732 = vmatprep.mubr.f32.mxu0 0.0
  %1733 = vmatmul.mubr.f32.gmra.mxu0 %v1660
  %v1734 = vpop.f32.mrf.mxu0
  %v1735 = vadd.f32 %v43, %v1734
  %v1736 = vpop.f32.mrf.mxu0
  %1737 = vmatprep.mubr.f32.mxu0 0.0
  %1738 = vmatmul.mubr.f32.gmra.mxu0 %v1662
  %v1739 = vpop.f32.mrf.mxu0
  %v1740 = vadd.f32 %v44, %v1739
  %v1741 = vpop.f32.mrf.mxu0
  %1742 = vdwg.mxu0
  %v1743 = vsel %vm226, %v1735, -inf
  %1744 = vmax.xlane.f32.xlu0 %v1743
  %v1745 = vpop.xlane.xlu0 %1744
  %v1746 = vsel %vm226, %v1740, -inf
  %1747 = vmax.xlane.f32.xlu0 %v1746
  %v1748 = vpop.xlane.xlu0 %1747
  %v1749 = vsub.f32 %v1735, %v1745
  %v1750 = vsub.f32 %v1740, %v1748
  %v1751 = vmul.f32 %v1749, 1.442695
  %v1752 = vpow.pop %v1751
  %v1753 = vmul.f32 %v1750, 1.442695
  %v1754 = vpow.pop %v1753
  %v1755 = vsel %vm226, %v1752, 0.0
  %1756 = vadd.xlane.f32.xlu0 %v1755
  %v1757 = vpop.xlane.xlu0 %1756
  %v1758 = vsel %vm226, %v1754, 0.0
  %1759 = vadd.xlane.f32.xlu0 %v1758
  %v1760 = vpop.xlane.xlu0 %1759
  %v1761 = vrcp.pop %v1757
  %v1762 = vmul.f32 %v1752, %v1761
  %v1763 = vrcp.pop %v1760
  %v1764 = vmul.f32 %v1754, %v1763
  %1765 = vrot.lane.b32.xlu0 %v1646, 64
  %v1766 = vpop.permute.xlu0 %1765
  %1767 = vrot.lane.b32.xlu0 %v1651, 64
  %v1768 = vpop.permute.xlu0 %1767
  %v1772 = vsel %vm226, %v1762, 0
  %v1775 = vsel %vm226, %v1764, 0
  %1777 = vmatprep.subr.mxu0 0.0
  %1778 = vmatpush1.msra.mxu0 0.0
  %1779 = vmatprep.subr.mxu0 0.0
  %1780 = vmatpush1.msra.mxu0 0.0
  %1781 = vmatprep.subr.mxu0 0.0
  %1782 = vmatpush1.msra.mxu0 0.0
  %1783 = vmatprep.subr.mxu0 0.0
  %1784 = vmatpush1.msra.mxu0 0.0
  %1785 = vmatprep.subr.mxu0 0.0
  %1786 = vmatpush1.msra.mxu0 0.0
  %1787 = vmatprep.subr.mxu0 0.0
  %1788 = vmatpush1.msra.mxu0 0.0
  %1789 = vmatprep.subr.mxu0 0.0
  %1790 = vmatpush1.msra.mxu0 0.0
  %1791 = vmatprep.subr.mxu0 0.0
  %1792 = vmatpush1.msra.mxu0 0.0
  %1793 = vmatprep.subr.mxu0 0.0
  %1794 = vmatpush1.msra.mxu0 0.0
  %1795 = vmatprep.subr.mxu0 0.0
  %1796 = vmatpush1.msra.mxu0 0.0
  %1797 = vmatprep.subr.mxu0 0.0
  %1798 = vmatpush1.msra.mxu0 0.0
  %1799 = vmatprep.subr.mxu0 0.0
  %1800 = vmatpush1.msra.mxu0 0.0
  %1801 = vmatprep.subr.mxu0 0.0
  %1802 = vmatpush1.msra.mxu0 0.0
  %1803 = vmatprep.subr.mxu0 0.0
  %1804 = vmatpush1.msra.mxu0 0.0
  %1805 = vmatprep.subr.mxu0 0.0
  %1806 = vmatpush1.msra.mxu0 %v1768
  %1807 = vmatprep.subr.mxu0 0.0
  %1808 = vmatpush1.msra.mxu0 %v1766
  %1809 = vmatprep.subr.mxu0 0.0
  %1810 = vmatpush2.msra.mxu0 0.0
  %1811 = vmatprep.subr.mxu0 0.0
  %1812 = vmatpush2.msra.mxu0 0.0
  %1813 = vmatprep.subr.mxu0 0.0
  %1814 = vmatpush2.msra.mxu0 0.0
  %1815 = vmatprep.subr.mxu0 0.0
  %1816 = vmatpush2.msra.mxu0 0.0
  %1817 = vmatprep.subr.mxu0 0.0
  %1818 = vmatpush2.msra.mxu0 0.0
  %1819 = vmatprep.subr.mxu0 0.0
  %1820 = vmatpush2.msra.mxu0 0.0
  %1821 = vmatprep.subr.mxu0 0.0
  %1822 = vmatpush2.msra.mxu0 0.0
  %1823 = vmatprep.subr.mxu0 0.0
  %1824 = vmatpush2.msra.mxu0 0.0
  %1825 = vmatprep.subr.mxu0 0.0
  %1826 = vmatpush2.msra.mxu0 0.0
  %1827 = vmatprep.subr.mxu0 0.0
  %1828 = vmatpush2.msra.mxu0 0.0
  %1829 = vmatprep.subr.mxu0 0.0
  %1830 = vmatpush2.msra.mxu0 0.0
  %1831 = vmatprep.subr.mxu0 0.0
  %1832 = vmatpush2.msra.mxu0 0.0
  %1833 = vmatprep.subr.mxu0 0.0
  %1834 = vmatpush2.msra.mxu0 0.0
  %1835 = vmatprep.subr.mxu0 0.0
  %1836 = vmatpush2.msra.mxu0 0.0
  %1837 = vmatprep.subr.mxu0 0.0
  %1838 = vmatpush2.msra.mxu0 0.0
  %1839 = vmatprep.subr.mxu0 0.0
  %1840 = vmatpush2.msra.mxu0 0.0
  %1841 = vmatprep.mubr.f32.mxu0 0.0
  %1842 = vmatmul.mubr.f32.gmra.mxu0 %v1772
  %v1843 = vpop.f32.mrf.mxu0
  %v1844 = vadd.f32 0.0, %v1843
  %v1845 = vpop.f32.mrf.mxu0
  %1846 = vmatprep.mubr.f32.mxu0 0.0
  %1847 = vmatmul.mubr.f32.gmra.mxu0 %v1775
  %v1848 = vpop.f32.mrf.mxu0
  %v1849 = vadd.f32 0.0, %v1848
  %v1850 = vpop.f32.mrf.mxu0
  %1851 = vdwg.mxu0
  %v1852 = vld [vmem:[%s1 + $0x108] sm:$0xff]
  %1853 = vrot.lane.b32.xlu0 %v1646, 120
  %v1854 = vpop.permute.xlu0 %1853
  %1855 = vrot.lane.b32.xlu0 %v1651, 120
  %v1856 = vpop.permute.xlu0 %1855
  %1857 = vrot.lane.b32.xlu0 %v1646, 88
  %v1858 = vpop.permute.xlu0 %1857
  %1859 = vrot.lane.b32.xlu0 %v1651, 88
  %v1860 = vpop.permute.xlu0 %1859
  %v1861 = vsel %vm142, %v1854, 0
  %v1863 = vsel %vm142, %v1856, 0
  %v1865 = vsel %vm142, %v1858, 0
  %v1867 = vsel %vm142, %v1860, 0
  %1869 = vmatprep.subr.mxu0 0.0
  %1870 = vmatpush1.xpose.msra.mxu0 0.0
  %1871 = vmatprep.subr.mxu0 0.0
  %1872 = vmatpush1.xpose.msra.mxu0 0.0
  %1873 = vmatprep.subr.mxu0 0.0
  %1874 = vmatpush1.xpose.msra.mxu0 0.0
  %1875 = vmatprep.subr.mxu0 0.0
  %1876 = vmatpush1.xpose.msra.mxu0 0.0
  %1877 = vmatprep.subr.mxu0 0.0
  %1878 = vmatpush1.xpose.msra.mxu0 0.0
  %1879 = vmatprep.subr.mxu0 0.0
  %1880 = vmatpush1.xpose.msra.mxu0 0.0
  %1881 = vmatprep.subr.mxu0 0.0
  %1882 = vmatpush1.xpose.msra.mxu0 0.0
  %1883 = vmatprep.subr.mxu0 0.0
  %1884 = vmatpush1.xpose.msra.mxu0 0.0
  %1885 = vmatprep.subr.mxu0 0.0
  %1886 = vmatpush1.xpose.msra.mxu0 0.0
  %1887 = vmatprep.subr.mxu0 0.0
  %1888 = vmatpush1.xpose.msra.mxu0 0.0
  %1889 = vmatprep.subr.mxu0 0.0
  %1890 = vmatpush1.xpose.msra.mxu0 0.0
  %1891 = vmatprep.subr.mxu0 0.0
  %1892 = vmatpush1.xpose.msra.mxu0 0.0
  %1893 = vmatprep.subr.mxu0 0.0
  %1894 = vmatpush1.xpose.msra.mxu0 0.0
  %1895 = vmatprep.subr.mxu0 0.0
  %1896 = vmatpush1.xpose.msra.mxu0 0.0
  %1897 = vmatprep.subr.mxu0 0.0
  %1898 = vmatpush1.xpose.msra.mxu0 %v1867
  %1899 = vmatprep.subr.mxu0 0.0
  %1900 = vmatpush1.xpose.msra.mxu0 %v1865
  %1901 = vmatprep.subr.mxu0 0.0
  %1902 = vmatpush2.xpose.msra.mxu0 0.0
  %1903 = vmatprep.subr.mxu0 0.0
  %1904 = vmatpush2.xpose.msra.mxu0 0.0
  %1905 = vmatprep.subr.mxu0 0.0
  %1906 = vmatpush2.xpose.msra.mxu0 0.0
  %1907 = vmatprep.subr.mxu0 0.0
  %1908 = vmatpush2.xpose.msra.mxu0 0.0
  %1909 = vmatprep.subr.mxu0 0.0
  %1910 = vmatpush2.xpose.msra.mxu0 0.0
  %1911 = vmatprep.subr.mxu0 0.0
  %1912 = vmatpush2.xpose.msra.mxu0 0.0
  %1913 = vmatprep.subr.mxu0 0.0
  %1914 = vmatpush2.xpose.msra.mxu0 0.0
  %1915 = vmatprep.subr.mxu0 0.0
  %1916 = vmatpush2.xpose.msra.mxu0 0.0
  %1917 = vmatprep.subr.mxu0 0.0
  %1918 = vmatpush2.xpose.msra.mxu0 0.0
  %1919 = vmatprep.subr.mxu0 0.0
  %1920 = vmatpush2.xpose.msra.mxu0 0.0
  %1921 = vmatprep.subr.mxu0 0.0
  %1922 = vmatpush2.xpose.msra.mxu0 0.0
  %1923 = vmatprep.subr.mxu0 0.0
  %1924 = vmatpush2.xpose.msra.mxu0 0.0
  %1925 = vmatprep.subr.mxu0 0.0
  %1926 = vmatpush2.xpose.msra.mxu0 0.0
  %1927 = vmatprep.subr.mxu0 0.0
  %1928 = vmatpush2.xpose.msra.mxu0 0.0
  %1929 = vmatprep.subr.mxu0 0.0
  %1930 = vmatpush2.xpose.msra.mxu0 0.0
  %1931 = vmatprep.subr.mxu0 0.0
  %1932 = vmatpush2.xpose.msra.mxu0 0.0
  %1933 = vmatprep.mubr.f32.mxu0 0.0
  %1934 = vmatmul.mubr.f32.gmra.mxu0 %v1861
  %v1935 = vpop.f32.mrf.mxu0
  %v1936 = vadd.f32 %v43, %v1935
  %v1937 = vpop.f32.mrf.mxu0
  %1938 = vmatprep.mubr.f32.mxu0 0.0
  %1939 = vmatmul.mubr.f32.gmra.mxu0 %v1863
  %v1940 = vpop.f32.mrf.mxu0
  %v1941 = vadd.f32 %v44, %v1940
  %v1942 = vpop.f32.mrf.mxu0
  %1943 = vdwg.mxu0
  %v1944 = vsel %vm226, %v1936, -inf
  %1945 = vmax.xlane.f32.xlu0 %v1944
  %v1946 = vpop.xlane.xlu0 %1945
  %v1947 = vsel %vm226, %v1941, -inf
  %1948 = vmax.xlane.f32.xlu0 %v1947
  %v1949 = vpop.xlane.xlu0 %1948
  %v1950 = vsub.f32 %v1936, %v1946
  %v1951 = vsub.f32 %v1941, %v1949
  %v1952 = vmul.f32 %v1950, 1.442695
  %v1953 = vpow.pop %v1952
  %v1954 = vmul.f32 %v1951, 1.442695
  %v1955 = vpow.pop %v1954
  %v1956 = vsel %vm226, %v1953, 0.0
  %1957 = vadd.xlane.f32.xlu0 %v1956
  %v1958 = vpop.xlane.xlu0 %1957
  %v1959 = vsel %vm226, %v1955, 0.0
  %1960 = vadd.xlane.f32.xlu0 %v1959
  %v1961 = vpop.xlane.xlu0 %1960
  %v1962 = vrcp.pop %v1958
  %v1963 = vmul.f32 %v1953, %v1962
  %v1964 = vrcp.pop %v1961
  %v1965 = vmul.f32 %v1955, %v1964
  %1966 = vrot.lane.b32.xlu0 %v1646, 56
  %v1967 = vpop.permute.xlu0 %1966
  %1968 = vrot.lane.b32.xlu0 %v1651, 56
  %v1969 = vpop.permute.xlu0 %1968
  %v1973 = vsel %vm226, %v1963, 0
  %v1976 = vsel %vm226, %v1965, 0
  %1978 = vmatprep.subr.mxu0 0.0
  %1979 = vmatpush1.msra.mxu0 0.0
  %1980 = vmatprep.subr.mxu0 0.0
  %1981 = vmatpush1.msra.mxu0 0.0
  %1982 = vmatprep.subr.mxu0 0.0
  %1983 = vmatpush1.msra.mxu0 0.0
  %1984 = vmatprep.subr.mxu0 0.0
  %1985 = vmatpush1.msra.mxu0 0.0
  %1986 = vmatprep.subr.mxu0 0.0
  %1987 = vmatpush1.msra.mxu0 0.0
  %1988 = vmatprep.subr.mxu0 0.0
  %1989 = vmatpush1.msra.mxu0 0.0
  %1990 = vmatprep.subr.mxu0 0.0
  %1991 = vmatpush1.msra.mxu0 0.0
  %1992 = vmatprep.subr.mxu0 0.0
  %1993 = vmatpush1.msra.mxu0 0.0
  %1994 = vmatprep.subr.mxu0 0.0
  %1995 = vmatpush1.msra.mxu0 0.0
  %1996 = vmatprep.subr.mxu0 0.0
  %1997 = vmatpush1.msra.mxu0 0.0
  %1998 = vmatprep.subr.mxu0 0.0
  %1999 = vmatpush1.msra.mxu0 0.0
  %2000 = vmatprep.subr.mxu0 0.0
  %2001 = vmatpush1.msra.mxu0 0.0
  %2002 = vmatprep.subr.mxu0 0.0
  %2003 = vmatpush1.msra.mxu0 0.0
  %2004 = vmatprep.subr.mxu0 0.0
  %2005 = vmatpush1.msra.mxu0 0.0
  %2006 = vmatprep.subr.mxu0 0.0
  %2007 = vmatpush1.msra.mxu0 %v1969
  %2008 = vmatprep.subr.mxu0 0.0
  %2009 = vmatpush1.msra.mxu0 %v1967
  %2010 = vmatprep.subr.mxu0 0.0
  %2011 = vmatpush2.msra.mxu0 0.0
  %2012 = vmatprep.subr.mxu0 0.0
  %2013 = vmatpush2.msra.mxu0 0.0
  %2014 = vmatprep.subr.mxu0 0.0
  %2015 = vmatpush2.msra.mxu0 0.0
  %2016 = vmatprep.subr.mxu0 0.0
  %2017 = vmatpush2.msra.mxu0 0.0
  %2018 = vmatprep.subr.mxu0 0.0
  %2019 = vmatpush2.msra.mxu0 0.0
  %2020 = vmatprep.subr.mxu0 0.0
  %2021 = vmatpush2.msra.mxu0 0.0
  %2022 = vmatprep.subr.mxu0 0.0
  %2023 = vmatpush2.msra.mxu0 0.0
  %2024 = vmatprep.subr.mxu0 0.0
  %2025 = vmatpush2.msra.mxu0 0.0
  %2026 = vmatprep.subr.mxu0 0.0
  %2027 = vmatpush2.msra.mxu0 0.0
  %2028 = vmatprep.subr.mxu0 0.0
  %2029 = vmatpush2.msra.mxu0 0.0
  %2030 = vmatprep.subr.mxu0 0.0
  %2031 = vmatpush2.msra.mxu0 0.0
  %2032 = vmatprep.subr.mxu0 0.0
  %2033 = vmatpush2.msra.mxu0 0.0
  %2034 = vmatprep.subr.mxu0 0.0
  %2035 = vmatpush2.msra.mxu0 0.0
  %2036 = vmatprep.subr.mxu0 0.0
  %2037 = vmatpush2.msra.mxu0 0.0
  %2038 = vmatprep.subr.mxu0 0.0
  %2039 = vmatpush2.msra.mxu0 0.0
  %2040 = vmatprep.subr.mxu0 0.0
  %2041 = vmatpush2.msra.mxu0 0.0
  %2042 = vmatprep.mubr.f32.mxu0 0.0
  %2043 = vmatmul.mubr.f32.gmra.mxu0 %v1973
  %v2044 = vpop.f32.mrf.mxu0
  %v2045 = vadd.f32 0.0, %v2044
  %v2046 = vpop.f32.mrf.mxu0
  %2047 = vmatprep.mubr.f32.mxu0 0.0
  %2048 = vmatmul.mubr.f32.gmra.mxu0 %v1976
  %v2049 = vpop.f32.mrf.mxu0
  %v2050 = vadd.f32 0.0, %v2049
  %v2051 = vpop.f32.mrf.mxu0
  %2052 = vdwg.mxu0
  %v2053 = vld [vmem:[%s1 + $0x110] sm:$0xff]
  %v2055 = vsel %vm142, %v2045, 0
  %v2058 = vsel %vm142, %v2050, 0
  %2060 = vmatprep.subr.mxu0 0.0
  %2061 = vmatpush1.msra.mxu0 0.0
  %2062 = vmatprep.subr.mxu0 0.0
  %2063 = vmatpush1.msra.mxu0 0.0
  %2064 = vmatprep.subr.mxu0 0.0
  %2065 = vmatpush1.msra.mxu0 0.0
  %2066 = vmatprep.subr.mxu0 0.0
  %2067 = vmatpush1.msra.mxu0 0.0
  %2068 = vmatprep.subr.mxu0 0.0
  %2069 = vmatpush1.msra.mxu0 0.0
  %2070 = vmatprep.subr.mxu0 0.0
  %2071 = vmatpush1.msra.mxu0 0.0
  %2072 = vmatprep.subr.mxu0 0.0
  %2073 = vmatpush1.msra.mxu0 0.0
  %2074 = vmatprep.subr.mxu0 0.0
  %2075 = vmatpush1.msra.mxu0 0.0
  %2076 = vmatprep.subr.mxu0 0.0
  %2077 = vmatpush1.msra.mxu0 0.0
  %2078 = vmatprep.subr.mxu0 0.0
  %2079 = vmatpush1.msra.mxu0 0.0
  %2080 = vmatprep.subr.mxu0 0.0
  %2081 = vmatpush1.msra.mxu0 0.0
  %2082 = vmatprep.subr.mxu0 0.0
  %2083 = vmatpush1.msra.mxu0 0.0
  %2084 = vmatprep.subr.mxu0 0.0
  %2085 = vmatpush1.msra.mxu0 0.0
  %2086 = vmatprep.subr.mxu0 0.0
  %2087 = vmatpush1.msra.mxu0 0.0
  %2088 = vmatprep.subr.mxu0 0.0
  %2089 = vmatpush1.msra.mxu0 0.0
  %2090 = vmatprep.subr.mxu0 0.0
  %2091 = vmatpush1.msra.mxu0 %v2053
  %2092 = vmatprep.subr.mxu0 0.0
  %2093 = vmatpush2.msra.mxu0 0.0
  %2094 = vmatprep.subr.mxu0 0.0
  %2095 = vmatpush2.msra.mxu0 0.0
  %2096 = vmatprep.subr.mxu0 0.0
  %2097 = vmatpush2.msra.mxu0 0.0
  %2098 = vmatprep.subr.mxu0 0.0
  %2099 = vmatpush2.msra.mxu0 0.0
  %2100 = vmatprep.subr.mxu0 0.0
  %2101 = vmatpush2.msra.mxu0 0.0
  %2102 = vmatprep.subr.mxu0 0.0
  %2103 = vmatpush2.msra.mxu0 0.0
  %2104 = vmatprep.subr.mxu0 0.0
  %2105 = vmatpush2.msra.mxu0 0.0
  %2106 = vmatprep.subr.mxu0 0.0
  %2107 = vmatpush2.msra.mxu0 0.0
  %2108 = vmatprep.subr.mxu0 0.0
  %2109 = vmatpush2.msra.mxu0 0.0
  %2110 = vmatprep.subr.mxu0 0.0
  %2111 = vmatpush2.msra.mxu0 0.0
  %2112 = vmatprep.subr.mxu0 0.0
  %2113 = vmatpush2.msra.mxu0 0.0
  %2114 = vmatprep.subr.mxu0 0.0
  %2115 = vmatpush2.msra.mxu0 0.0
  %2116 = vmatprep.subr.mxu0 0.0
  %2117 = vmatpush2.msra.mxu0 0.0
  %2118 = vmatprep.subr.mxu0 0.0
  %2119 = vmatpush2.msra.mxu0 0.0
  %2120 = vmatprep.subr.mxu0 0.0
  %2121 = vmatpush2.msra.mxu0 0.0
  %2122 = vmatprep.subr.mxu0 0.0
  %2123 = vmatpush2.msra.mxu0 0.0
  %2124 = vmatprep.mubr.f32.mxu0 0.0
  %2125 = vmatmul.mubr.f32.gmra.mxu0 %v2055
  %v2126 = vpop.f32.mrf.mxu0
  %v2127 = vadd.f32 0.0, %v2126
  %v2128 = vpop.f32.mrf.mxu0
  %2129 = vmatprep.mubr.f32.mxu0 0.0
  %2130 = vmatmul.mubr.f32.gmra.mxu0 %v2058
  %v2131 = vpop.f32.mrf.mxu0
  %v2132 = vadd.f32 0.0, %v2131
  %v2133 = vpop.f32.mrf.mxu0
  %2134 = vdwg.mxu0
  %v2136 = vsel %vm142, %v1844, 0
  %v2139 = vsel %vm142, %v1849, 0
  %2141 = vmatprep.subr.mxu0 0.0
  %2142 = vmatpush1.msra.mxu0 0.0
  %2143 = vmatprep.subr.mxu0 0.0
  %2144 = vmatpush1.msra.mxu0 0.0
  %2145 = vmatprep.subr.mxu0 0.0
  %2146 = vmatpush1.msra.mxu0 0.0
  %2147 = vmatprep.subr.mxu0 0.0
  %2148 = vmatpush1.msra.mxu0 0.0
  %2149 = vmatprep.subr.mxu0 0.0
  %2150 = vmatpush1.msra.mxu0 0.0
  %2151 = vmatprep.subr.mxu0 0.0
  %2152 = vmatpush1.msra.mxu0 0.0
  %2153 = vmatprep.subr.mxu0 0.0
  %2154 = vmatpush1.msra.mxu0 0.0
  %2155 = vmatprep.subr.mxu0 0.0
  %2156 = vmatpush1.msra.mxu0 0.0
  %2157 = vmatprep.subr.mxu0 0.0
  %2158 = vmatpush1.msra.mxu0 0.0
  %2159 = vmatprep.subr.mxu0 0.0
  %2160 = vmatpush1.msra.mxu0 0.0
  %2161 = vmatprep.subr.mxu0 0.0
  %2162 = vmatpush1.msra.mxu0 0.0
  %2163 = vmatprep.subr.mxu0 0.0
  %2164 = vmatpush1.msra.mxu0 0.0
  %2165 = vmatprep.subr.mxu0 0.0
  %2166 = vmatpush1.msra.mxu0 0.0
  %2167 = vmatprep.subr.mxu0 0.0
  %2168 = vmatpush1.msra.mxu0 0.0
  %2169 = vmatprep.subr.mxu0 0.0
  %2170 = vmatpush1.msra.mxu0 0.0
  %2171 = vmatprep.subr.mxu0 0.0
  %2172 = vmatpush1.msra.mxu0 %v1852
  %2173 = vmatprep.subr.mxu0 0.0
  %2174 = vmatpush2.msra.mxu0 0.0
  %2175 = vmatprep.subr.mxu0 0.0
  %2176 = vmatpush2.msra.mxu0 0.0
  %2177 = vmatprep.subr.mxu0 0.0
  %2178 = vmatpush2.msra.mxu0 0.0
  %2179 = vmatprep.subr.mxu0 0.0
  %2180 = vmatpush2.msra.mxu0 0.0
  %2181 = vmatprep.subr.mxu0 0.0
  %2182 = vmatpush2.msra.mxu0 0.0
  %2183 = vmatprep.subr.mxu0 0.0
  %2184 = vmatpush2.msra.mxu0 0.0
  %2185 = vmatprep.subr.mxu0 0.0
  %2186 = vmatpush2.msra.mxu0 0.0
  %2187 = vmatprep.subr.mxu0 0.0
  %2188 = vmatpush2.msra.mxu0 0.0
  %2189 = vmatprep.subr.mxu0 0.0
  %2190 = vmatpush2.msra.mxu0 0.0
  %2191 = vmatprep.subr.mxu0 0.0
  %2192 = vmatpush2.msra.mxu0 0.0
  %2193 = vmatprep.subr.mxu0 0.0
  %2194 = vmatpush2.msra.mxu0 0.0
  %2195 = vmatprep.subr.mxu0 0.0
  %2196 = vmatpush2.msra.mxu0 0.0
  %2197 = vmatprep.subr.mxu0 0.0
  %2198 = vmatpush2.msra.mxu0 0.0
  %2199 = vmatprep.subr.mxu0 0.0
  %2200 = vmatpush2.msra.mxu0 0.0
  %2201 = vmatprep.subr.mxu0 0.0
  %2202 = vmatpush2.msra.mxu0 0.0
  %2203 = vmatprep.subr.mxu0 0.0
  %2204 = vmatpush2.msra.mxu0 0.0
  %2205 = vmatprep.mubr.f32.mxu0 0.0
  %2206 = vmatmul.mubr.f32.gmra.mxu0 %v2136
  %v2207 = vpop.f32.mrf.mxu0
  %v2208 = vadd.f32 %v2127, %v2207
  %v2209 = vpop.f32.mrf.mxu0
  %2210 = vmatprep.mubr.f32.mxu0 0.0
  %2211 = vmatmul.mubr.f32.gmra.mxu0 %v2139
  %v2212 = vpop.f32.mrf.mxu0
  %v2213 = vadd.f32 %v2132, %v2212
  %v2214 = vpop.f32.mrf.mxu0
  %2215 = vdwg.mxu0
  %2216 = vrot.lane.b32.xlu0 %v1646, 112
  %v2217 = vpop.permute.xlu0 %2216
  %2218 = vrot.lane.b32.xlu0 %v1651, 112
  %v2219 = vpop.permute.xlu0 %2218
  %2220 = vrot.lane.b32.xlu0 %v1646, 80
  %v2221 = vpop.permute.xlu0 %2220
  %2222 = vrot.lane.b32.xlu0 %v1651, 80
  %v2223 = vpop.permute.xlu0 %2222
  %v2224 = vsel %vm142, %v2217, 0
  %v2226 = vsel %vm142, %v2219, 0
  %v2228 = vsel %vm142, %v2221, 0
  %v2230 = vsel %vm142, %v2223, 0
  %2232 = vmatprep.subr.mxu0 0.0
  %2233 = vmatpush1.xpose.msra.mxu0 0.0
  %2234 = vmatprep.subr.mxu0 0.0
  %2235 = vmatpush1.xpose.msra.mxu0 0.0
  %2236 = vmatprep.subr.mxu0 0.0
  %2237 = vmatpush1.xpose.msra.mxu0 0.0
  %2238 = vmatprep.subr.mxu0 0.0
  %2239 = vmatpush1.xpose.msra.mxu0 0.0
  %2240 = vmatprep.subr.mxu0 0.0
  %2241 = vmatpush1.xpose.msra.mxu0 0.0
  %2242 = vmatprep.subr.mxu0 0.0
  %2243 = vmatpush1.xpose.msra.mxu0 0.0
  %2244 = vmatprep.subr.mxu0 0.0
  %2245 = vmatpush1.xpose.msra.mxu0 0.0
  %2246 = vmatprep.subr.mxu0 0.0
  %2247 = vmatpush1.xpose.msra.mxu0 0.0
  %2248 = vmatprep.subr.mxu0 0.0
  %2249 = vmatpush1.xpose.msra.mxu0 0.0
  %2250 = vmatprep.subr.mxu0 0.0
  %2251 = vmatpush1.xpose.msra.mxu0 0.0
  %2252 = vmatprep.subr.mxu0 0.0
  %2253 = vmatpush1.xpose.msra.mxu0 0.0
  %2254 = vmatprep.subr.mxu0 0.0
  %2255 = vmatpush1.xpose.msra.mxu0 0.0
  %2256 = vmatprep.subr.mxu0 0.0
  %2257 = vmatpush1.xpose.msra.mxu0 0.0
  %2258 = vmatprep.subr.mxu0 0.0
  %2259 = vmatpush1.xpose.msra.mxu0 0.0
  %2260 = vmatprep.subr.mxu0 0.0
  %2261 = vmatpush1.xpose.msra.mxu0 %v2230
  %2262 = vmatprep.subr.mxu0 0.0
  %2263 = vmatpush1.xpose.msra.mxu0 %v2228
  %2264 = vmatprep.subr.mxu0 0.0
  %2265 = vmatpush2.xpose.msra.mxu0 0.0
  %2266 = vmatprep.subr.mxu0 0.0
  %2267 = vmatpush2.xpose.msra.mxu0 0.0
  %2268 = vmatprep.subr.mxu0 0.0
  %2269 = vmatpush2.xpose.msra.mxu0 0.0
  %2270 = vmatprep.subr.mxu0 0.0
  %2271 = vmatpush2.xpose.msra.mxu0 0.0
  %2272 = vmatprep.subr.mxu0 0.0
  %2273 = vmatpush2.xpose.msra.mxu0 0.0
  %2274 = vmatprep.subr.mxu0 0.0
  %2275 = vmatpush2.xpose.msra.mxu0 0.0
  %2276 = vmatprep.subr.mxu0 0.0
  %2277 = vmatpush2.xpose.msra.mxu0 0.0
  %2278 = vmatprep.subr.mxu0 0.0
  %2279 = vmatpush2.xpose.msra.mxu0 0.0
  %2280 = vmatprep.subr.mxu0 0.0
  %2281 = vmatpush2.xpose.msra.mxu0 0.0
  %2282 = vmatprep.subr.mxu0 0.0
  %2283 = vmatpush2.xpose.msra.mxu0 0.0
  %2284 = vmatprep.subr.mxu0 0.0
  %2285 = vmatpush2.xpose.msra.mxu0 0.0
  %2286 = vmatprep.subr.mxu0 0.0
  %2287 = vmatpush2.xpose.msra.mxu0 0.0
  %2288 = vmatprep.subr.mxu0 0.0
  %2289 = vmatpush2.xpose.msra.mxu0 0.0
  %2290 = vmatprep.subr.mxu0 0.0
  %2291 = vmatpush2.xpose.msra.mxu0 0.0
  %2292 = vmatprep.subr.mxu0 0.0
  %2293 = vmatpush2.xpose.msra.mxu0 0.0
  %2294 = vmatprep.subr.mxu0 0.0
  %2295 = vmatpush2.xpose.msra.mxu0 0.0
  %2296 = vmatprep.mubr.f32.mxu0 0.0
  %2297 = vmatmul.mubr.f32.gmra.mxu0 %v2224
  %v2298 = vpop.f32.mrf.mxu0
  %v2299 = vadd.f32 %v43, %v2298
  %v2300 = vpop.f32.mrf.mxu0
  %2301 = vmatprep.mubr.f32.mxu0 0.0
  %2302 = vmatmul.mubr.f32.gmra.mxu0 %v2226
  %v2303 = vpop.f32.mrf.mxu0
  %v2304 = vadd.f32 %v44, %v2303
  %v2305 = vpop.f32.mrf.mxu0
  %2306 = vdwg.mxu0
  %v2307 = vsel %vm226, %v2299, -inf
  %2308 = vmax.xlane.f32.xlu0 %v2307
  %v2309 = vpop.xlane.xlu0 %2308
  %v2310 = vsel %vm226, %v2304, -inf
  %2311 = vmax.xlane.f32.xlu0 %v2310
  %v2312 = vpop.xlane.xlu0 %2311
  %v2313 = vsub.f32 %v2299, %v2309
  %v2314 = vsub.f32 %v2304, %v2312
  %v2315 = vmul.f32 %v2313, 1.442695
  %v2316 = vpow.pop %v2315
  %v2317 = vmul.f32 %v2314, 1.442695
  %v2318 = vpow.pop %v2317
  %v2319 = vsel %vm226, %v2316, 0.0
  %2320 = vadd.xlane.f32.xlu0 %v2319
  %v2321 = vpop.xlane.xlu0 %2320
  %v2322 = vsel %vm226, %v2318, 0.0
  %2323 = vadd.xlane.f32.xlu0 %v2322
  %v2324 = vpop.xlane.xlu0 %2323
  %v2325 = vrcp.pop %v2321
  %v2326 = vmul.f32 %v2316, %v2325
  %v2327 = vrcp.pop %v2324
  %v2328 = vmul.f32 %v2318, %v2327
  %2329 = vrot.lane.b32.xlu0 %v1646, 48
  %v2330 = vpop.permute.xlu0 %2329
  %2331 = vrot.lane.b32.xlu0 %v1651, 48
  %v2332 = vpop.permute.xlu0 %2331
  %v2336 = vsel %vm226, %v2326, 0
  %v2339 = vsel %vm226, %v2328, 0
  %2341 = vmatprep.subr.mxu0 0.0
  %2342 = vmatpush1.msra.mxu0 0.0
  %2343 = vmatprep.subr.mxu0 0.0
  %2344 = vmatpush1.msra.mxu0 0.0
  %2345 = vmatprep.subr.mxu0 0.0
  %2346 = vmatpush1.msra.mxu0 0.0
  %2347 = vmatprep.subr.mxu0 0.0
  %2348 = vmatpush1.msra.mxu0 0.0
  %2349 = vmatprep.subr.mxu0 0.0
  %2350 = vmatpush1.msra.mxu0 0.0
  %2351 = vmatprep.subr.mxu0 0.0
  %2352 = vmatpush1.msra.mxu0 0.0
  %2353 = vmatprep.subr.mxu0 0.0
  %2354 = vmatpush1.msra.mxu0 0.0
  %2355 = vmatprep.subr.mxu0 0.0
  %2356 = vmatpush1.msra.mxu0 0.0
  %2357 = vmatprep.subr.mxu0 0.0
  %2358 = vmatpush1.msra.mxu0 0.0
  %2359 = vmatprep.subr.mxu0 0.0
  %2360 = vmatpush1.msra.mxu0 0.0
  %2361 = vmatprep.subr.mxu0 0.0
  %2362 = vmatpush1.msra.mxu0 0.0
  %2363 = vmatprep.subr.mxu0 0.0
  %2364 = vmatpush1.msra.mxu0 0.0
  %2365 = vmatprep.subr.mxu0 0.0
  %2366 = vmatpush1.msra.mxu0 0.0
  %2367 = vmatprep.subr.mxu0 0.0
  %2368 = vmatpush1.msra.mxu0 0.0
  %2369 = vmatprep.subr.mxu0 0.0
  %2370 = vmatpush1.msra.mxu0 %v2332
  %2371 = vmatprep.subr.mxu0 0.0
  %2372 = vmatpush1.msra.mxu0 %v2330
  %2373 = vmatprep.subr.mxu0 0.0
  %2374 = vmatpush2.msra.mxu0 0.0
  %2375 = vmatprep.subr.mxu0 0.0
  %2376 = vmatpush2.msra.mxu0 0.0
  %2377 = vmatprep.subr.mxu0 0.0
  %2378 = vmatpush2.msra.mxu0 0.0
  %2379 = vmatprep.subr.mxu0 0.0
  %2380 = vmatpush2.msra.mxu0 0.0
  %2381 = vmatprep.subr.mxu0 0.0
  %2382 = vmatpush2.msra.mxu0 0.0
  %2383 = vmatprep.subr.mxu0 0.0
  %2384 = vmatpush2.msra.mxu0 0.0
  %2385 = vmatprep.subr.mxu0 0.0
  %2386 = vmatpush2.msra.mxu0 0.0
  %2387 = vmatprep.subr.mxu0 0.0
  %2388 = vmatpush2.msra.mxu0 0.0
  %2389 = vmatprep.subr.mxu0 0.0
  %2390 = vmatpush2.msra.mxu0 0.0
  %2391 = vmatprep.subr.mxu0 0.0
  %2392 = vmatpush2.msra.mxu0 0.0
  %2393 = vmatprep.subr.mxu0 0.0
  %2394 = vmatpush2.msra.mxu0 0.0
  %2395 = vmatprep.subr.mxu0 0.0
  %2396 = vmatpush2.msra.mxu0 0.0
  %2397 = vmatprep.subr.mxu0 0.0
  %2398 = vmatpush2.msra.mxu0 0.0
  %2399 = vmatprep.subr.mxu0 0.0
  %2400 = vmatpush2.msra.mxu0 0.0
  %2401 = vmatprep.subr.mxu0 0.0
  %2402 = vmatpush2.msra.mxu0 0.0
  %2403 = vmatprep.subr.mxu0 0.0
  %2404 = vmatpush2.msra.mxu0 0.0
  %2405 = vmatprep.mubr.f32.mxu0 0.0
  %2406 = vmatmul.mubr.f32.gmra.mxu0 %v2336
  %v2407 = vpop.f32.mrf.mxu0
  %v2408 = vadd.f32 0.0, %v2407
  %v2409 = vpop.f32.mrf.mxu0
  %2410 = vmatprep.mubr.f32.mxu0 0.0
  %2411 = vmatmul.mubr.f32.gmra.mxu0 %v2339
  %v2412 = vpop.f32.mrf.mxu0
  %v2413 = vadd.f32 0.0, %v2412
  %v2414 = vpop.f32.mrf.mxu0
  %2415 = vdwg.mxu0
  %v2416 = vld [vmem:[%s1 + $0x118] sm:$0xff]
  %v2418 = vsel %vm142, %v2408, 0
  %v2421 = vsel %vm142, %v2413, 0
  %2423 = vmatprep.subr.mxu0 0.0
  %2424 = vmatpush1.msra.mxu0 0.0
  %2425 = vmatprep.subr.mxu0 0.0
  %2426 = vmatpush1.msra.mxu0 0.0
  %2427 = vmatprep.subr.mxu0 0.0
  %2428 = vmatpush1.msra.mxu0 0.0
  %2429 = vmatprep.subr.mxu0 0.0
  %2430 = vmatpush1.msra.mxu0 0.0
  %2431 = vmatprep.subr.mxu0 0.0
  %2432 = vmatpush1.msra.mxu0 0.0
  %2433 = vmatprep.subr.mxu0 0.0
  %2434 = vmatpush1.msra.mxu0 0.0
  %2435 = vmatprep.subr.mxu0 0.0
  %2436 = vmatpush1.msra.mxu0 0.0
  %2437 = vmatprep.subr.mxu0 0.0
  %2438 = vmatpush1.msra.mxu0 0.0
  %2439 = vmatprep.subr.mxu0 0.0
  %2440 = vmatpush1.msra.mxu0 0.0
  %2441 = vmatprep.subr.mxu0 0.0
  %2442 = vmatpush1.msra.mxu0 0.0
  %2443 = vmatprep.subr.mxu0 0.0
  %2444 = vmatpush1.msra.mxu0 0.0
  %2445 = vmatprep.subr.mxu0 0.0
  %2446 = vmatpush1.msra.mxu0 0.0
  %2447 = vmatprep.subr.mxu0 0.0
  %2448 = vmatpush1.msra.mxu0 0.0
  %2449 = vmatprep.subr.mxu0 0.0
  %2450 = vmatpush1.msra.mxu0 0.0
  %2451 = vmatprep.subr.mxu0 0.0
  %2452 = vmatpush1.msra.mxu0 0.0
  %2453 = vmatprep.subr.mxu0 0.0
  %2454 = vmatpush1.msra.mxu0 %v2416
  %2455 = vmatprep.subr.mxu0 0.0
  %2456 = vmatpush2.msra.mxu0 0.0
  %2457 = vmatprep.subr.mxu0 0.0
  %2458 = vmatpush2.msra.mxu0 0.0
  %2459 = vmatprep.subr.mxu0 0.0
  %2460 = vmatpush2.msra.mxu0 0.0
  %2461 = vmatprep.subr.mxu0 0.0
  %2462 = vmatpush2.msra.mxu0 0.0
  %2463 = vmatprep.subr.mxu0 0.0
  %2464 = vmatpush2.msra.mxu0 0.0
  %2465 = vmatprep.subr.mxu0 0.0
  %2466 = vmatpush2.msra.mxu0 0.0
  %2467 = vmatprep.subr.mxu0 0.0
  %2468 = vmatpush2.msra.mxu0 0.0
  %2469 = vmatprep.subr.mxu0 0.0
  %2470 = vmatpush2.msra.mxu0 0.0
  %2471 = vmatprep.subr.mxu0 0.0
  %2472 = vmatpush2.msra.mxu0 0.0
  %2473 = vmatprep.subr.mxu0 0.0
  %2474 = vmatpush2.msra.mxu0 0.0
  %2475 = vmatprep.subr.mxu0 0.0
  %2476 = vmatpush2.msra.mxu0 0.0
  %2477 = vmatprep.subr.mxu0 0.0
  %2478 = vmatpush2.msra.mxu0 0.0
  %2479 = vmatprep.subr.mxu0 0.0
  %2480 = vmatpush2.msra.mxu0 0.0
  %2481 = vmatprep.subr.mxu0 0.0
  %2482 = vmatpush2.msra.mxu0 0.0
  %2483 = vmatprep.subr.mxu0 0.0
  %2484 = vmatpush2.msra.mxu0 0.0
  %2485 = vmatprep.subr.mxu0 0.0
  %2486 = vmatpush2.msra.mxu0 0.0
  %2487 = vmatprep.mubr.f32.mxu0 0.0
  %2488 = vmatmul.mubr.f32.gmra.mxu0 %v2418
  %v2489 = vpop.f32.mrf.mxu0
  %v2490 = vadd.f32 0.0, %v2489
  %v2491 = vpop.f32.mrf.mxu0
  %2492 = vmatprep.mubr.f32.mxu0 0.0
  %2493 = vmatmul.mubr.f32.gmra.mxu0 %v2421
  %v2494 = vpop.f32.mrf.mxu0
  %v2495 = vadd.f32 0.0, %v2494
  %v2496 = vpop.f32.mrf.mxu0
  %2497 = vdwg.mxu0
  %v2498 = vadd.f32 %v2208, %v2490
  %v2499 = vadd.f32 %v2213, %v2495
  %2500 = vrot.lane.b32.xlu0 %v1646, 104
  %v2501 = vpop.permute.xlu0 %2500
  %2502 = vrot.lane.b32.xlu0 %v1651, 104
  %v2503 = vpop.permute.xlu0 %2502
  %2504 = vrot.lane.b32.xlu0 %v1646, 72
  %v2505 = vpop.permute.xlu0 %2504
  %2506 = vrot.lane.b32.xlu0 %v1651, 72
  %v2507 = vpop.permute.xlu0 %2506
  %v2508 = vsel %vm142, %v2501, 0
  %v2510 = vsel %vm142, %v2503, 0
  %v2512 = vsel %vm142, %v2505, 0
  %v2514 = vsel %vm142, %v2507, 0
  %2516 = vmatprep.subr.mxu0 0.0
  %2517 = vmatpush1.xpose.msra.mxu0 0.0
  %2518 = vmatprep.subr.mxu0 0.0
  %2519 = vmatpush1.xpose.msra.mxu0 0.0
  %2520 = vmatprep.subr.mxu0 0.0
  %2521 = vmatpush1.xpose.msra.mxu0 0.0
  %2522 = vmatprep.subr.mxu0 0.0
  %2523 = vmatpush1.xpose.msra.mxu0 0.0
  %2524 = vmatprep.subr.mxu0 0.0
  %2525 = vmatpush1.xpose.msra.mxu0 0.0
  %2526 = vmatprep.subr.mxu0 0.0
  %2527 = vmatpush1.xpose.msra.mxu0 0.0
  %2528 = vmatprep.subr.mxu0 0.0
  %2529 = vmatpush1.xpose.msra.mxu0 0.0
  %2530 = vmatprep.subr.mxu0 0.0
  %2531 = vmatpush1.xpose.msra.mxu0 0.0
  %2532 = vmatprep.subr.mxu0 0.0
  %2533 = vmatpush1.xpose.msra.mxu0 0.0
  %2534 = vmatprep.subr.mxu0 0.0
  %2535 = vmatpush1.xpose.msra.mxu0 0.0
  %2536 = vmatprep.subr.mxu0 0.0
  %2537 = vmatpush1.xpose.msra.mxu0 0.0
  %2538 = vmatprep.subr.mxu0 0.0
  %2539 = vmatpush1.xpose.msra.mxu0 0.0
  %2540 = vmatprep.subr.mxu0 0.0
  %2541 = vmatpush1.xpose.msra.mxu0 0.0
  %2542 = vmatprep.subr.mxu0 0.0
  %2543 = vmatpush1.xpose.msra.mxu0 0.0
  %2544 = vmatprep.subr.mxu0 0.0
  %2545 = vmatpush1.xpose.msra.mxu0 %v2514
  %2546 = vmatprep.subr.mxu0 0.0
  %2547 = vmatpush1.xpose.msra.mxu0 %v2512
  %2548 = vmatprep.subr.mxu0 0.0
  %2549 = vmatpush2.xpose.msra.mxu0 0.0
  %2550 = vmatprep.subr.mxu0 0.0
  %2551 = vmatpush2.xpose.msra.mxu0 0.0
  %2552 = vmatprep.subr.mxu0 0.0
  %2553 = vmatpush2.xpose.msra.mxu0 0.0
  %2554 = vmatprep.subr.mxu0 0.0
  %2555 = vmatpush2.xpose.msra.mxu0 0.0
  %2556 = vmatprep.subr.mxu0 0.0
  %2557 = vmatpush2.xpose.msra.mxu0 0.0
  %2558 = vmatprep.subr.mxu0 0.0
  %2559 = vmatpush2.xpose.msra.mxu0 0.0
  %2560 = vmatprep.subr.mxu0 0.0
  %2561 = vmatpush2.xpose.msra.mxu0 0.0
  %2562 = vmatprep.subr.mxu0 0.0
  %2563 = vmatpush2.xpose.msra.mxu0 0.0
  %2564 = vmatprep.subr.mxu0 0.0
  %2565 = vmatpush2.xpose.msra.mxu0 0.0
  %2566 = vmatprep.subr.mxu0 0.0
  %2567 = vmatpush2.xpose.msra.mxu0 0.0
  %2568 = vmatprep.subr.mxu0 0.0
  %2569 = vmatpush2.xpose.msra.mxu0 0.0
  %2570 = vmatprep.subr.mxu0 0.0
  %2571 = vmatpush2.xpose.msra.mxu0 0.0
  %2572 = vmatprep.subr.mxu0 0.0
  %2573 = vmatpush2.xpose.msra.mxu0 0.0
  %2574 = vmatprep.subr.mxu0 0.0
  %2575 = vmatpush2.xpose.msra.mxu0 0.0
  %2576 = vmatprep.subr.mxu0 0.0
  %2577 = vmatpush2.xpose.msra.mxu0 0.0
  %2578 = vmatprep.subr.mxu0 0.0
  %2579 = vmatpush2.xpose.msra.mxu0 0.0
  %2580 = vmatprep.mubr.f32.mxu0 0.0
  %2581 = vmatmul.mubr.f32.gmra.mxu0 %v2508
  %v2582 = vpop.f32.mrf.mxu0
  %v2583 = vadd.f32 %v43, %v2582
  %v2584 = vpop.f32.mrf.mxu0
  %2585 = vmatprep.mubr.f32.mxu0 0.0
  %2586 = vmatmul.mubr.f32.gmra.mxu0 %v2510
  %v2587 = vpop.f32.mrf.mxu0
  %v2588 = vadd.f32 %v44, %v2587
  %v2589 = vpop.f32.mrf.mxu0
  %2590 = vdwg.mxu0
  %v2591 = vsel %vm226, %v2583, -inf
  %2592 = vmax.xlane.f32.xlu0 %v2591
  %v2593 = vpop.xlane.xlu0 %2592
  %v2594 = vsel %vm226, %v2588, -inf
  %2595 = vmax.xlane.f32.xlu0 %v2594
  %v2596 = vpop.xlane.xlu0 %2595
  %v2597 = vsub.f32 %v2583, %v2593
  %v2598 = vsub.f32 %v2588, %v2596
  %v2599 = vmul.f32 %v2597, 1.442695
  %v2600 = vpow.pop %v2599
  %v2601 = vmul.f32 %v2598, 1.442695
  %v2602 = vpow.pop %v2601
  %v2603 = vsel %vm226, %v2600, 0.0
  %2604 = vadd.xlane.f32.xlu0 %v2603
  %v2605 = vpop.xlane.xlu0 %2604
  %v2606 = vsel %vm226, %v2602, 0.0
  %2607 = vadd.xlane.f32.xlu0 %v2606
  %v2608 = vpop.xlane.xlu0 %2607
  %v2609 = vrcp.pop %v2605
  %v2610 = vmul.f32 %v2600, %v2609
  %v2611 = vrcp.pop %v2608
  %v2612 = vmul.f32 %v2602, %v2611
  %2613 = vrot.lane.b32.xlu0 %v1646, 40
  %v2614 = vpop.permute.xlu0 %2613
  %2615 = vrot.lane.b32.xlu0 %v1651, 40
  %v2616 = vpop.permute.xlu0 %2615
  %v2620 = vsel %vm226, %v2610, 0
  %v2623 = vsel %vm226, %v2612, 0
  %2625 = vmatprep.subr.mxu0 0.0
  %2626 = vmatpush1.msra.mxu0 0.0
  %2627 = vmatprep.subr.mxu0 0.0
  %2628 = vmatpush1.msra.mxu0 0.0
  %2629 = vmatprep.subr.mxu0 0.0
  %2630 = vmatpush1.msra.mxu0 0.0
  %2631 = vmatprep.subr.mxu0 0.0
  %2632 = vmatpush1.msra.mxu0 0.0
  %2633 = vmatprep.subr.mxu0 0.0
  %2634 = vmatpush1.msra.mxu0 0.0
  %2635 = vmatprep.subr.mxu0 0.0
  %2636 = vmatpush1.msra.mxu0 0.0
  %2637 = vmatprep.subr.mxu0 0.0
  %2638 = vmatpush1.msra.mxu0 0.0
  %2639 = vmatprep.subr.mxu0 0.0
  %2640 = vmatpush1.msra.mxu0 0.0
  %2641 = vmatprep.subr.mxu0 0.0
  %2642 = vmatpush1.msra.mxu0 0.0
  %2643 = vmatprep.subr.mxu0 0.0
  %2644 = vmatpush1.msra.mxu0 0.0
  %2645 = vmatprep.subr.mxu0 0.0
  %2646 = vmatpush1.msra.mxu0 0.0
  %2647 = vmatprep.subr.mxu0 0.0
  %2648 = vmatpush1.msra.mxu0 0.0
  %2649 = vmatprep.subr.mxu0 0.0
  %2650 = vmatpush1.msra.mxu0 0.0
  %2651 = vmatprep.subr.mxu0 0.0
  %2652 = vmatpush1.msra.mxu0 0.0
  %2653 = vmatprep.subr.mxu0 0.0
  %2654 = vmatpush1.msra.mxu0 %v2616
  %2655 = vmatprep.subr.mxu0 0.0
  %2656 = vmatpush1.msra.mxu0 %v2614
  %2657 = vmatprep.subr.mxu0 0.0
  %2658 = vmatpush2.msra.mxu0 0.0
  %2659 = vmatprep.subr.mxu0 0.0
  %2660 = vmatpush2.msra.mxu0 0.0
  %2661 = vmatprep.subr.mxu0 0.0
  %2662 = vmatpush2.msra.mxu0 0.0
  %2663 = vmatprep.subr.mxu0 0.0
  %2664 = vmatpush2.msra.mxu0 0.0
  %2665 = vmatprep.subr.mxu0 0.0
  %2666 = vmatpush2.msra.mxu0 0.0
  %2667 = vmatprep.subr.mxu0 0.0
  %2668 = vmatpush2.msra.mxu0 0.0
  %2669 = vmatprep.subr.mxu0 0.0
  %2670 = vmatpush2.msra.mxu0 0.0
  %2671 = vmatprep.subr.mxu0 0.0
  %2672 = vmatpush2.msra.mxu0 0.0
  %2673 = vmatprep.subr.mxu0 0.0
  %2674 = vmatpush2.msra.mxu0 0.0
  %2675 = vmatprep.subr.mxu0 0.0
  %2676 = vmatpush2.msra.mxu0 0.0
  %2677 = vmatprep.subr.mxu0 0.0
  %2678 = vmatpush2.msra.mxu0 0.0
  %2679 = vmatprep.subr.mxu0 0.0
  %2680 = vmatpush2.msra.mxu0 0.0
  %2681 = vmatprep.subr.mxu0 0.0
  %2682 = vmatpush2.msra.mxu0 0.0
  %2683 = vmatprep.subr.mxu0 0.0
  %2684 = vmatpush2.msra.mxu0 0.0
  %2685 = vmatprep.subr.mxu0 0.0
  %2686 = vmatpush2.msra.mxu0 0.0
  %2687 = vmatprep.subr.mxu0 0.0
  %2688 = vmatpush2.msra.mxu0 0.0
  %2689 = vmatprep.mubr.f32.mxu0 0.0
  %2690 = vmatmul.mubr.f32.gmra.mxu0 %v2620
  %v2691 = vpop.f32.mrf.mxu0
  %v2692 = vadd.f32 0.0, %v2691
  %v2693 = vpop.f32.mrf.mxu0
  %2694 = vmatprep.mubr.f32.mxu0 0.0
  %2695 = vmatmul.mubr.f32.gmra.mxu0 %v2623
  %v2696 = vpop.f32.mrf.mxu0
  %v2697 = vadd.f32 0.0, %v2696
  %v2698 = vpop.f32.mrf.mxu0
  %2699 = vdwg.mxu0
  %v2700 = vld [vmem:[%s1 + $0x120] sm:$0xff]
  %v2702 = vsel %vm142, %v2692, 0
  %v2705 = vsel %vm142, %v2697, 0
  %2707 = vmatprep.subr.mxu0 0.0
  %2708 = vmatpush1.msra.mxu0 0.0
  %2709 = vmatprep.subr.mxu0 0.0
  %2710 = vmatpush1.msra.mxu0 0.0
  %2711 = vmatprep.subr.mxu0 0.0
  %2712 = vmatpush1.msra.mxu0 0.0
  %2713 = vmatprep.subr.mxu0 0.0
  %2714 = vmatpush1.msra.mxu0 0.0
  %2715 = vmatprep.subr.mxu0 0.0
  %2716 = vmatpush1.msra.mxu0 0.0
  %2717 = vmatprep.subr.mxu0 0.0
  %2718 = vmatpush1.msra.mxu0 0.0
  %2719 = vmatprep.subr.mxu0 0.0
  %2720 = vmatpush1.msra.mxu0 0.0
  %2721 = vmatprep.subr.mxu0 0.0
  %2722 = vmatpush1.msra.mxu0 0.0
  %2723 = vmatprep.subr.mxu0 0.0
  %2724 = vmatpush1.msra.mxu0 0.0
  %2725 = vmatprep.subr.mxu0 0.0
  %2726 = vmatpush1.msra.mxu0 0.0
  %2727 = vmatprep.subr.mxu0 0.0
  %2728 = vmatpush1.msra.mxu0 0.0
  %2729 = vmatprep.subr.mxu0 0.0
  %2730 = vmatpush1.msra.mxu0 0.0
  %2731 = vmatprep.subr.mxu0 0.0
  %2732 = vmatpush1.msra.mxu0 0.0
  %2733 = vmatprep.subr.mxu0 0.0
  %2734 = vmatpush1.msra.mxu0 0.0
  %2735 = vmatprep.subr.mxu0 0.0
  %2736 = vmatpush1.msra.mxu0 0.0
  %2737 = vmatprep.subr.mxu0 0.0
  %2738 = vmatpush1.msra.mxu0 %v2700
  %2739 = vmatprep.subr.mxu0 0.0
  %2740 = vmatpush2.msra.mxu0 0.0
  %2741 = vmatprep.subr.mxu0 0.0
  %2742 = vmatpush2.msra.mxu0 0.0
  %2743 = vmatprep.subr.mxu0 0.0
  %2744 = vmatpush2.msra.mxu0 0.0
  %2745 = vmatprep.subr.mxu0 0.0
  %2746 = vmatpush2.msra.mxu0 0.0
  %2747 = vmatprep.subr.mxu0 0.0
  %2748 = vmatpush2.msra.mxu0 0.0
  %2749 = vmatprep.subr.mxu0 0.0
  %2750 = vmatpush2.msra.mxu0 0.0
  %2751 = vmatprep.subr.mxu0 0.0
  %2752 = vmatpush2.msra.mxu0 0.0
  %2753 = vmatprep.subr.mxu0 0.0
  %2754 = vmatpush2.msra.mxu0 0.0
  %2755 = vmatprep.subr.mxu0 0.0
  %2756 = vmatpush2.msra.mxu0 0.0
  %2757 = vmatprep.subr.mxu0 0.0
  %2758 = vmatpush2.msra.mxu0 0.0
  %2759 = vmatprep.subr.mxu0 0.0
  %2760 = vmatpush2.msra.mxu0 0.0
  %2761 = vmatprep.subr.mxu0 0.0
  %2762 = vmatpush2.msra.mxu0 0.0
  %2763 = vmatprep.subr.mxu0 0.0
  %2764 = vmatpush2.msra.mxu0 0.0
  %2765 = vmatprep.subr.mxu0 0.0
  %2766 = vmatpush2.msra.mxu0 0.0
  %2767 = vmatprep.subr.mxu0 0.0
  %2768 = vmatpush2.msra.mxu0 0.0
  %2769 = vmatprep.subr.mxu0 0.0
  %2770 = vmatpush2.msra.mxu0 0.0
  %2771 = vmatprep.mubr.f32.mxu0 0.0
  %2772 = vmatmul.mubr.f32.gmra.mxu0 %v2702
  %v2773 = vpop.f32.mrf.mxu0
  %v2774 = vadd.f32 0.0, %v2773
  %v2775 = vpop.f32.mrf.mxu0
  %2776 = vmatprep.mubr.f32.mxu0 0.0
  %2777 = vmatmul.mubr.f32.gmra.mxu0 %v2705
  %v2778 = vpop.f32.mrf.mxu0
  %v2779 = vadd.f32 0.0, %v2778
  %v2780 = vpop.f32.mrf.mxu0
  %2781 = vdwg.mxu0
  %v2782 = vadd.f32 %v2498, %v2774
  %v2783 = vadd.f32 %v2499, %v2779
  %v2784 = vld [vmem:[%s1 + $0x1c9] sm:$0x1]
  %v2785 = vlaneseq
  %v2786 = vshrl.u32 %v2785, 7
  %v2787 = vsub.s32 0, %v2786
  %v2788 = vrot.slane %v2784, %v2787
  %v2789 = vadd.f32 %v2782, %v2788
  %v2790 = vadd.f32 %v2783, %v2788
  %v2791 = vadd.f32 %v1562, %v2789
  %v2792 = vadd.f32 %v1563, %v2790
  %v2793 = vld [vmem:[%s1 + $0x1ca] sm:$0x1]
  %v2794 = vld [vmem:[%s1 + $0x1cb] sm:$0x1]
  %v2795 = vsel %vm54, %v2791, 0.0
  %2796 = vadd.xlane.f32.xlu0 %v2795
  %v2797 = vpop.xlane.xlu0 %2796
  %v2798 = vsel %vm54, %v2792, 0.0
  %2799 = vadd.xlane.f32.xlu0 %v2798
  %v2800 = vpop.xlane.xlu0 %2799
  %v2801 = vmul.f32 %v2797, %v1285
  %v2802 = vmul.f32 %v2800, %v1285
  %v2803 = vsub.f32 %v2791, %v2801
  %v2804 = vsub.f32 %v2792, %v2802
  %v2805 = vmul.f32 %v2803, %v2803
  %v2806 = vmul.f32 %v2804, %v2804
  %v2807 = vsel %vm54, %v2805, 0.0
  %2808 = vadd.xlane.f32.xlu0 %v2807
  %v2809 = vpop.xlane.xlu0 %2808
  %v2810 = vsel %vm54, %v2806, 0.0
  %2811 = vadd.xlane.f32.xlu0 %v2810
  %v2812 = vpop.xlane.xlu0 %2811
  %v2813 = vmul.f32 %v2809, %v1285
  %v2814 = vmul.f32 %v2812, %v1285
  %v2815 = vadd.f32 %v2813, 1e-12
  %v2816 = vadd.f32 %v2814, 1e-12
  %v2817 = vrsqrt.pop %v2815
  %v2818 = vrsqrt.pop %v2816
  %v2819 = vmul.f32 %v2803, %v2817
  %v2820 = vmul.f32 %v2804, %v2818
  %v2821 = vlaneseq
  %v2822 = vshrl.u32 %v2821, 7
  %v2823 = vsub.s32 0, %v2822
  %v2824 = vrot.slane %v2793, %v2823
  %v2825 = vmul.f32 %v2819, %v2824
  %v2826 = vmul.f32 %v2820, %v2824
  %v2827 = vlaneseq
  %v2828 = vshrl.u32 %v2827, 7
  %v2829 = vsub.s32 0, %v2828
  %v2830 = vrot.slane %v2794, %v2829
  %v2831 = vadd.f32 %v2825, %v2830
  %v2832 = vadd.f32 %v2826, %v2830
  %v2833 = vld [vmem:[%s1 + $0x128] sm:$0xff]
  %v2834 = vld [vmem:[%s1 + $0x130] sm:$0xff]
  %v2835 = vld [vmem:[%s1 + $0x138] sm:$0xff]
  %v2836 = vld [vmem:[%s1 + $0x140] sm:$0xff]
  %v2837 = vld [vmem:[%s1 + $0x1cc] sm:$0x1]
  %v2838 = vlaneseq
  %v2839 = vshrl.u32 %v2838, 7
  %v2840 = vsub.s32 0, %v2839
  %v2841 = vrot.slane %v2837, %v2840
  %v2843 = vsel %vm54, %v2831, 0
  %v2846 = vsel %vm54, %v2832, 0
  %2848 = vmatprep.subr.mxu0 0.0
  %2849 = vmatpush1.msra.mxu0 0.0
  %2850 = vmatprep.subr.mxu0 0.0
  %2851 = vmatpush1.msra.mxu0 0.0
  %2852 = vmatprep.subr.mxu0 0.0
  %2853 = vmatpush1.msra.mxu0 0.0
  %2854 = vmatprep.subr.mxu0 0.0
  %2855 = vmatpush1.msra.mxu0 0.0
  %2856 = vmatprep.subr.mxu0 0.0
  %2857 = vmatpush1.msra.mxu0 0.0
  %2858 = vmatprep.subr.mxu0 0.0
  %2859 = vmatpush1.msra.mxu0 0.0
  %2860 = vmatprep.subr.mxu0 0.0
  %2861 = vmatpush1.msra.mxu0 0.0
  %2862 = vmatprep.subr.mxu0 0.0
  %2863 = vmatpush1.msra.mxu0 0.0
  %2864 = vmatprep.subr.mxu0 0.0
  %2865 = vmatpush1.msra.mxu0 0.0
  %2866 = vmatprep.subr.mxu0 0.0
  %2867 = vmatpush1.msra.mxu0 0.0
  %2868 = vmatprep.subr.mxu0 0.0
  %2869 = vmatpush1.msra.mxu0 0.0
  %2870 = vmatprep.subr.mxu0 0.0
  %2871 = vmatpush1.msra.mxu0 0.0
  %2872 = vmatprep.subr.mxu0 0.0
  %2873 = vmatpush1.msra.mxu0 %v2836
  %2874 = vmatprep.subr.mxu0 0.0
  %2875 = vmatpush1.msra.mxu0 %v2835
  %2876 = vmatprep.subr.mxu0 0.0
  %2877 = vmatpush1.msra.mxu0 %v2834
  %2878 = vmatprep.subr.mxu0 0.0
  %2879 = vmatpush1.msra.mxu0 %v2833
  %2880 = vmatprep.subr.mxu0 0.0
  %2881 = vmatpush2.msra.mxu0 0.0
  %2882 = vmatprep.subr.mxu0 0.0
  %2883 = vmatpush2.msra.mxu0 0.0
  %2884 = vmatprep.subr.mxu0 0.0
  %2885 = vmatpush2.msra.mxu0 0.0
  %2886 = vmatprep.subr.mxu0 0.0
  %2887 = vmatpush2.msra.mxu0 0.0
  %2888 = vmatprep.subr.mxu0 0.0
  %2889 = vmatpush2.msra.mxu0 0.0
  %2890 = vmatprep.subr.mxu0 0.0
  %2891 = vmatpush2.msra.mxu0 0.0
  %2892 = vmatprep.subr.mxu0 0.0
  %2893 = vmatpush2.msra.mxu0 0.0
  %2894 = vmatprep.subr.mxu0 0.0
  %2895 = vmatpush2.msra.mxu0 0.0
  %2896 = vmatprep.subr.mxu0 0.0
  %2897 = vmatpush2.msra.mxu0 0.0
  %2898 = vmatprep.subr.mxu0 0.0
  %2899 = vmatpush2.msra.mxu0 0.0
  %2900 = vmatprep.subr.mxu0 0.0
  %2901 = vmatpush2.msra.mxu0 0.0
  %2902 = vmatprep.subr.mxu0 0.0
  %2903 = vmatpush2.msra.mxu0 0.0
  %2904 = vmatprep.subr.mxu0 0.0
  %2905 = vmatpush2.msra.mxu0 0.0
  %2906 = vmatprep.subr.mxu0 0.0
  %2907 = vmatpush2.msra.mxu0 0.0
  %2908 = vmatprep.subr.mxu0 0.0
  %2909 = vmatpush2.msra.mxu0 0.0
  %2910 = vmatprep.subr.mxu0 0.0
  %2911 = vmatpush2.msra.mxu0 0.0
  %2912 = vmatprep.mubr.f32.mxu0 0.0
  %2913 = vmatmul.mubr.f32.gmra.mxu0 %v2843
  %v2914 = vpop.f32.mrf.mxu0
  %v2915 = vadd.f32 %v2841, %v2914
  %v2916 = vpop.f32.mrf.mxu0
  %2917 = vmatprep.mubr.f32.mxu0 0.0
  %2918 = vmatmul.mubr.f32.gmra.mxu0 %v2846
  %v2919 = vpop.f32.mrf.mxu0
  %v2920 = vadd.f32 %v2841, %v2919
  %v2921 = vpop.f32.mrf.mxu0
  %2922 = vdwg.mxu0
  %v2923 = vmul.f32 %v2915, 0.5
  %v2924 = vmul.f32 %v2920, 0.5
  %v2925 = vmul.f32 %v2915, 0.044715
  %v2926 = vmul.f32 %v2920, 0.044715
  %v2927 = vmul.f32 %v2925, %v2915
  %v2928 = vmul.f32 %v2926, %v2920
  %v2929 = vmul.f32 %v2927, %v2915
  %v2930 = vmul.f32 %v2928, %v2920
  %v2931 = vadd.f32 %v2915, %v2929
  %v2932 = vadd.f32 %v2920, %v2930
  %v2933 = vmul.f32 %v2931, 0.7978846
  %v2934 = vmul.f32 %v2932, 0.7978846
  %v2935 = vtanh.pop %v2933
  %v2936 = vtanh.pop %v2934
  %v2937 = vadd.f32 %v2935, 1.0
  %v2938 = vadd.f32 %v2936, 1.0
  %v2939 = vmul.f32 %v2923, %v2937
  %v2940 = vmul.f32 %v2924, %v2938
  %v2941 = vld [vmem:[%s1 + $0x148] sm:$0xff]
  %v2942 = vld [vmem:[%s1 + $0x150] sm:$0xff]
  %v2943 = vld [vmem:[%s1 + $0x158] sm:$0xff]
  %v2944 = vld [vmem:[%s1 + $0x160] sm:$0xff]
  %v2945 = vld [vmem:[%s1 + $0x168] sm:$0xff]
  %v2946 = vld [vmem:[%s1 + $0x170] sm:$0xff]
  %v2947 = vld [vmem:[%s1 + $0x178] sm:$0xff]
  %v2948 = vld [vmem:[%s1 + $0x180] sm:$0xff]
  %v2949 = vld [vmem:[%s1 + $0x188] sm:$0xff]
  %v2950 = vld [vmem:[%s1 + $0x190] sm:$0xff]
  %v2951 = vld [vmem:[%s1 + $0x198] sm:$0xff]
  %v2952 = vld [vmem:[%s1 + $0x1a0] sm:$0xff]
  %v2953 = vld [vmem:[%s1 + $0x1a8] sm:$0xff]
  %v2954 = vld [vmem:[%s1 + $0x1b0] sm:$0xff]
  %v2955 = vld [vmem:[%s1 + $0x1b8] sm:$0xff]
  %v2956 = vld [vmem:[%s1 + $0x1c0] sm:$0xff]
  %v2957 = vld [vmem:[%s1 + $0x1cd] sm:$0x1]
  %v2958 = vlaneseq
  %v2959 = vshrl.u32 %v2958, 7
  %v2960 = vsub.s32 0, %v2959
  %v2961 = vrot.slane %v2957, %v2960
  %2962 = vmatprep.subr.mxu0 0.0
  %2963 = vmatpush1.msra.mxu0 %v2956
  %2964 = vmatprep.subr.mxu0 0.0
  %2965 = vmatpush1.msra.mxu0 %v2955
  %2966 = vmatprep.subr.mxu0 0.0
  %2967 = vmatpush1.msra.mxu0 %v2954
  %2968 = vmatprep.subr.mxu0 0.0
  %2969 = vmatpush1.msra.mxu0 %v2953
  %2970 = vmatprep.subr.mxu0 0.0
  %2971 = vmatpush1.msra.mxu0 %v2952
  %2972 = vmatprep.subr.mxu0 0.0
  %2973 = vmatpush1.msra.mxu0 %v2951
  %2974 = vmatprep.subr.mxu0 0.0
  %2975 = vmatpush1.msra.mxu0 %v2950
  %2976 = vmatprep.subr.mxu0 0.0
  %2977 = vmatpush1.msra.mxu0 %v2949
  %2978 = vmatprep.subr.mxu0 0.0
  %2979 = vmatpush1.msra.mxu0 %v2948
  %2980 = vmatprep.subr.mxu0 0.0
  %2981 = vmatpush1.msra.mxu0 %v2947
  %2982 = vmatprep.subr.mxu0 0.0
  %2983 = vmatpush1.msra.mxu0 %v2946
  %2984 = vmatprep.subr.mxu0 0.0
  %2985 = vmatpush1.msra.mxu0 %v2945
  %2986 = vmatprep.subr.mxu0 0.0
  %2987 = vmatpush1.msra.mxu0 %v2944
  %2988 = vmatprep.subr.mxu0 0.0
  %2989 = vmatpush1.msra.mxu0 %v2943
  %2990 = vmatprep.subr.mxu0 0.0
  %2991 = vmatpush1.msra.mxu0 %v2942
  %2992 = vmatprep.subr.mxu0 0.0
  %2993 = vmatpush1.msra.mxu0 %v2941
  %2994 = vmatprep.subr.mxu0 0.0
  %2995 = vmatpush2.msra.mxu0 0.0
  %2996 = vmatprep.subr.mxu0 0.0
  %2997 = vmatpush2.msra.mxu0 0.0
  %2998 = vmatprep.subr.mxu0 0.0
  %2999 = vmatpush2.msra.mxu0 0.0
  %3000 = vmatprep.subr.mxu0 0.0
  %3001 = vmatpush2.msra.mxu0 0.0
  %3002 = vmatprep.subr.mxu0 0.0
  %3003 = vmatpush2.msra.mxu0 0.0
  %3004 = vmatprep.subr.mxu0 0.0
  %3005 = vmatpush2.msra.mxu0 0.0
  %3006 = vmatprep.subr.mxu0 0.0
  %3007 = vmatpush2.msra.mxu0 0.0
  %3008 = vmatprep.subr.mxu0 0.0
  %3009 = vmatpush2.msra.mxu0 0.0
  %3010 = vmatprep.subr.mxu0 0.0
  %3011 = vmatpush2.msra.mxu0 0.0
  %3012 = vmatprep.subr.mxu0 0.0
  %3013 = vmatpush2.msra.mxu0 0.0
  %3014 = vmatprep.subr.mxu0 0.0
  %3015 = vmatpush2.msra.mxu0 0.0
  %3016 = vmatprep.subr.mxu0 0.0
  %3017 = vmatpush2.msra.mxu0 0.0
  %3018 = vmatprep.subr.mxu0 0.0
  %3019 = vmatpush2.msra.mxu0 0.0
  %3020 = vmatprep.subr.mxu0 0.0
  %3021 = vmatpush2.msra.mxu0 0.0
  %3022 = vmatprep.subr.mxu0 0.0
  %3023 = vmatpush2.msra.mxu0 0.0
  %3024 = vmatprep.subr.mxu0 0.0
  %3025 = vmatpush2.msra.mxu0 0.0
  %3026 = vmatprep.mubr.f32.mxu0 0.0
  %3027 = vmatmul.mubr.f32.gmra.mxu0 %v2939
  %v3028 = vpop.f32.mrf.mxu0
  %v3029 = vadd.f32 %v2961, %v3028
  %v3030 = vpop.f32.mrf.mxu0
  %3031 = vmatprep.mubr.f32.mxu0 0.0
  %3032 = vmatmul.mubr.f32.gmra.mxu0 %v2940
  %v3033 = vpop.f32.mrf.mxu0
  %v3034 = vadd.f32 %v2961, %v3033
  %v3035 = vpop.f32.mrf.mxu0
  %3036 = vdwg.mxu0
  %v3037 = vadd.f32 %v2831, %v3029
  %v3038 = vadd.f32 %v2832, %v3034
  %v3039 = vld [vmem:[%s1 + $0x1ce] sm:$0x1]
  %v3040 = vld [vmem:[%s1 + $0x1cf] sm:$0x1]
  %v3041 = vsel %vm54, %v3037, 0.0
  %3042 = vadd.xlane.f32.xlu0 %v3041
  %v3043 = vpop.xlane.xlu0 %3042
  %v3044 = vsel %vm54, %v3038, 0.0
  %3045 = vadd.xlane.f32.xlu0 %v3044
  %v3046 = vpop.xlane.xlu0 %3045
  %v3047 = vmul.f32 %v3043, %v1285
  %v3048 = vmul.f32 %v3046, %v1285
  %v3049 = vsub.f32 %v3037, %v3047
  %v3050 = vsub.f32 %v3038, %v3048
  %v3051 = vmul.f32 %v3049, %v3049
  %v3052 = vmul.f32 %v3050, %v3050
  %v3053 = vsel %vm54, %v3051, 0.0
  %3054 = vadd.xlane.f32.xlu0 %v3053
  %v3055 = vpop.xlane.xlu0 %3054
  %v3056 = vsel %vm54, %v3052, 0.0
  %3057 = vadd.xlane.f32.xlu0 %v3056
  %v3058 = vpop.xlane.xlu0 %3057
  %v3059 = vmul.f32 %v3055, %v1285
  %v3060 = vmul.f32 %v3058, %v1285
  %v3061 = vadd.f32 %v3059, 1e-12
  %v3062 = vadd.f32 %v3060, 1e-12
  %v3063 = vrsqrt.pop %v3061
  %v3064 = vrsqrt.pop %v3062
  %v3065 = vmul.f32 %v3049, %v3063
  %v3066 = vmul.f32 %v3050, %v3064
  %v3067 = vlaneseq
  %v3068 = vshrl.u32 %v3067, 7
  %v3069 = vsub.s32 0, %v3068
  %v3070 = vrot.slane %v3039, %v3069
  %v3071 = vmul.f32 %v3065, %v3070
  %v3072 = vmul.f32 %v3066, %v3070
  %v3073 = vlaneseq
  %v3074 = vshrl.u32 %v3073, 7
  %v3075 = vsub.s32 0, %v3074
  %v3076 = vrot.slane %v3040, %v3075
  %v3077 = vadd.f32 %v3071, %v3076
  %v3078 = vadd.f32 %v3072, %v3076
  %v3080 = vsel %vm226, %v13, 0
  %3082 = vmatprep.subr.mxu0 0.0
  %3083 = vmatpush1.msra.mxu0 0.0
  %3084 = vmatprep.subr.mxu0 0.0
  %3085 = vmatpush1.msra.mxu0 0.0
  %3086 = vmatprep.subr.mxu0 0.0
  %3087 = vmatpush1.msra.mxu0 0.0
  %3088 = vmatprep.subr.mxu0 0.0
  %3089 = vmatpush1.msra.mxu0 0.0
  %3090 = vmatprep.subr.mxu0 0.0
  %3091 = vmatpush1.msra.mxu0 0.0
  %3092 = vmatprep.subr.mxu0 0.0
  %3093 = vmatpush1.msra.mxu0 0.0
  %3094 = vmatprep.subr.mxu0 0.0
  %3095 = vmatpush1.msra.mxu0 0.0
  %3096 = vmatprep.subr.mxu0 0.0
  %3097 = vmatpush1.msra.mxu0 0.0
  %3098 = vmatprep.subr.mxu0 0.0
  %3099 = vmatpush1.msra.mxu0 0.0
  %3100 = vmatprep.subr.mxu0 0.0
  %3101 = vmatpush1.msra.mxu0 0.0
  %3102 = vmatprep.subr.mxu0 0.0
  %3103 = vmatpush1.msra.mxu0 0.0
  %3104 = vmatprep.subr.mxu0 0.0
  %3105 = vmatpush1.msra.mxu0 0.0
  %3106 = vmatprep.subr.mxu0 0.0
  %3107 = vmatpush1.msra.mxu0 0.0
  %3108 = vmatprep.subr.mxu0 0.0
  %3109 = vmatpush1.msra.mxu0 0.0
  %3110 = vmatprep.subr.mxu0 0.0
  %3111 = vmatpush1.msra.mxu0 %v3078
  %3112 = vmatprep.subr.mxu0 0.0
  %3113 = vmatpush1.msra.mxu0 %v3077
  %3114 = vmatprep.subr.mxu0 0.0
  %3115 = vmatpush2.msra.mxu0 0.0
  %3116 = vmatprep.subr.mxu0 0.0
  %3117 = vmatpush2.msra.mxu0 0.0
  %3118 = vmatprep.subr.mxu0 0.0
  %3119 = vmatpush2.msra.mxu0 0.0
  %3120 = vmatprep.subr.mxu0 0.0
  %3121 = vmatpush2.msra.mxu0 0.0
  %3122 = vmatprep.subr.mxu0 0.0
  %3123 = vmatpush2.msra.mxu0 0.0
  %3124 = vmatprep.subr.mxu0 0.0
  %3125 = vmatpush2.msra.mxu0 0.0
  %3126 = vmatprep.subr.mxu0 0.0
  %3127 = vmatpush2.msra.mxu0 0.0
  %3128 = vmatprep.subr.mxu0 0.0
  %3129 = vmatpush2.msra.mxu0 0.0
  %3130 = vmatprep.subr.mxu0 0.0
  %3131 = vmatpush2.msra.mxu0 0.0
  %3132 = vmatprep.subr.mxu0 0.0
  %3133 = vmatpush2.msra.mxu0 0.0
  %3134 = vmatprep.subr.mxu0 0.0
  %3135 = vmatpush2.msra.mxu0 0.0
  %3136 = vmatprep.subr.mxu0 0.0
  %3137 = vmatpush2.msra.mxu0 0.0
  %3138 = vmatprep.subr.mxu0 0.0
  %3139 = vmatpush2.msra.mxu0 0.0
  %3140 = vmatprep.subr.mxu0 0.0
  %3141 = vmatpush2.msra.mxu0 0.0
  %3142 = vmatprep.subr.mxu0 0.0
  %3143 = vmatpush2.msra.mxu0 0.0
  %3144 = vmatprep.subr.mxu0 0.0
  %3145 = vmatpush2.msra.mxu0 0.0
  %3146 = vmatprep.mubr.f32.mxu0 0.0
  %3147 = vmatmul.mubr.f32.gmra.mxu0 %v3080
  %v3148 = vpop.f32.mrf.mxu0
  %v3149 = vadd.f32 0.0, %v3148
  %v3150 = vpop.f32.mrf.mxu0
  %3151 = vdwg.mxu0
  %v3152 = vld [vmem:[%s1 + $0x1d0] sm:$0xff]
  %v3153 = vld [vmem:[%s1 + $0x1d8] sm:$0xff]
  %v3154 = vld [vmem:[%s1 + $0x1e0] sm:$0xff]
  %v3155 = vld [vmem:[%s1 + $0x1e8] sm:$0xff]
  %v3156 = vld [vmem:[%s1 + $0x1f0] sm:$0x1]
  %v3157 = vlaneseq
  %v3158 = vshrl.u32 %v3157, 7
  %v3159 = vsub.s32 0, %v3158
  %v3160 = vrot.slane %v3156, %v3159
  %v3162 = vsel %vm54, %v3149, 0
  %3164 = vmatprep.subr.mxu0 0.0
  %3165 = vmatpush1.msra.mxu0 0.0
  %3166 = vmatprep.subr.mxu0 0.0
  %3167 = vmatpush1.msra.mxu0 0.0
  %3168 = vmatprep.subr.mxu0 0.0
  %3169 = vmatpush1.msra.mxu0 0.0
  %3170 = vmatprep.subr.mxu0 0.0
  %3171 = vmatpush1.msra.mxu0 0.0
  %3172 = vmatprep.subr.mxu0 0.0
  %3173 = vmatpush1.msra.mxu0 0.0
  %3174 = vmatprep.subr.mxu0 0.0
  %3175 = vmatpush1.msra.mxu0 0.0
  %3176 = vmatprep.subr.mxu0 0.0
  %3177 = vmatpush1.msra.mxu0 0.0
  %3178 = vmatprep.subr.mxu0 0.0
  %3179 = vmatpush1.msra.mxu0 0.0
  %3180 = vmatprep.subr.mxu0 0.0
  %3181 = vmatpush1.msra.mxu0 0.0
  %3182 = vmatprep.subr.mxu0 0.0
  %3183 = vmatpush1.msra.mxu0 0.0
  %3184 = vmatprep.subr.mxu0 0.0
  %3185 = vmatpush1.msra.mxu0 0.0
  %3186 = vmatprep.subr.mxu0 0.0
  %3187 = vmatpush1.msra.mxu0 0.0
  %3188 = vmatprep.subr.mxu0 0.0
  %3189 = vmatpush1.msra.mxu0 %v3155
  %3190 = vmatprep.subr.mxu0 0.0
  %3191 = vmatpush1.msra.mxu0 %v3154
  %3192 = vmatprep.subr.mxu0 0.0
  %3193 = vmatpush1.msra.mxu0 %v3153
  %3194 = vmatprep.subr.mxu0 0.0
  %3195 = vmatpush1.msra.mxu0 %v3152
  %3196 = vmatprep.subr.mxu0 0.0
  %3197 = vmatpush2.msra.mxu0 0.0
  %3198 = vmatprep.subr.mxu0 0.0
  %3199 = vmatpush2.msra.mxu0 0.0
  %3200 = vmatprep.subr.mxu0 0.0
  %3201 = vmatpush2.msra.mxu0 0.0
  %3202 = vmatprep.subr.mxu0 0.0
  %3203 = vmatpush2.msra.mxu0 0.0
  %3204 = vmatprep.subr.mxu0 0.0
  %3205 = vmatpush2.msra.mxu0 0.0
  %3206 = vmatprep.subr.mxu0 0.0
  %3207 = vmatpush2.msra.mxu0 0.0
  %3208 = vmatprep.subr.mxu0 0.0
  %3209 = vmatpush2.msra.mxu0 0.0
  %3210 = vmatprep.subr.mxu0 0.0
  %3211 = vmatpush2.msra.mxu0 0.0
  %3212 = vmatprep.subr.mxu0 0.0
  %3213 = vmatpush2.msra.mxu0 0.0
  %3214 = vmatprep.subr.mxu0 0.0
  %3215 = vmatpush2.msra.mxu0 0.0
  %3216 = vmatprep.subr.mxu0 0.0
  %3217 = vmatpush2.msra.mxu0 0.0
  %3218 = vmatprep.subr.mxu0 0.0
  %3219 = vmatpush2.msra.mxu0 0.0
  %3220 = vmatprep.subr.mxu0 0.0
  %3221 = vmatpush2.msra.mxu0 0.0
  %3222 = vmatprep.subr.mxu0 0.0
  %3223 = vmatpush2.msra.mxu0 0.0
  %3224 = vmatprep.subr.mxu0 0.0
  %3225 = vmatpush2.msra.mxu0 0.0
  %3226 = vmatprep.subr.mxu0 0.0
  %3227 = vmatpush2.msra.mxu0 0.0
  %3228 = vmatprep.mubr.f32.mxu0 0.0
  %3229 = vmatmul.mubr.f32.gmra.mxu0 %v3162
  %v3230 = vpop.f32.mrf.mxu0
  %v3231 = vadd.f32 %v3160, %v3230
  %v3232 = vpop.f32.mrf.mxu0
  %3233 = vdwg.mxu0
  %vm3234 = vcmask 13312
  %3235 = vst.msk [vmem:[%s2] sm:$0x3f] %vm3234, %v3231
  // Predicated region
  $region10: #{bertsum_forward.1} parent=0 // pred_check
    _
  $region11: #{bertsum_forward.1} parent=0 // pred_check_branch
    %3237 = sbr.rel (0) target = $region13
  $region12: #{bertsum_forward.1} parent=0 // pred_region
    _
  $region13: #{bertsum_forward.1} parent=0 // pred_fallthru
    _
  // Predicated region
  $region14: #{bertsum_forward.1} parent=0 // pred_check
    _
  $region15: #{bertsum_forward.1} parent=0 // pred_check_branch
    %3239 = sbr.rel (0) target = $region17
  $region16: #{bertsum_forward.1} parent=0 // pred_region
    _
  $region17: #{bertsum_forward.1} parent=0 // pred_fallthru
    _

</llo_original>
